<compile_context>
chip_gen: v6e
topology: v6e:2x2x1
jax: 0.10.0
libtpu: 0.0.40
codegen_flags: <defaults>
</compile_context>

<pallas_src>
import functools

import jax
import jax.numpy as jnp
from jax.experimental import pallas as pl
from jax.experimental.pallas import tpu as pltpu

VMEM = pltpu.MemorySpace.VMEM
F32 = jnp.float32


# ----------------------------------------------------------- small helpers --
def _const_spec(arr):
    """Whole-array-in-VMEM BlockSpec with a grid-constant block index."""
    nd = arr.ndim
    return pl.BlockSpec(arr.shape, lambda *_: (0,) * nd)


def _ln(x, g, b, eps):
    mu = jnp.mean(x, axis=-1, keepdims=True)
    var = jnp.mean(jnp.square(x - mu), axis=-1, keepdims=True)
    return (x - mu) * jax.lax.rsqrt(var + eps) * g + b


def _softmax(s):
    s = s - jnp.max(s, axis=-1, keepdims=True)
    p = jnp.exp(s)
    return p * pl.reciprocal(jnp.sum(p, axis=-1, keepdims=True), approx=True)


# -------------------------------------------------------------- stem kernel --
# patch-embed + CLS + pos-add#1 + SoftMoE (stacked experts+gate matmul) +
# residual + LayerNorm(1e-5) + pos-add#2, one grid step per batch element.
def _stem_kernel(patches_ref, wc_ref, bc_ref, pos_ref, wmoe_ref, bmoe_ref,
                 gmoe_ref, bmoe2_ref, o_ref, *, num_experts, embed_dim):
    e, d = num_experts, embed_dim
    p = patches_ref[0].astype(F32)                         # (N, C*P*P); row 0 = CLS pad
    wc = wc_ref[...].astype(F32)                           # (C*P*P, D)
    bc = bc_ref[...].astype(F32)                           # (1, D)
    pos = pos_ref[...].astype(F32)                         # (N, D)

    emb = jnp.dot(p, wc, preferred_element_type=F32) + bc  # (N, D)
    # CLS token is zeros in the reference module: mask row 0 (kills the conv bias).
    rows = jax.lax.broadcasted_iota(jnp.int32, (emb.shape[0], 1), 0)
    x = jnp.where(rows == 0, 0.0, emb) + pos               # + pos_embedding (add #1)

    # SoftMoE: all experts + gate folded into a single stacked matmul.
    w = wmoe_ref[...].astype(F32)                          # (D, E*D + E)
    bm = bmoe_ref[...].astype(F32)                         # (1, E*D + E)
    comb = jnp.dot(x, w, preferred_element_type=F32) + bm  # (N, E*D + E)
    gate = _softmax(comb[:, e * d:])                       # (N, E)
    # Gate-weighted sum of experts; kept as 2-D lane slices for robust lowering.
    mix = gate[:, 0:1] * comb[:, 0:d]
    for i in range(1, e):
        mix = mix + gate[:, i:i + 1] * comb[:, i * d:(i + 1) * d]

    y = _ln(x + mix, gmoe_ref[...].astype(F32), bmoe2_ref[...].astype(F32), 1e-5)
    # torchvision Encoder.forward adds pos_embedding AGAIN before its layers.
    o_ref[0] = (y + pos).astype(o_ref.dtype)


def stem(patches, conv_w_mat, conv_b, pos, moe_w_cat, moe_b_cat, moe_g, moe_beta,
         *, num_experts, embed_dim):
    b, n, cpp = patches.shape
    d = embed_dim
    kernel = functools.partial(_stem_kernel, num_experts=num_experts, embed_dim=d)
    args = (patches, conv_w_mat, conv_b, pos, moe_w_cat, moe_b_cat, moe_g, moe_beta)
    in_specs = [pl.BlockSpec((1, n, cpp), lambda i: (i, 0, 0))]
    in_specs += [_const_spec(a) for a in args[1:]]
    return pl.pallas_call(
        kernel,
        out_shape=jax.ShapeDtypeStruct((b, n, d), patches.dtype),
        grid=(b,),
        in_specs=in_specs,
        out_specs=pl.BlockSpec((1, n, d), lambda i: (i, 0, 0)),
        compiler_params=pltpu.CompilerParams(dimension_semantics=("parallel",)),
    )(*args)


# ----------------------------------------------------- fused encoder block --
def _block_kernel(x_ref, ln1g_ref, ln1b_ref, wqkv_ref, bqkv_ref, wo_ref, bo_ref,
                  ln2g_ref, ln2b_ref, w1_ref, b1_ref, w2_ref, b2_ref, o_ref,
                  *, num_heads, embed_dim):
    d = embed_dim
    dh = d // num_heads
    scale = 1.0 / (dh ** 0.5)

    x = x_ref[0].astype(F32)                                               # (N, D)

    # --- pre-LN multi-head self-attention (eps=1e-6) ---
    y = _ln(x, ln1g_ref[...].astype(F32), ln1b_ref[...].astype(F32), 1e-6)
    qkv = (jnp.dot(y, wqkv_ref[...].astype(F32), preferred_element_type=F32)
           + bqkv_ref[...].astype(F32))                                    # (N, 3D)
    wo = wo_ref[...].astype(F32)                                           # (D, D)

    attn = bo_ref[...].astype(F32)                                         # (1, D) bcast
    for h in range(num_heads):
        q = qkv[:, h * dh:(h + 1) * dh]
        k = qkv[:, d + h * dh:d + (h + 1) * dh]
        v = qkv[:, 2 * d + h * dh:2 * d + (h + 1) * dh]
        s = jax.lax.dot_general(q, k, (((1,), (1,)), ((), ())),
                                preferred_element_type=F32) * scale        # (N, N)
        p = _softmax(s)
        o_h = jnp.dot(p, v, preferred_element_type=F32)                    # (N, dh)
        # Merge heads via per-head slices of the output projection
        # (avoids any in-kernel transpose / concat).
        attn = attn + jnp.dot(o_h, wo[h * dh:(h + 1) * dh, :],
                              preferred_element_type=F32)                  # (N, D)
    x = x + attn                                   # dropout == identity (inference)

    # --- pre-LN MLP (eps=1e-6), exact erf GELU ---
    y = _ln(x, ln2g_ref[...].astype(F32), ln2b_ref[...].astype(F32), 1e-6)
    h1 = (jnp.dot(y, w1_ref[...].astype(F32), preferred_element_type=F32)
          + b1_ref[...].astype(F32))
    h1 = 0.5 * h1 * (1.0 + jax.lax.erf(h1 * 0.7071067811865476))
    out = (jnp.dot(h1, w2_ref[...].astype(F32), preferred_element_type=F32)
           + b2_ref[...].astype(F32))
    o_ref[0] = (x + out).astype(o_ref.dtype)


def encoder_block(x, p, *, num_heads):
    b, n, d = x.shape
    dm = p["mlp_b1"].shape[0]
    args = (x,
            p["ln1_g"].reshape(1, d), p["ln1_b"].reshape(1, d),
            p["in_proj_w"], p["in_proj_b"].reshape(1, 3 * d),
            p["out_proj_w"], p["out_proj_b"].reshape(1, d),
            p["ln2_g"].reshape(1, d), p["ln2_b"].reshape(1, d),
            p["mlp_w1"], p["mlp_b1"].reshape(1, dm),
            p["mlp_w2"], p["mlp_b2"].reshape(1, d))
    kernel = functools.partial(_block_kernel, num_heads=num_heads, embed_dim=d)
    in_specs = [pl.BlockSpec((1, n, d), lambda i: (i, 0, 0))]
    in_specs += [_const_spec(a) for a in args[1:]]
    return pl.pallas_call(
        kernel,
        out_shape=jax.ShapeDtypeStruct((b, n, d), x.dtype),
        grid=(b,),
        in_specs=in_specs,
        out_specs=pl.BlockSpec((1, n, d), lambda i: (i, 0, 0)),
        compiler_params=pltpu.CompilerParams(dimension_semantics=("parallel",)),
    )(*args)


# ----------------------------------------------- final LayerNorm + head -----
def _head_kernel(x_ref, g_ref, b_ref, w_ref, bh_ref, o_ref):
    x = x_ref[...].astype(F32)                                             # (B, D)
    y = _ln(x, g_ref[...].astype(F32), b_ref[...].astype(F32), 1e-6)
    o = (jnp.dot(y, w_ref[...].astype(F32), preferred_element_type=F32)
         + bh_ref[...].astype(F32))
    o_ref[...] = o.astype(o_ref.dtype)


def final_head(cls_tokens, g, b, w, bh):
    m, _ = cls_tokens.shape
    n = w.shape[1]
    return pl.pallas_call(
        _head_kernel,
        out_shape=jax.ShapeDtypeStruct((m, n), cls_tokens.dtype),
        in_specs=[pl.BlockSpec(memory_space=VMEM)] * 5,
        out_specs=pl.BlockSpec(memory_space=VMEM),
    )(cls_tokens, g, b, w, bh)


# ------------------------------------------------------------------ forward --
def vit_softmoe_forward(x, params, *, patch, num_heads, num_experts):
    b, c, hh, ww = x.shape
    d = params["conv_b"].shape[0]
    hp, wp = hh // patch, ww // patch
    npatch = hp * wp
    n = npatch + 1
    cpp = c * patch * patch
    e = num_experts

    # im2col glue: NCHW -> (B, Np, C*P*P); prepend a zero row as the CLS slot.
    patches = x.reshape(b, c, hp, patch, wp, patch)
    patches = patches.transpose(0, 2, 4, 1, 3, 5).reshape(b, npatch, cpp)
    patches = jnp.concatenate(
        [jnp.zeros((b, 1, cpp), patches.dtype), patches], axis=1)          # (B, N, CPP)

    conv_w_mat = params["conv_w"].reshape(d, cpp).T                        # (CPP, D)
    conv_b = params["conv_b"].reshape(1, d)
    pos = params["pos_embedding"].reshape(n, d)   # seq == N here (pos[:, :N] == pos)

    # Stack all expert weights + the gate into one (D, E*D + E) matrix.
    moe = params["moe"]
    w_all = moe["expert_w"].transpose(1, 0, 2).reshape(d, e * d)           # (D, E*D)
    moe_w_cat = jnp.concatenate([w_all, moe["gate_w"]], axis=1)            # (D, E*D+E)
    moe_b_cat = jnp.concatenate(
        [moe["expert_b"].reshape(e * d), moe["gate_b"]]).reshape(1, e * d + e)

    tokens = stem(patches, conv_w_mat, conv_b, pos, moe_w_cat, moe_b_cat,
                  moe["norm_g"].reshape(1, d), moe["norm_b"].reshape(1, d),
                  num_experts=e, embed_dim=d)                              # (B, N, D)

    for lp in params["layers"]:
        tokens = encoder_block(tokens, lp, num_heads=num_heads)

    # Final encoder LN is row-wise, so applying it only to the CLS rows is exact.
    cls_tok = tokens[:, 0]                                                 # (B, D)
    return final_head(cls_tok,
                      params["enc_ln_g"].reshape(1, d),
                      params["enc_ln_b"].reshape(1, d),
                      params["head_w"],
                      params["head_b"].reshape(1, -1))                     # (B, classes)


# ------------------------------------------------------------------- params --
def init_params(key, *, patch=16, embed_dim=64, num_heads=4, num_layers=2,
                mlp_dim=128, num_experts=4, num_classes=10, num_patches=4):
    # TODO(synk): weights are synthesized deterministically; no pretrained
    # vit_b_16 checkpoint is loaded.
    del num_heads  # layout only depends on embed_dim

    def nrm(k, shape, scale=0.02):
        return (scale * jax.random.normal(k, shape)).astype(jnp.float32)

    keys = iter(jax.random.split(key, 64 + 16 * num_layers))
    nk = lambda: next(keys)

    d = embed_dim
    seq = num_patches + 1
    params = {
        "conv_w": nrm(nk(), (d, 3, patch, patch)),
        "conv_b": nrm(nk(), (d,)),
        "pos_embedding": nrm(nk(), (1, seq, d)),
        "enc_ln_g": jnp.ones((d,), jnp.float32),
        "enc_ln_b": jnp.zeros((d,), jnp.float32),
        "head_w": nrm(nk(), (d, num_classes)),
        "head_b": nrm(nk(), (num_classes,)),
        "moe": {
            "gate_w": nrm(nk(), (d, num_experts)),
            "gate_b": nrm(nk(), (num_experts,)),
            "expert_w": nrm(nk(), (num_experts, d, d)),
            "expert_b": nrm(nk(), (num_experts, d)),
            "norm_g": jnp.ones((d,), jnp.float32),
            "norm_b": jnp.zeros((d,), jnp.float32),
        },
        "layers": [],
    }
    for _ in range(num_layers):
        params["layers"].append({
            "ln1_g": jnp.ones((d,), jnp.float32),
            "ln1_b": jnp.zeros((d,), jnp.float32),
            "in_proj_w": nrm(nk(), (d, 3 * d)),
            "in_proj_b": nrm(nk(), (3 * d,)),
            "out_proj_w": nrm(nk(), (d, d)),
            "out_proj_b": nrm(nk(), (d,)),
            "ln2_g": jnp.ones((d,), jnp.float32),
            "ln2_b": jnp.zeros((d,), jnp.float32),
            "mlp_w1": nrm(nk(), (d, mlp_dim)),
            "mlp_b1": nrm(nk(), (mlp_dim,)),
            "mlp_w2": nrm(nk(), (mlp_dim, d)),
            "mlp_b2": nrm(nk(), (d,)),
        })
    return params


if __name__ == "__main__":
    key = jax.random.PRNGKey(0)
    pkey, xkey = jax.random.split(key)

    B, C, H, W = 2, 3, 32, 32           # small NCHW image batch
    PATCH = 16
    NUM_HEADS = 4
    NUM_EXPERTS = 4
    NUM_PATCHES = (H // PATCH) * (W // PATCH)
    NUM_CLASSES = 10

    params = init_params(pkey, patch=PATCH, embed_dim=64, num_heads=NUM_HEADS,
                         num_layers=2, mlp_dim=128, num_experts=NUM_EXPERTS,
                         num_classes=NUM_CLASSES, num_patches=NUM_PATCHES)
    x = jax.random.normal(xkey, (B, C, H, W), dtype=jnp.float32)

    fwd = jax.jit(functools.partial(vit_softmoe_forward, patch=PATCH,
                                    num_heads=NUM_HEADS, num_experts=NUM_EXPERTS))
    out = jax.block_until_ready(fwd(x, params))
    assert out.shape == (B, NUM_CLASSES)
    assert bool(jnp.all(jnp.isfinite(out)))
    print("KERNEL_OK")
</pallas_src>

<mosaic_0001>
module attributes {stable_mosaic.version = 11 : i64} {
  func.func @_head_kernel(%arg0: memref<2x64xf32, #tpu.memory_space<vmem>>, %arg1: memref<1x64xf32, #tpu.memory_space<vmem>>, %arg2: memref<1x64xf32, #tpu.memory_space<vmem>>, %arg3: memref<64x10xf32, #tpu.memory_space<vmem>>, %arg4: memref<1x10xf32, #tpu.memory_space<vmem>>, %arg5: memref<2x10xf32, #tpu.memory_space<vmem>>) attributes {dimension_semantics = [], scalar_prefetch = 0 : i64, scratch_operands = 0 : i64, tpu.core_type = #tpu.core_type<tc>} {
    %c0 = arith.constant 0 : index
    %c0_0 = arith.constant 0 : index
    %0 = vector.load %arg0[%c0, %c0_0] : memref<2x64xf32, #tpu.memory_space<vmem>>, vector<2x64xf32>
    %c0_1 = arith.constant 0 : index
    %c0_2 = arith.constant 0 : index
    %1 = vector.load %arg1[%c0_1, %c0_2] : memref<1x64xf32, #tpu.memory_space<vmem>>, vector<1x64xf32>
    %c0_3 = arith.constant 0 : index
    %c0_4 = arith.constant 0 : index
    %2 = vector.load %arg2[%c0_3, %c0_4] : memref<1x64xf32, #tpu.memory_space<vmem>>, vector<1x64xf32>
    %cst = arith.constant dense<0.000000e+00> : vector<2xf32>
    %3 = vector.multi_reduction <add>, %0, %cst [1] : vector<2x64xf32> to vector<2xf32>
    %4 = vector.shape_cast %3 : vector<2xf32> to vector<2x1xf32>
    %cst_5 = arith.constant 6.400000e+01 : f32
    %5 = vector.broadcast %cst_5 : f32 to vector<2x1xf32>
    %6 = arith.divf %4, %5 : vector<2x1xf32>
    %7 = vector.broadcast %6 : vector<2x1xf32> to vector<2x64xf32>
    %8 = arith.subf %0, %7 : vector<2x64xf32>
    %9 = arith.mulf %8, %8 : vector<2x64xf32>
    %cst_6 = arith.constant dense<0.000000e+00> : vector<2xf32>
    %10 = vector.multi_reduction <add>, %9, %cst_6 [1] : vector<2x64xf32> to vector<2xf32>
    %11 = vector.shape_cast %10 : vector<2xf32> to vector<2x1xf32>
    %cst_7 = arith.constant 6.400000e+01 : f32
    %12 = vector.broadcast %cst_7 : f32 to vector<2x1xf32>
    %13 = arith.divf %11, %12 : vector<2x1xf32>
    %14 = vector.broadcast %6 : vector<2x1xf32> to vector<2x64xf32>
    %15 = arith.subf %0, %14 : vector<2x64xf32>
    %cst_8 = arith.constant 9.99999997E-7 : f32
    %16 = vector.broadcast %cst_8 : f32 to vector<2x1xf32>
    %17 = arith.addf %13, %16 : vector<2x1xf32>
    %18 = math.rsqrt %17 : vector<2x1xf32>
    %19 = vector.broadcast %18 : vector<2x1xf32> to vector<2x64xf32>
    %20 = arith.mulf %15, %19 : vector<2x64xf32>
    %21 = vector.broadcast %1 : vector<1x64xf32> to vector<2x64xf32>
    %22 = arith.mulf %20, %21 : vector<2x64xf32>
    %23 = vector.broadcast %2 : vector<1x64xf32> to vector<2x64xf32>
    %24 = arith.addf %22, %23 : vector<2x64xf32>
    %c0_9 = arith.constant 0 : index
    %c0_10 = arith.constant 0 : index
    %25 = vector.load %arg3[%c0_9, %c0_10] : memref<64x10xf32, #tpu.memory_space<vmem>>, vector<64x10xf32>
    %cst_11 = arith.constant dense<0.000000e+00> : vector<2x10xf32>
    %26 = tpu.matmul %24, %25, %cst_11 {dimension_numbers = #tpu.dot_dimension_numbers<[1], [0], [0], [1], [0, 0, 1, 1], [], []>} : vector<2x64xf32>, vector<64x10xf32>, vector<2x10xf32> -> vector<2x10xf32>
    %c0_12 = arith.constant 0 : index
    %c0_13 = arith.constant 0 : index
    %27 = vector.load %arg4[%c0_12, %c0_13] : memref<1x10xf32, #tpu.memory_space<vmem>>, vector<1x10xf32>
    %28 = vector.broadcast %27 : vector<1x10xf32> to vector<2x10xf32>
    %29 = arith.addf %26, %28 : vector<2x10xf32>
    %c0_14 = arith.constant 0 : index
    %c0_15 = arith.constant 0 : index
    %30 = vector.load %arg5[%c0_14, %c0_15] : memref<2x10xf32, #tpu.memory_space<vmem>>, vector<2x10xf32>
    tpu.vector_store %arg5[%c0_14, %c0_15], %29 {strides = array<i32>} : memref<2x10xf32, #tpu.memory_space<vmem>>, vector<2x10xf32>,
    return
  }
}

module attributes {stable_mosaic.version = 11 : i64} {
  func.func @_stem_kernel(%arg0: i32, %arg1: memref<1x5x768xf32, #tpu.memory_space<vmem>>, %arg2: memref<768x64xf32, #tpu.memory_space<vmem>>, %arg3: memref<1x64xf32, #tpu.memory_space<vmem>>, %arg4: memref<5x64xf32, #tpu.memory_space<vmem>>, %arg5: memref<64x260xf32, #tpu.memory_space<vmem>>, %arg6: memref<1x260xf32, #tpu.memory_space<vmem>>, %arg7: memref<1x64xf32, #tpu.memory_space<vmem>>, %arg8: memref<1x64xf32, #tpu.memory_space<vmem>>, %arg9: memref<1x5x64xf32, #tpu.memory_space<vmem>>) attributes {dimension_semantics = [#tpu.dimension_semantics<parallel>], iteration_bounds = array<i64: 2>, scalar_prefetch = 0 : i64, scratch_operands = 0 : i64, tpu.core_type = #tpu.core_type<tc>, window_params = [{transform_indices = @transform_0, window_bounds = array<i64: 1, 5, 768>}, {pipeline_mode = #tpu.pipeline_mode<synchronous>, transform_indices = @transform_1, window_bounds = array<i64: 768, 64>}, {pipeline_mode = #tpu.pipeline_mode<synchronous>, transform_indices = @transform_2, window_bounds = array<i64: 1, 64>}, {pipeline_mode = #tpu.pipeline_mode<synchronous>, transform_indices = @transform_3, window_bounds = array<i64: 5, 64>}, {pipeline_mode = #tpu.pipeline_mode<synchronous>, transform_indices = @transform_4, window_bounds = array<i64: 64, 260>}, {pipeline_mode = #tpu.pipeline_mode<synchronous>, transform_indices = @transform_5, window_bounds = array<i64: 1, 260>}, {pipeline_mode = #tpu.pipeline_mode<synchronous>, transform_indices = @transform_6, window_bounds = array<i64: 1, 64>}, {pipeline_mode = #tpu.pipeline_mode<synchronous>, transform_indices = @transform_7, window_bounds = array<i64: 1, 64>}, {transform_indices = @transform_8, window_bounds = array<i64: 1, 5, 64>}]} {
    %c0 = arith.constant 0 : index
    %c0_0 = arith.constant 0 : index
    %c0_1 = arith.constant 0 : index
    %0 = vector.load %arg1[%c0, %c0_0, %c0_1] : memref<1x5x768xf32, #tpu.memory_space<vmem>>, vector<1x5x768xf32>
    %1 = vector.shape_cast %0 : vector<1x5x768xf32> to vector<5x768xf32>
    %c0_2 = arith.constant 0 : index
    %c0_3 = arith.constant 0 : index
    %2 = vector.load %arg2[%c0_2, %c0_3] : memref<768x64xf32, #tpu.memory_space<vmem>>, vector<768x64xf32>
    %c0_4 = arith.constant 0 : index
    %c0_5 = arith.constant 0 : index
    %3 = vector.load %arg3[%c0_4, %c0_5] : memref<1x64xf32, #tpu.memory_space<vmem>>, vector<1x64xf32>
    %c0_6 = arith.constant 0 : index
    %c0_7 = arith.constant 0 : index
    %4 = vector.load %arg4[%c0_6, %c0_7] : memref<5x64xf32, #tpu.memory_space<vmem>>, vector<5x64xf32>
    %cst = arith.constant dense<0.000000e+00> : vector<5x64xf32>
    %5 = tpu.matmul %1, %2, %cst {dimension_numbers = #tpu.dot_dimension_numbers<[1], [0], [0], [1], [0, 0, 1, 1], [], []>} : vector<5x768xf32>, vector<768x64xf32>, vector<5x64xf32> -> vector<5x64xf32>
    %6 = vector.broadcast %3 : vector<1x64xf32> to vector<5x64xf32>
    %7 = arith.addf %5, %6 : vector<5x64xf32>
    %8 = tpu.iota {dimensions = array<i32: 0>} : vector<5x1xi32>
    %c0_i32 = arith.constant 0 : i32
    %9 = vector.broadcast %c0_i32 : i32 to vector<5x1xi32>
    %10 = arith.cmpi eq, %8, %9 : vector<5x1xi32>
    %cst_8 = arith.constant 0.000000e+00 : f32
    %11 = vector.shape_cast %10 : vector<5x1xi1> to vector<5x1xi1>
    %12 = vector.broadcast %11 : vector<5x1xi1> to vector<5x64xi1>
    %13 = vector.broadcast %cst_8 : f32 to vector<5x64xf32>
    %14 = arith.select %12, %13, %7 : vector<5x64xi1>, vector<5x64xf32>
    %15 = arith.addf %14, %4 : vector<5x64xf32>
    %c0_9 = arith.constant 0 : index
    %c0_10 = arith.constant 0 : index
    %16 = vector.load %arg5[%c0_9, %c0_10] : memref<64x260xf32, #tpu.memory_space<vmem>>, vector<64x260xf32>
    %c0_11 = arith.constant 0 : index
    %c0_12 = arith.constant 0 : index
    %17 = vector.load %arg6[%c0_11, %c0_12] : memref<1x260xf32, #tpu.memory_space<vmem>>, vector<1x260xf32>
    %cst_13 = arith.constant dense<0.000000e+00> : vector<5x260xf32>
    %18 = tpu.matmul %15, %16, %cst_13 {dimension_numbers = #tpu.dot_dimension_numbers<[1], [0], [0], [1], [0, 0, 1, 1], [], []>} : vector<5x64xf32>, vector<64x260xf32>, vector<5x260xf32> -> vector<5x260xf32>
    %19 = vector.broadcast %17 : vector<1x260xf32> to vector<5x260xf32>
    %20 = arith.addf %18, %19 : vector<5x260xf32>
    %21 = vector.extract_strided_slice %20 {offsets = [0, 256], sizes = [5, 4], strides = [1, 1]} : vector<5x260xf32> to vector<5x4xf32>
    %cst_14 = arith.constant dense<0xFF800000> : vector<5xf32>
    %22 = vector.multi_reduction <maximumf>, %21, %cst_14 [1] : vector<5x4xf32> to vector<5xf32>
    %23 = vector.shape_cast %22 : vector<5xf32> to vector<5x1xf32>
    %24 = vector.broadcast %23 : vector<5x1xf32> to vector<5x4xf32>
    %25 = arith.subf %21, %24 : vector<5x4xf32>
    %26 = math.exp %25 : vector<5x4xf32>
    %cst_15 = arith.constant dense<0.000000e+00> : vector<5xf32>
    %27 = vector.multi_reduction <add>, %26, %cst_15 [1] : vector<5x4xf32> to vector<5xf32>
    %28 = vector.shape_cast %27 : vector<5xf32> to vector<5x1xf32>
    %29 = tpu.reciprocal %28 {approx = true} : vector<5x1xf32> -> vector<5x1xf32>
    %30 = vector.broadcast %29 : vector<5x1xf32> to vector<5x4xf32>
    %31 = arith.mulf %26, %30 : vector<5x4xf32>
    %32 = vector.extract_strided_slice %31 {offsets = [0, 0], sizes = [5, 1], strides = [1, 1]} : vector<5x4xf32> to vector<5x1xf32>
    %33 = vector.extract_strided_slice %20 {offsets = [0, 0], sizes = [5, 64], strides = [1, 1]} : vector<5x260xf32> to vector<5x64xf32>
    %34 = vector.broadcast %32 : vector<5x1xf32> to vector<5x64xf32>
    %35 = arith.mulf %34, %33 : vector<5x64xf32>
    %36 = vector.extract_strided_slice %31 {offsets = [0, 1], sizes = [5, 1], strides = [1, 1]} : vector<5x4xf32> to vector<5x1xf32>
    %37 = vector.extract_strided_slice %20 {offsets = [0, 64], sizes = [5, 64], strides = [1, 1]} : vector<5x260xf32> to vector<5x64xf32>
    %38 = vector.broadcast %36 : vector<5x1xf32> to vector<5x64xf32>
    %39 = arith.mulf %38, %37 : vector<5x64xf32>
    %40 = arith.addf %35, %39 : vector<5x64xf32>
    %41 = vector.extract_strided_slice %31 {offsets = [0, 2], sizes = [5, 1], strides = [1, 1]} : vector<5x4xf32> to vector<5x1xf32>
    %42 = vector.extract_strided_slice %20 {offsets = [0, 128], sizes = [5, 64], strides = [1, 1]} : vector<5x260xf32> to vector<5x64xf32>
    %43 = vector.broadcast %41 : vector<5x1xf32> to vector<5x64xf32>
    %44 = arith.mulf %43, %42 : vector<5x64xf32>
    %45 = arith.addf %40, %44 : vector<5x64xf32>
    %46 = vector.extract_strided_slice %31 {offsets = [0, 3], sizes = [5, 1], strides = [1, 1]} : vector<5x4xf32> to vector<5x1xf32>
    %47 = vector.extract_strided_slice %20 {offsets = [0, 192], sizes = [5, 64], strides = [1, 1]} : vector<5x260xf32> to vector<5x64xf32>
    %48 = vector.broadcast %46 : vector<5x1xf32> to vector<5x64xf32>
    %49 = arith.mulf %48, %47 : vector<5x64xf32>
    %50 = arith.addf %45, %49 : vector<5x64xf32>
    %51 = arith.addf %15, %50 : vector<5x64xf32>
    %c0_16 = arith.constant 0 : index
    %c0_17 = arith.constant 0 : index
    %52 = vector.load %arg7[%c0_16, %c0_17] : memref<1x64xf32, #tpu.memory_space<vmem>>, vector<1x64xf32>
    %c0_18 = arith.constant 0 : index
    %c0_19 = arith.constant 0 : index
    %53 = vector.load %arg8[%c0_18, %c0_19] : memref<1x64xf32, #tpu.memory_space<vmem>>, vector<1x64xf32>
    %cst_20 = arith.constant dense<0.000000e+00> : vector<5xf32>
    %54 = vector.multi_reduction <add>, %51, %cst_20 [1] : vector<5x64xf32> to vector<5xf32>
    %55 = vector.shape_cast %54 : vector<5xf32> to vector<5x1xf32>
    %cst_21 = arith.constant 6.400000e+01 : f32
    %56 = vector.broadcast %cst_21 : f32 to vector<5x1xf32>
    %57 = arith.divf %55, %56 : vector<5x1xf32>
    %58 = vector.broadcast %57 : vector<5x1xf32> to vector<5x64xf32>
    %59 = arith.subf %51, %58 : vector<5x64xf32>
    %60 = arith.mulf %59, %59 : vector<5x64xf32>
    %cst_22 = arith.constant dense<0.000000e+00> : vector<5xf32>
    %61 = vector.multi_reduction <add>, %60, %cst_22 [1] : vector<5x64xf32> to vector<5xf32>
    %62 = vector.shape_cast %61 : vector<5xf32> to vector<5x1xf32>
    %cst_23 = arith.constant 6.400000e+01 : f32
    %63 = vector.broadcast %cst_23 : f32 to vector<5x1xf32>
    %64 = arith.divf %62, %63 : vector<5x1xf32>
    %65 = vector.broadcast %57 : vector<5x1xf32> to vector<5x64xf32>
    %66 = arith.subf %51, %65 : vector<5x64xf32>
    %cst_24 = arith.constant 9.99999974E-6 : f32
    %67 = vector.broadcast %cst_24 : f32 to vector<5x1xf32>
    %68 = arith.addf %64, %67 : vector<5x1xf32>
    %69 = math.rsqrt %68 : vector<5x1xf32>
    %70 = vector.broadcast %69 : vector<5x1xf32> to vector<5x64xf32>
    %71 = arith.mulf %66, %70 : vector<5x64xf32>
    %72 = vector.broadcast %52 : vector<1x64xf32> to vector<5x64xf32>
    %73 = arith.mulf %71, %72 : vector<5x64xf32>
    %74 = vector.broadcast %53 : vector<1x64xf32> to vector<5x64xf32>
    %75 = arith.addf %73, %74 : vector<5x64xf32>
    %76 = arith.addf %75, %4 : vector<5x64xf32>
    %c0_25 = arith.constant 0 : index
    %c0_26 = arith.constant 0 : index
    %c0_27 = arith.constant 0 : index
    %77 = vector.load %arg9[%c0_25, %c0_26, %c0_27] : memref<1x5x64xf32, #tpu.memory_space<vmem>>, vector<1x5x64xf32>
    %78 = vector.shape_cast %77 : vector<1x5x64xf32> to vector<5x64xf32>
    %79 = vector.shape_cast %76 : vector<5x64xf32> to vector<1x5x64xf32>
    tpu.vector_store %arg9[%c0_25, %c0_26, %c0_27], %79 {strides = array<i32>} : memref<1x5x64xf32, #tpu.memory_space<vmem>>, vector<1x5x64xf32>,
    return
  }
  func.func @transform_0(%arg0: i32) -> (i32, i32, i32) {
    %c0_i32 = arith.constant 0 : i32
    %c0_i32_0 = arith.constant 0 : i32
    %c0_i32_1 = arith.constant 0 : i32
    return %arg0, %c0_i32, %c0_i32_0 : i32, i32, i32
  }
  func.func @transform_1(%arg0: i32) -> (i32, i32) {
    %c0_i32 = arith.constant 0 : i32
    %c0_i32_0 = arith.constant 0 : i32
    %c0_i32_1 = arith.constant 0 : i32
    return %c0_i32, %c0_i32_0 : i32, i32
  }
  func.func @transform_2(%arg0: i32) -> (i32, i32) {
    %c0_i32 = arith.constant 0 : i32
    %c0_i32_0 = arith.constant 0 : i32
    %c0_i32_1 = arith.constant 0 : i32
    return %c0_i32, %c0_i32_0 : i32, i32
  }
  func.func @transform_3(%arg0: i32) -> (i32, i32) {
    %c0_i32 = arith.constant 0 : i32
    %c0_i32_0 = arith.constant 0 : i32
    %c0_i32_1 = arith.constant 0 : i32
    return %c0_i32, %c0_i32_0 : i32, i32
  }
  func.func @transform_4(%arg0: i32) -> (i32, i32) {
    %c0_i32 = arith.constant 0 : i32
    %c0_i32_0 = arith.constant 0 : i32
    %c0_i32_1 = arith.constant 0 : i32
    return %c0_i32, %c0_i32_0 : i32, i32
  }
  func.func @transform_5(%arg0: i32) -> (i32, i32) {
    %c0_i32 = arith.constant 0 : i32
    %c0_i32_0 = arith.constant 0 : i32
    %c0_i32_1 = arith.constant 0 : i32
    return %c0_i32, %c0_i32_0 : i32, i32
  }
  func.func @transform_6(%arg0: i32) -> (i32, i32) {
    %c0_i32 = arith.constant 0 : i32
    %c0_i32_0 = arith.constant 0 : i32
    %c0_i32_1 = arith.constant 0 : i32
    return %c0_i32, %c0_i32_0 : i32, i32
  }
  func.func @transform_7(%arg0: i32) -> (i32, i32) {
    %c0_i32 = arith.constant 0 : i32
    %c0_i32_0 = arith.constant 0 : i32
    %c0_i32_1 = arith.constant 0 : i32
    return %c0_i32, %c0_i32_0 : i32, i32
  }
  func.func @transform_8(%arg0: i32) -> (i32, i32, i32) {
    %c0_i32 = arith.constant 0 : i32
    %c0_i32_0 = arith.constant 0 : i32
    %c0_i32_1 = arith.constant 0 : i32
    return %arg0, %c0_i32, %c0_i32_0 : i32, i32, i32
  }
}

module attributes {stable_mosaic.version = 11 : i64} {
  func.func @_block_kernel(%arg0: i32, %arg1: memref<1x5x64xf32, #tpu.memory_space<vmem>>, %arg2: memref<1x64xf32, #tpu.memory_space<vmem>>, %arg3: memref<1x64xf32, #tpu.memory_space<vmem>>, %arg4: memref<64x192xf32, #tpu.memory_space<vmem>>, %arg5: memref<1x192xf32, #tpu.memory_space<vmem>>, %arg6: memref<64x64xf32, #tpu.memory_space<vmem>>, %arg7: memref<1x64xf32, #tpu.memory_space<vmem>>, %arg8: memref<1x64xf32, #tpu.memory_space<vmem>>, %arg9: memref<1x64xf32, #tpu.memory_space<vmem>>, %arg10: memref<64x128xf32, #tpu.memory_space<vmem>>, %arg11: memref<1x128xf32, #tpu.memory_space<vmem>>, %arg12: memref<128x64xf32, #tpu.memory_space<vmem>>, %arg13: memref<1x64xf32, #tpu.memory_space<vmem>>, %arg14: memref<1x5x64xf32, #tpu.memory_space<vmem>>) attributes {dimension_semantics = [#tpu.dimension_semantics<parallel>], iteration_bounds = array<i64: 2>, scalar_prefetch = 0 : i64, scratch_operands = 0 : i64, tpu.core_type = #tpu.core_type<tc>, window_params = [{transform_indices = @transform_0, window_bounds = array<i64: 1, 5, 64>}, {pipeline_mode = #tpu.pipeline_mode<synchronous>, transform_indices = @transform_1, window_bounds = array<i64: 1, 64>}, {pipeline_mode = #tpu.pipeline_mode<synchronous>, transform_indices = @transform_2, window_bounds = array<i64: 1, 64>}, {pipeline_mode = #tpu.pipeline_mode<synchronous>, transform_indices = @transform_3, window_bounds = array<i64: 64, 192>}, {pipeline_mode = #tpu.pipeline_mode<synchronous>, transform_indices = @transform_4, window_bounds = array<i64: 1, 192>}, {pipeline_mode = #tpu.pipeline_mode<synchronous>, transform_indices = @transform_5, window_bounds = array<i64: 64, 64>}, {pipeline_mode = #tpu.pipeline_mode<synchronous>, transform_indices = @transform_6, window_bounds = array<i64: 1, 64>}, {pipeline_mode = #tpu.pipeline_mode<synchronous>, transform_indices = @transform_7, window_bounds = array<i64: 1, 64>}, {pipeline_mode = #tpu.pipeline_mode<synchronous>, transform_indices = @transform_8, window_bounds = array<i64: 1, 64>}, {pipeline_mode = #tpu.pipeline_mode<synchronous>, transform_indices = @transform_9, window_bounds = array<i64: 64, 128>}, {pipeline_mode = #tpu.pipeline_mode<synchronous>, transform_indices = @transform_10, window_bounds = array<i64: 1, 128>}, {pipeline_mode = #tpu.pipeline_mode<synchronous>, transform_indices = @transform_11, window_bounds = array<i64: 128, 64>}, {pipeline_mode = #tpu.pipeline_mode<synchronous>, transform_indices = @transform_12, window_bounds = array<i64: 1, 64>}, {transform_indices = @transform_13, window_bounds = array<i64: 1, 5, 64>}]} {
    %c0 = arith.constant 0 : index
    %c0_0 = arith.constant 0 : index
    %c0_1 = arith.constant 0 : index
    %0 = vector.load %arg1[%c0, %c0_0, %c0_1] : memref<1x5x64xf32, #tpu.memory_space<vmem>>, vector<1x5x64xf32>
    %1 = vector.shape_cast %0 : vector<1x5x64xf32> to vector<5x64xf32>
    %c0_2 = arith.constant 0 : index
    %c0_3 = arith.constant 0 : index
    %2 = vector.load %arg2[%c0_2, %c0_3] : memref<1x64xf32, #tpu.memory_space<vmem>>, vector<1x64xf32>
    %c0_4 = arith.constant 0 : index
    %c0_5 = arith.constant 0 : index
    %3 = vector.load %arg3[%c0_4, %c0_5] : memref<1x64xf32, #tpu.memory_space<vmem>>, vector<1x64xf32>
    %cst = arith.constant dense<0.000000e+00> : vector<5xf32>
    %4 = vector.multi_reduction <add>, %1, %cst [1] : vector<5x64xf32> to vector<5xf32>
    %5 = vector.shape_cast %4 : vector<5xf32> to vector<5x1xf32>
    %cst_6 = arith.constant 6.400000e+01 : f32
    %6 = vector.broadcast %cst_6 : f32 to vector<5x1xf32>
    %7 = arith.divf %5, %6 : vector<5x1xf32>
    %8 = vector.broadcast %7 : vector<5x1xf32> to vector<5x64xf32>
    %9 = arith.subf %1, %8 : vector<5x64xf32>
    %10 = arith.mulf %9, %9 : vector<5x64xf32>
    %cst_7 = arith.constant dense<0.000000e+00> : vector<5xf32>
    %11 = vector.multi_reduction <add>, %10, %cst_7 [1] : vector<5x64xf32> to vector<5xf32>
    %12 = vector.shape_cast %11 : vector<5xf32> to vector<5x1xf32>
    %cst_8 = arith.constant 6.400000e+01 : f32
    %13 = vector.broadcast %cst_8 : f32 to vector<5x1xf32>
    %14 = arith.divf %12, %13 : vector<5x1xf32>
    %15 = vector.broadcast %7 : vector<5x1xf32> to vector<5x64xf32>
    %16 = arith.subf %1, %15 : vector<5x64xf32>
    %cst_9 = arith.constant 9.99999997E-7 : f32
    %17 = vector.broadcast %cst_9 : f32 to vector<5x1xf32>
    %18 = arith.addf %14, %17 : vector<5x1xf32>
    %19 = math.rsqrt %18 : vector<5x1xf32>
    %20 = vector.broadcast %19 : vector<5x1xf32> to vector<5x64xf32>
    %21 = arith.mulf %16, %20 : vector<5x64xf32>
    %22 = vector.broadcast %2 : vector<1x64xf32> to vector<5x64xf32>
    %23 = arith.mulf %21, %22 : vector<5x64xf32>
    %24 = vector.broadcast %3 : vector<1x64xf32> to vector<5x64xf32>
    %25 = arith.addf %23, %24 : vector<5x64xf32>
    %c0_10 = arith.constant 0 : index
    %c0_11 = arith.constant 0 : index
    %26 = vector.load %arg4[%c0_10, %c0_11] : memref<64x192xf32, #tpu.memory_space<vmem>>, vector<64x192xf32>
    %cst_12 = arith.constant dense<0.000000e+00> : vector<5x192xf32>
    %27 = tpu.matmul %25, %26, %cst_12 {dimension_numbers = #tpu.dot_dimension_numbers<[1], [0], [0], [1], [0, 0, 1, 1], [], []>} : vector<5x64xf32>, vector<64x192xf32>, vector<5x192xf32> -> vector<5x192xf32>
    %c0_13 = arith.constant 0 : index
    %c0_14 = arith.constant 0 : index
    %28 = vector.load %arg5[%c0_13, %c0_14] : memref<1x192xf32, #tpu.memory_space<vmem>>, vector<1x192xf32>
    %29 = vector.broadcast %28 : vector<1x192xf32> to vector<5x192xf32>
    %30 = arith.addf %27, %29 : vector<5x192xf32>
    %c0_15 = arith.constant 0 : index
    %c0_16 = arith.constant 0 : index
    %31 = vector.load %arg6[%c0_15, %c0_16] : memref<64x64xf32, #tpu.memory_space<vmem>>, vector<64x64xf32>
    %c0_17 = arith.constant 0 : index
    %c0_18 = arith.constant 0 : index
    %32 = vector.load %arg7[%c0_17, %c0_18] : memref<1x64xf32, #tpu.memory_space<vmem>>, vector<1x64xf32>
    %33 = vector.extract_strided_slice %30 {offsets = [0, 0], sizes = [5, 16], strides = [1, 1]} : vector<5x192xf32> to vector<5x16xf32>
    %34 = vector.extract_strided_slice %30 {offsets = [0, 64], sizes = [5, 16], strides = [1, 1]} : vector<5x192xf32> to vector<5x16xf32>
    %35 = vector.extract_strided_slice %30 {offsets = [0, 128], sizes = [5, 16], strides = [1, 1]} : vector<5x192xf32> to vector<5x16xf32>
    %cst_19 = arith.constant dense<0.000000e+00> : vector<5x5xf32>
    %36 = tpu.matmul %33, %34, %cst_19 {dimension_numbers = #tpu.dot_dimension_numbers<[1], [1], [0], [0], [0, 0, 1, 0], [], []>} : vector<5x16xf32>, vector<5x16xf32>, vector<5x5xf32> -> vector<5x5xf32>
    %cst_20 = arith.constant 2.500000e-01 : f32
    %37 = vector.broadcast %cst_20 : f32 to vector<5x5xf32>
    %38 = arith.mulf %36, %37 : vector<5x5xf32>
    %cst_21 = arith.constant dense<0xFF800000> : vector<5xf32>
    %39 = vector.multi_reduction <maximumf>, %38, %cst_21 [1] : vector<5x5xf32> to vector<5xf32>
    %40 = vector.shape_cast %39 : vector<5xf32> to vector<5x1xf32>
    %41 = vector.broadcast %40 : vector<5x1xf32> to vector<5x5xf32>
    %42 = arith.subf %38, %41 : vector<5x5xf32>
    %43 = math.exp %42 : vector<5x5xf32>
    %cst_22 = arith.constant dense<0.000000e+00> : vector<5xf32>
    %44 = vector.multi_reduction <add>, %43, %cst_22 [1] : vector<5x5xf32> to vector<5xf32>
    %45 = vector.shape_cast %44 : vector<5xf32> to vector<5x1xf32>
    %46 = tpu.reciprocal %45 {approx = true} : vector<5x1xf32> -> vector<5x1xf32>
    %47 = vector.broadcast %46 : vector<5x1xf32> to vector<5x5xf32>
    %48 = arith.mulf %43, %47 : vector<5x5xf32>
    %cst_23 = arith.constant dense<0.000000e+00> : vector<5x16xf32>
    %49 = tpu.matmul %48, %35, %cst_23 {dimension_numbers = #tpu.dot_dimension_numbers<[1], [0], [0], [1], [0, 0, 1, 1], [], []>} : vector<5x5xf32>, vector<5x16xf32>, vector<5x16xf32> -> vector<5x16xf32>
    %50 = vector.extract_strided_slice %31 {offsets = [0, 0], sizes = [16, 64], strides = [1, 1]} : vector<64x64xf32> to vector<16x64xf32>
    %cst_24 = arith.constant dense<0.000000e+00> : vector<5x64xf32>
    %51 = tpu.matmul %49, %50, %cst_24 {dimension_numbers = #tpu.dot_dimension_numbers<[1], [0], [0], [1], [0, 0, 1, 1], [], []>} : vector<5x16xf32>, vector<16x64xf32>, vector<5x64xf32> -> vector<5x64xf32>
    %52 = vector.broadcast %32 : vector<1x64xf32> to vector<5x64xf32>
    %53 = arith.addf %52, %51 : vector<5x64xf32>
    %54 = vector.extract_strided_slice %30 {offsets = [0, 16], sizes = [5, 16], strides = [1, 1]} : vector<5x192xf32> to vector<5x16xf32>
    %55 = vector.extract_strided_slice %30 {offsets = [0, 80], sizes = [5, 16], strides = [1, 1]} : vector<5x192xf32> to vector<5x16xf32>
    %56 = vector.extract_strided_slice %30 {offsets = [0, 144], sizes = [5, 16], strides = [1, 1]} : vector<5x192xf32> to vector<5x16xf32>
    %cst_25 = arith.constant dense<0.000000e+00> : vector<5x5xf32>
    %57 = tpu.matmul %54, %55, %cst_25 {dimension_numbers = #tpu.dot_dimension_numbers<[1], [1], [0], [0], [0, 0, 1, 0], [], []>} : vector<5x16xf32>, vector<5x16xf32>, vector<5x5xf32> -> vector<5x5xf32>
    %cst_26 = arith.constant 2.500000e-01 : f32
    %58 = vector.broadcast %cst_26 : f32 to vector<5x5xf32>
    %59 = arith.mulf %57, %58 : vector<5x5xf32>
    %cst_27 = arith.constant dense<0xFF800000> : vector<5xf32>
    %60 = vector.multi_reduction <maximumf>, %59, %cst_27 [1] : vector<5x5xf32> to vector<5xf32>
    %61 = vector.shape_cast %60 : vector<5xf32> to vector<5x1xf32>
    %62 = vector.broadcast %61 : vector<5x1xf32> to vector<5x5xf32>
    %63 = arith.subf %59, %62 : vector<5x5xf32>
    %64 = math.exp %63 : vector<5x5xf32>
    %cst_28 = arith.constant dense<0.000000e+00> : vector<5xf32>
    %65 = vector.multi_reduction <add>, %64, %cst_28 [1] : vector<5x5xf32> to vector<5xf32>
    %66 = vector.shape_cast %65 : vector<5xf32> to vector<5x1xf32>
    %67 = tpu.reciprocal %66 {approx = true} : vector<5x1xf32> -> vector<5x1xf32>
    %68 = vector.broadcast %67 : vector<5x1xf32> to vector<5x5xf32>
    %69 = arith.mulf %64, %68 : vector<5x5xf32>
    %cst_29 = arith.constant dense<0.000000e+00> : vector<5x16xf32>
    %70 = tpu.matmul %69, %56, %cst_29 {dimension_numbers = #tpu.dot_dimension_numbers<[1], [0], [0], [1], [0, 0, 1, 1], [], []>} : vector<5x5xf32>, vector<5x16xf32>, vector<5x16xf32> -> vector<5x16xf32>
    %71 = vector.extract_strided_slice %31 {offsets = [16, 0], sizes = [16, 64], strides = [1, 1]} : vector<64x64xf32> to vector<16x64xf32>
    %cst_30 = arith.constant dense<0.000000e+00> : vector<5x64xf32>
    %72 = tpu.matmul %70, %71, %cst_30 {dimension_numbers = #tpu.dot_dimension_numbers<[1], [0], [0], [1], [0, 0, 1, 1], [], []>} : vector<5x16xf32>, vector<16x64xf32>, vector<5x64xf32> -> vector<5x64xf32>
    %73 = arith.addf %53, %72 : vector<5x64xf32>
    %74 = vector.extract_strided_slice %30 {offsets = [0, 32], sizes = [5, 16], strides = [1, 1]} : vector<5x192xf32> to vector<5x16xf32>
    %75 = vector.extract_strided_slice %30 {offsets = [0, 96], sizes = [5, 16], strides = [1, 1]} : vector<5x192xf32> to vector<5x16xf32>
    %76 = vector.extract_strided_slice %30 {offsets = [0, 160], sizes = [5, 16], strides = [1, 1]} : vector<5x192xf32> to vector<5x16xf32>
    %cst_31 = arith.constant dense<0.000000e+00> : vector<5x5xf32>
    %77 = tpu.matmul %74, %75, %cst_31 {dimension_numbers = #tpu.dot_dimension_numbers<[1], [1], [0], [0], [0, 0, 1, 0], [], []>} : vector<5x16xf32>, vector<5x16xf32>, vector<5x5xf32> -> vector<5x5xf32>
    %cst_32 = arith.constant 2.500000e-01 : f32
    %78 = vector.broadcast %cst_32 : f32 to vector<5x5xf32>
    %79 = arith.mulf %77, %78 : vector<5x5xf32>
    %cst_33 = arith.constant dense<0xFF800000> : vector<5xf32>
    %80 = vector.multi_reduction <maximumf>, %79, %cst_33 [1] : vector<5x5xf32> to vector<5xf32>
    %81 = vector.shape_cast %80 : vector<5xf32> to vector<5x1xf32>
    %82 = vector.broadcast %81 : vector<5x1xf32> to vector<5x5xf32>
    %83 = arith.subf %79, %82 : vector<5x5xf32>
    %84 = math.exp %83 : vector<5x5xf32>
    %cst_34 = arith.constant dense<0.000000e+00> : vector<5xf32>
    %85 = vector.multi_reduction <add>, %84, %cst_34 [1] : vector<5x5xf32> to vector<5xf32>
    %86 = vector.shape_cast %85 : vector<5xf32> to vector<5x1xf32>
    %87 = tpu.reciprocal %86 {approx = true} : vector<5x1xf32> -> vector<5x1xf32>
    %88 = vector.broadcast %87 : vector<5x1xf32> to vector<5x5xf32>
    %89 = arith.mulf %84, %88 : vector<5x5xf32>
    %cst_35 = arith.constant dense<0.000000e+00> : vector<5x16xf32>
    %90 = tpu.matmul %89, %76, %cst_35 {dimension_numbers = #tpu.dot_dimension_numbers<[1], [0], [0], [1], [0, 0, 1, 1], [], []>} : vector<5x5xf32>, vector<5x16xf32>, vector<5x16xf32> -> vector<5x16xf32>
    %91 = vector.extract_strided_slice %31 {offsets = [32, 0], sizes = [16, 64], strides = [1, 1]} : vector<64x64xf32> to vector<16x64xf32>
    %cst_36 = arith.constant dense<0.000000e+00> : vector<5x64xf32>
    %92 = tpu.matmul %90, %91, %cst_36 {dimension_numbers = #tpu.dot_dimension_numbers<[1], [0], [0], [1], [0, 0, 1, 1], [], []>} : vector<5x16xf32>, vector<16x64xf32>, vector<5x64xf32> -> vector<5x64xf32>
    %93 = arith.addf %73, %92 : vector<5x64xf32>
    %94 = vector.extract_strided_slice %30 {offsets = [0, 48], sizes = [5, 16], strides = [1, 1]} : vector<5x192xf32> to vector<5x16xf32>
    %95 = vector.extract_strided_slice %30 {offsets = [0, 112], sizes = [5, 16], strides = [1, 1]} : vector<5x192xf32> to vector<5x16xf32>
    %96 = vector.extract_strided_slice %30 {offsets = [0, 176], sizes = [5, 16], strides = [1, 1]} : vector<5x192xf32> to vector<5x16xf32>
    %cst_37 = arith.constant dense<0.000000e+00> : vector<5x5xf32>
    %97 = tpu.matmul %94, %95, %cst_37 {dimension_numbers = #tpu.dot_dimension_numbers<[1], [1], [0], [0], [0, 0, 1, 0], [], []>} : vector<5x16xf32>, vector<5x16xf32>, vector<5x5xf32> -> vector<5x5xf32>
    %cst_38 = arith.constant 2.500000e-01 : f32
    %98 = vector.broadcast %cst_38 : f32 to vector<5x5xf32>
    %99 = arith.mulf %97, %98 : vector<5x5xf32>
    %cst_39 = arith.constant dense<0xFF800000> : vector<5xf32>
    %100 = vector.multi_reduction <maximumf>, %99, %cst_39 [1] : vector<5x5xf32> to vector<5xf32>
    %101 = vector.shape_cast %100 : vector<5xf32> to vector<5x1xf32>
    %102 = vector.broadcast %101 : vector<5x1xf32> to vector<5x5xf32>
    %103 = arith.subf %99, %102 : vector<5x5xf32>
    %104 = math.exp %103 : vector<5x5xf32>
    %cst_40 = arith.constant dense<0.000000e+00> : vector<5xf32>
    %105 = vector.multi_reduction <add>, %104, %cst_40 [1] : vector<5x5xf32> to vector<5xf32>
    %106 = vector.shape_cast %105 : vector<5xf32> to vector<5x1xf32>
    %107 = tpu.reciprocal %106 {approx = true} : vector<5x1xf32> -> vector<5x1xf32>
    %108 = vector.broadcast %107 : vector<5x1xf32> to vector<5x5xf32>
    %109 = arith.mulf %104, %108 : vector<5x5xf32>
    %cst_41 = arith.constant dense<0.000000e+00> : vector<5x16xf32>
    %110 = tpu.matmul %109, %96, %cst_41 {dimension_numbers = #tpu.dot_dimension_numbers<[1], [0], [0], [1], [0, 0, 1, 1], [], []>} : vector<5x5xf32>, vector<5x16xf32>, vector<5x16xf32> -> vector<5x16xf32>
    %111 = vector.extract_strided_slice %31 {offsets = [48, 0], sizes = [16, 64], strides = [1, 1]} : vector<64x64xf32> to vector<16x64xf32>
    %cst_42 = arith.constant dense<0.000000e+00> : vector<5x64xf32>
    %112 = tpu.matmul %110, %111, %cst_42 {dimension_numbers = #tpu.dot_dimension_numbers<[1], [0], [0], [1], [0, 0, 1, 1], [], []>} : vector<5x16xf32>, vector<16x64xf32>, vector<5x64xf32> -> vector<5x64xf32>
    %113 = arith.addf %93, %112 : vector<5x64xf32>
    %114 = arith.addf %1, %113 : vector<5x64xf32>
    %c0_43 = arith.constant 0 : index
    %c0_44 = arith.constant 0 : index
    %115 = vector.load %arg8[%c0_43, %c0_44] : memref<1x64xf32, #tpu.memory_space<vmem>>, vector<1x64xf32>
    %c0_45 = arith.constant 0 : index
    %c0_46 = arith.constant 0 : index
    %116 = vector.load %arg9[%c0_45, %c0_46] : memref<1x64xf32, #tpu.memory_space<vmem>>, vector<1x64xf32>
    %cst_47 = arith.constant dense<0.000000e+00> : vector<5xf32>
    %117 = vector.multi_reduction <add>, %114, %cst_47 [1] : vector<5x64xf32> to vector<5xf32>
    %118 = vector.shape_cast %117 : vector<5xf32> to vector<5x1xf32>
    %cst_48 = arith.constant 6.400000e+01 : f32
    %119 = vector.broadcast %cst_48 : f32 to vector<5x1xf32>
    %120 = arith.divf %118, %119 : vector<5x1xf32>
    %121 = vector.broadcast %120 : vector<5x1xf32> to vector<5x64xf32>
    %122 = arith.subf %114, %121 : vector<5x64xf32>
    %123 = arith.mulf %122, %122 : vector<5x64xf32>
    %cst_49 = arith.constant dense<0.000000e+00> : vector<5xf32>
    %124 = vector.multi_reduction <add>, %123, %cst_49 [1] : vector<5x64xf32> to vector<5xf32>
    %125 = vector.shape_cast %124 : vector<5xf32> to vector<5x1xf32>
    %cst_50 = arith.constant 6.400000e+01 : f32
    %126 = vector.broadcast %cst_50 : f32 to vector<5x1xf32>
    %127 = arith.divf %125, %126 : vector<5x1xf32>
    %128 = vector.broadcast %120 : vector<5x1xf32> to vector<5x64xf32>
    %129 = arith.subf %114, %128 : vector<5x64xf32>
    %cst_51 = arith.constant 9.99999997E-7 : f32
    %130 = vector.broadcast %cst_51 : f32 to vector<5x1xf32>
    %131 = arith.addf %127, %130 : vector<5x1xf32>
    %132 = math.rsqrt %131 : vector<5x1xf32>
    %133 = vector.broadcast %132 : vector<5x1xf32> to vector<5x64xf32>
    %134 = arith.mulf %129, %133 : vector<5x64xf32>
    %135 = vector.broadcast %115 : vector<1x64xf32> to vector<5x64xf32>
    %136 = arith.mulf %134, %135 : vector<5x64xf32>
    %137 = vector.broadcast %116 : vector<1x64xf32> to vector<5x64xf32>
    %138 = arith.addf %136, %137 : vector<5x64xf32>
    %c0_52 = arith.constant 0 : index
    %c0_53 = arith.constant 0 : index
    %139 = vector.load %arg10[%c0_52, %c0_53] : memref<64x128xf32, #tpu.memory_space<vmem>>, vector<64x128xf32>
    %cst_54 = arith.constant dense<0.000000e+00> : vector<5x128xf32>
    %140 = tpu.matmul %138, %139, %cst_54 {dimension_numbers = #tpu.dot_dimension_numbers<[1], [0], [0], [1], [0, 0, 1, 1], [], []>} : vector<5x64xf32>, vector<64x128xf32>, vector<5x128xf32> -> vector<5x128xf32>
    %c0_55 = arith.constant 0 : index
    %c0_56 = arith.constant 0 : index
    %141 = vector.load %arg11[%c0_55, %c0_56] : memref<1x128xf32, #tpu.memory_space<vmem>>, vector<1x128xf32>
    %142 = vector.broadcast %141 : vector<1x128xf32> to vector<5x128xf32>
    %143 = arith.addf %140, %142 : vector<5x128xf32>
    %cst_57 = arith.constant 5.000000e-01 : f32
    %144 = vector.broadcast %cst_57 : f32 to vector<5x128xf32>
    %145 = arith.mulf %144, %143 : vector<5x128xf32>
    %cst_58 = arith.constant 0.707106769 : f32
    %146 = vector.broadcast %cst_58 : f32 to vector<5x128xf32>
    %147 = arith.mulf %143, %146 : vector<5x128xf32>
    %148 = math.erf %147 : vector<5x128xf32>
    %cst_59 = arith.constant 1.000000e+00 : f32
    %149 = vector.broadcast %cst_59 : f32 to vector<5x128xf32>
    %150 = arith.addf %149, %148 : vector<5x128xf32>
    %151 = arith.mulf %145, %150 : vector<5x128xf32>
    %c0_60 = arith.constant 0 : index
    %c0_61 = arith.constant 0 : index
    %152 = vector.load %arg12[%c0_60, %c0_61] : memref<128x64xf32, #tpu.memory_space<vmem>>, vector<128x64xf32>
    %cst_62 = arith.constant dense<0.000000e+00> : vector<5x64xf32>
    %153 = tpu.matmul %151, %152, %cst_62 {dimension_numbers = #tpu.dot_dimension_numbers<[1], [0], [0], [1], [0, 0, 1, 1], [], []>} : vector<5x128xf32>, vector<128x64xf32>, vector<5x64xf32> -> vector<5x64xf32>
    %c0_63 = arith.constant 0 : index
    %c0_64 = arith.constant 0 : index
    %154 = vector.load %arg13[%c0_63, %c0_64] : memref<1x64xf32, #tpu.memory_space<vmem>>, vector<1x64xf32>
    %155 = vector.broadcast %154 : vector<1x64xf32> to vector<5x64xf32>
    %156 = arith.addf %153, %155 : vector<5x64xf32>
    %157 = arith.addf %114, %156 : vector<5x64xf32>
    %c0_65 = arith.constant 0 : index
    %c0_66 = arith.constant 0 : index
    %c0_67 = arith.constant 0 : index
    %158 = vector.load %arg14[%c0_65, %c0_66, %c0_67] : memref<1x5x64xf32, #tpu.memory_space<vmem>>, vector<1x5x64xf32>
    %159 = vector.shape_cast %158 : vector<1x5x64xf32> to vector<5x64xf32>
    %160 = vector.shape_cast %157 : vector<5x64xf32> to vector<1x5x64xf32>
    tpu.vector_store %arg14[%c0_65, %c0_66, %c0_67], %160 {strides = array<i32>} : memref<1x5x64xf32, #tpu.memory_space<vmem>>, vector<1x5x64xf32>,
    return
  }
  func.func @transform_0(%arg0: i32) -> (i32, i32, i32) {
    %c0_i32 = arith.constant 0 : i32
    %c0_i32_0 = arith.constant 0 : i32
    %c0_i32_1 = arith.constant 0 : i32
    return %arg0, %c0_i32, %c0_i32_0 : i32, i32, i32
  }
  func.func @transform_1(%arg0: i32) -> (i32, i32) {
    %c0_i32 = arith.constant 0 : i32
    %c0_i32_0 = arith.constant 0 : i32
    %c0_i32_1 = arith.constant 0 : i32
    return %c0_i32, %c0_i32_0 : i32, i32
  }
  func.func @transform_2(%arg0: i32) -> (i32, i32) {
    %c0_i32 = arith.constant 0 : i32
    %c0_i32_0 = arith.constant 0 : i32
    %c0_i32_1 = arith.constant 0 : i32
    return %c0_i32, %c0_i32_0 : i32, i32
  }
  func.func @transform_3(%arg0: i32) -> (i32, i32) {
    %c0_i32 = arith.constant 0 : i32
    %c0_i32_0 = arith.constant 0 : i32
    %c0_i32_1 = arith.constant 0 : i32
    return %c0_i32, %c0_i32_0 : i32, i32
  }
  func.func @transform_4(%arg0: i32) -> (i32, i32) {
    %c0_i32 = arith.constant 0 : i32
    %c0_i32_0 = arith.constant 0 : i32
    %c0_i32_1 = arith.constant 0 : i32
    return %c0_i32, %c0_i32_0 : i32, i32
  }
  func.func @transform_5(%arg0: i32) -> (i32, i32) {
    %c0_i32 = arith.constant 0 : i32
    %c0_i32_0 = arith.constant 0 : i32
    %c0_i32_1 = arith.constant 0 : i32
    return %c0_i32, %c0_i32_0 : i32, i32
  }
  func.func @transform_6(%arg0: i32) -> (i32, i32) {
    %c0_i32 = arith.constant 0 : i32
    %c0_i32_0 = arith.constant 0 : i32
    %c0_i32_1 = arith.constant 0 : i32
    return %c0_i32, %c0_i32_0 : i32, i32
  }
  func.func @transform_7(%arg0: i32) -> (i32, i32) {
    %c0_i32 = arith.constant 0 : i32
    %c0_i32_0 = arith.constant 0 : i32
    %c0_i32_1 = arith.constant 0 : i32
    return %c0_i32, %c0_i32_0 : i32, i32
  }
  func.func @transform_8(%arg0: i32) -> (i32, i32) {
    %c0_i32 = arith.constant 0 : i32
    %c0_i32_0 = arith.constant 0 : i32
    %c0_i32_1 = arith.constant 0 : i32
    return %c0_i32, %c0_i32_0 : i32, i32
  }
  func.func @transform_9(%arg0: i32) -> (i32, i32) {
    %c0_i32 = arith.constant 0 : i32
    %c0_i32_0 = arith.constant 0 : i32
    %c0_i32_1 = arith.constant 0 : i32
    return %c0_i32, %c0_i32_0 : i32, i32
  }
  func.func @transform_10(%arg0: i32) -> (i32, i32) {
    %c0_i32 = arith.constant 0 : i32
    %c0_i32_0 = arith.constant 0 : i32
    %c0_i32_1 = arith.constant 0 : i32
    return %c0_i32, %c0_i32_0 : i32, i32
  }
  func.func @transform_11(%arg0: i32) -> (i32, i32) {
    %c0_i32 = arith.constant 0 : i32
    %c0_i32_0 = arith.constant 0 : i32
    %c0_i32_1 = arith.constant 0 : i32
    return %c0_i32, %c0_i32_0 : i32, i32
  }
  func.func @transform_12(%arg0: i32) -> (i32, i32) {
    %c0_i32 = arith.constant 0 : i32
    %c0_i32_0 = arith.constant 0 : i32
    %c0_i32_1 = arith.constant 0 : i32
    return %c0_i32, %c0_i32_0 : i32, i32
  }
  func.func @transform_13(%arg0: i32) -> (i32, i32, i32) {
    %c0_i32 = arith.constant 0 : i32
    %c0_i32_0 = arith.constant 0 : i32
    %c0_i32_1 = arith.constant 0 : i32
    return %arg0, %c0_i32, %c0_i32_0 : i32, i32, i32
  }
}

</mosaic_0001>

<llo_original>
// kernel: vit_softmoe_forward.7
$region0: #{vit_softmoe_forward.7}
  #allocation0 [shape = 'u32[]', space=smem, size = 0x4, offset = 0x4, fixed_abs, tag = 'smem constant byte address 0x4 - core index']
  #allocation1 [shape = 'u32[144,128]{1,0:T(1,128)}', space=vmem, size = 0x12000, scoped, tag = 'internal scratch']
  %s0 = inlined_call_operand.vmem [shape: f32[2,64], index: 0, kind: input, shape index: {}]
  %s1 = inlined_call_operand.vmem [shape: f32[1,64], index: 1, kind: input, shape index: {}]
  %s2 = inlined_call_operand.vmem [shape: f32[1,64], index: 2, kind: input, shape index: {}]
  %s3 = inlined_call_operand.vmem [shape: f32[64,10], index: 3, kind: input, shape index: {}]
  %s4 = inlined_call_operand.vmem [shape: f32[1,10], index: 4, kind: input, shape index: {}]
  %s5 = inlined_call_operand.hbm [shape: f32[2,10], index: 5, kind: output, shape index: {}]
  %s6 = sld [smem:[#allocation0]]
  $region30: #{vit_softmoe_forward.7} parent=0
    _
  %s8 = ssub.s32 1, %s6
  %s9 = scalar_select 0, %s8, %s6
  $region1: #{vit_softmoe_forward.7} parent=0
    #allocation2 [shape = 'u8[1024]{0}', space=vmem, size = 0x400, scoped, tag = 'output window, operand 0, single buffered']
    #allocation3 [shape = 's32[1]{0}', space=sflag, size = 0x4, scoped, tag = 'scoped memory for vit_softmoe_forward.7']
    %10 = vsyncpa [#allocation3], 0
    // Predicated region
    $region2: #{vit_softmoe_forward.7} parent=1 // pred_check
      _
    $region3: #{vit_softmoe_forward.7} parent=1 // pred_check_branch
      %12 = sbr.rel (0) target = $region5
    $region4: #{vit_softmoe_forward.7} parent=1 // pred_region
      _
    $region5: #{vit_softmoe_forward.7} parent=1 // pred_fallthru
      _
    // Predicated region
    $region6: #{vit_softmoe_forward.7} parent=1 // pred_check
      _
    $region7: #{vit_softmoe_forward.7} parent=1 // pred_check_branch
      %14 = sbr.rel (0) target = $region9
    $region8: #{vit_softmoe_forward.7} parent=1 // pred_region
      _
    $region9: #{vit_softmoe_forward.7} parent=1 // pred_fallthru
      _
    // Predicated region
    $region10: #{vit_softmoe_forward.7} parent=1 // pred_check
      _
    $region11: #{vit_softmoe_forward.7} parent=1 // pred_check_branch
      %16 = sbr.rel (0) target = $region13
    $region12: #{vit_softmoe_forward.7} parent=1 // pred_region
      _
    $region13: #{vit_softmoe_forward.7} parent=1 // pred_fallthru
      _
    // Predicated region
    $region14: #{vit_softmoe_forward.7} parent=1 // pred_check
      _
    $region15: #{vit_softmoe_forward.7} parent=1 // pred_check_branch
      %18 = sbr.rel (0) target = $region17
    $region16: #{vit_softmoe_forward.7} parent=1 // pred_region
      _
    $region17: #{vit_softmoe_forward.7} parent=1 // pred_fallthru
      _
    // Predicated region
    $region18: #{vit_softmoe_forward.7} parent=1 // pred_check
      _
    $region19: #{vit_softmoe_forward.7} parent=1 // pred_check_branch
      %20 = sbr.rel (0) target = $region21
    $region20: #{vit_softmoe_forward.7} parent=1 // pred_region
      _
    $region21: #{vit_softmoe_forward.7} parent=1 // pred_fallthru
      _
    %v21 = vld [vmem:[%s0] sm:$0x3]
    %v22 = vld [vmem:[%s1] sm:$0x1]
    %v23 = vld [vmem:[%s2] sm:$0x1]
    %vm24 = vcmask 517120
    %v25 = vsel %vm24, %v21, 0.0
    %26 = vadd.xlane.f32.xlu0 %v25
    %v27 = vpop.xlane.xlu0 %26
    %v28 = vrcp.pop 64.0
    %v29 = vmul.f32 %v27, %v28
    %v30 = vsub.f32 %v21, %v29
    %v31 = vmul.f32 %v30, %v30
    %v32 = vsel %vm24, %v31, 0.0
    %33 = vadd.xlane.f32.xlu0 %v32
    %v34 = vpop.xlane.xlu0 %33
    %v35 = vmul.f32 %v34, %v28
    %v36 = vadd.f32 %v35, 1e-06
    %v37 = vrsqrt.pop %v36
    %v38 = vmul.f32 %v30, %v37
    %v40 = vlaneseq
    %v41 = vshrl.u32 %v40, 7
    %v42 = vsub.s32 0, %v41
    %v43 = vrot.slane %v22, %v42
    %v45 = vmul.f32 %v38, %v43
    %v47 = vlaneseq
    %v48 = vshrl.u32 %v47, 7
    %v49 = vsub.s32 0, %v48
    %v50 = vrot.slane %v23, %v49
    %v52 = vadd.f32 %v45, %v50
    %v53 = vld [vmem:[%s3] sm:$0xff]
    %v54 = vld [vmem:[%s3 + $0x8] sm:$0xff]
    %v55 = vld [vmem:[%s3 + $0x10] sm:$0xff]
    %v56 = vld [vmem:[%s3 + $0x18] sm:$0xff]
    %v57 = vld [vmem:[%s3 + $0x20] sm:$0xff]
    %v58 = vld [vmem:[%s3 + $0x28] sm:$0xff]
    %v59 = vld [vmem:[%s3 + $0x30] sm:$0xff]
    %v60 = vld [vmem:[%s3 + $0x38] sm:$0xff]
    %v61 = vld [vmem:[%s4] sm:$0x1]
    %v63 = vlaneseq
    %v64 = vshrl.u32 %v63, 7
    %v65 = vsub.s32 0, %v64
    %v66 = vrot.slane %v61, %v65
    %vm68 = vcmask 523264
    %v70 = vsel %vm68, %v52, 0
    %72 = vmatprep.subr.mxu0 0.0
    %73 = vmatpush1.msra.mxu0 0.0
    %74 = vmatprep.subr.mxu0 0.0
    %75 = vmatpush1.msra.mxu0 0.0
    %76 = vmatprep.subr.mxu0 0.0
    %77 = vmatpush1.msra.mxu0 0.0
    %78 = vmatprep.subr.mxu0 0.0
    %79 = vmatpush1.msra.mxu0 0.0
    %80 = vmatprep.subr.mxu0 0.0
    %81 = vmatpush1.msra.mxu0 0.0
    %82 = vmatprep.subr.mxu0 0.0
    %83 = vmatpush1.msra.mxu0 0.0
    %84 = vmatprep.subr.mxu0 0.0
    %85 = vmatpush1.msra.mxu0 0.0
    %86 = vmatprep.subr.mxu0 0.0
    %87 = vmatpush1.msra.mxu0 0.0
    %88 = vmatprep.subr.mxu0 0.0
    %89 = vmatpush1.msra.mxu0 %v60
    %90 = vmatprep.subr.mxu0 0.0
    %91 = vmatpush1.msra.mxu0 %v59
    %92 = vmatprep.subr.mxu0 0.0
    %93 = vmatpush1.msra.mxu0 %v58
    %94 = vmatprep.subr.mxu0 0.0
    %95 = vmatpush1.msra.mxu0 %v57
    %96 = vmatprep.subr.mxu0 0.0
    %97 = vmatpush1.msra.mxu0 %v56
    %98 = vmatprep.subr.mxu0 0.0
    %99 = vmatpush1.msra.mxu0 %v55
    %100 = vmatprep.subr.mxu0 0.0
    %101 = vmatpush1.msra.mxu0 %v54
    %102 = vmatprep.subr.mxu0 0.0
    %103 = vmatpush1.msra.mxu0 %v53
    %104 = vmatprep.subr.mxu0 0.0
    %105 = vmatpush2.msra.mxu0 0.0
    %106 = vmatprep.subr.mxu0 0.0
    %107 = vmatpush2.msra.mxu0 0.0
    %108 = vmatprep.subr.mxu0 0.0
    %109 = vmatpush2.msra.mxu0 0.0
    %110 = vmatprep.subr.mxu0 0.0
    %111 = vmatpush2.msra.mxu0 0.0
    %112 = vmatprep.subr.mxu0 0.0
    %113 = vmatpush2.msra.mxu0 0.0
    %114 = vmatprep.subr.mxu0 0.0
    %115 = vmatpush2.msra.mxu0 0.0
    %116 = vmatprep.subr.mxu0 0.0
    %117 = vmatpush2.msra.mxu0 0.0
    %118 = vmatprep.subr.mxu0 0.0
    %119 = vmatpush2.msra.mxu0 0.0
    %120 = vmatprep.subr.mxu0 0.0
    %121 = vmatpush2.msra.mxu0 0.0
    %122 = vmatprep.subr.mxu0 0.0
    %123 = vmatpush2.msra.mxu0 0.0
    %124 = vmatprep.subr.mxu0 0.0
    %125 = vmatpush2.msra.mxu0 0.0
    %126 = vmatprep.subr.mxu0 0.0
    %127 = vmatpush2.msra.mxu0 0.0
    %128 = vmatprep.subr.mxu0 0.0
    %129 = vmatpush2.msra.mxu0 0.0
    %130 = vmatprep.subr.mxu0 0.0
    %131 = vmatpush2.msra.mxu0 0.0
    %132 = vmatprep.subr.mxu0 0.0
    %133 = vmatpush2.msra.mxu0 0.0
    %134 = vmatprep.subr.mxu0 0.0
    %135 = vmatpush2.msra.mxu0 0.0
    %136 = vmatprep.mubr.f32.mxu0 0.0
    %137 = vmatmul.mubr.f32.gmra.mxu0 %v70
    %v138 = vpop.f32.mrf.mxu0
    %v139 = vadd.f32 %v66, %v138
    %v140 = vpop.f32.mrf.mxu0
    %141 = vdwg.mxu0
    %vm142 = vcmask 74752
    %143 = vst.msk [vmem:[#allocation2] sm:$0x3] %vm142, %v139
    // Predicated region
    $region22: #{vit_softmoe_forward.7} parent=1 // pred_check
      _
    $region23: #{vit_softmoe_forward.7} parent=1 // pred_check_branch
      %145 = sbr.rel (0) target = $region25
    $region24: #{vit_softmoe_forward.7} parent=1 // pred_region
      %s147 = ssub.s32 32, 32
      %148 = vsyncadd [#allocation3], %s147
      %s150 = sshll.u32 [#allocation2], 4
      %s151 = int_to_ptr.vmem [resolvable:$true] %s150
      %153 = dma.vmem_to_hbm [thread:$0]  %s151, 32, %s5, [#allocation3]
    $region25: #{vit_softmoe_forward.7} parent=1 // pred_fallthru
      _
    // Predicated region
    $region26: #{vit_softmoe_forward.7} parent=1 // pred_check
      _
    $region27: #{vit_softmoe_forward.7} parent=1 // pred_check_branch
      %155 = sbr.rel (0) target = $region29
    $region28: #{vit_softmoe_forward.7} parent=1 // pred_region
      %156 = dma.done [#allocation3], 32
    $region29: #{vit_softmoe_forward.7} parent=1 // pred_fallthru
      _
    %157 = vsyncpa [#allocation3], 1

// kernel: vit_softmoe_forward.4
$region0: #{vit_softmoe_forward.4}
  #allocation0 [shape = 'u32[]', space=smem, size = 0x4, offset = 0x4, fixed_abs, tag = 'smem constant byte address 0x4 - core index']
  #allocation1 [shape = 'u32[144,128]{1,0:T(1,128)}', space=vmem, size = 0x12000, scoped, tag = 'internal scratch']
  %s0 = inlined_call_operand.vmem [shape: f32[2,5,768], index: 0, kind: input, shape index: {}]
  %s1 = inlined_call_operand.vmem [shape: f32[768,64], index: 1, kind: input, shape index: {}]
  %s2 = inlined_call_operand.vmem [shape: f32[1,64], index: 2, kind: input, shape index: {}]
  %s3 = inlined_call_operand.vmem [shape: f32[5,64], index: 3, kind: input, shape index: {}]
  %s4 = inlined_call_operand.vmem [shape: f32[64,260], index: 4, kind: input, shape index: {}]
  %s5 = inlined_call_operand.vmem [shape: f32[1,260], index: 5, kind: input, shape index: {}]
  %s6 = inlined_call_operand.vmem [shape: f32[1,64], index: 6, kind: input, shape index: {}]
  %s7 = inlined_call_operand.vmem [shape: f32[1,64], index: 7, kind: input, shape index: {}]
  %s8 = inlined_call_operand.vmem [shape: f32[2,5,64], index: 8, kind: output, shape index: {}]
  %s9 = sld [smem:[#allocation0]]
  $region65: #{vit_softmoe_forward.4} parent=0
    _
  %s11 = ssub.s32 1, %s9
  %s12 = scalar_select 0, %s11, %s9
  loop: start=0, step=1, limit=4
  $region2: #{vit_softmoe_forward.4} parent=0 // loop_pre_header
    _
  $region3: #{vit_softmoe_forward.4} parent=0 // loop_header
    %s14 = sphi 0, %s18
    %p15 = scmp.ge.s32.totalorder %s14, 4
    %s24 = sphi 0, %s26
    %s27 = sphi 0, %s24
    %s28 = sphi 0, %s27
    %s44 = sphi 0, %s28
    %s48 = sphi 0, %s48
    %s50 = sphi 0, %s48
    %s51 = sphi 0, %s50
    %s65 = sphi 0, %s51
    %s69 = sphi 0, %s69
    %s71 = sphi 0, %s69
    %s72 = sphi 0, %s71
    %s86 = sphi 0, %s72
    %s90 = sphi 0, %s90
    %s92 = sphi 0, %s90
    %s93 = sphi 0, %s92
    %s107 = sphi 0, %s93
    %s111 = sphi 0, %s111
    %s113 = sphi 0, %s111
    %s114 = sphi 0, %s113
    %s128 = sphi 0, %s114
    %s132 = sphi 0, %s132
    %s134 = sphi 0, %s132
    %s135 = sphi 0, %s134
    %s149 = sphi 0, %s135
    %s153 = sphi 0, %s153
    %s155 = sphi 0, %s153
    %s156 = sphi 0, %s155
    %s170 = sphi 0, %s156
    %s174 = sphi 0, %s174
    %s176 = sphi 0, %s174
    %s177 = sphi 0, %s176
    %s191 = sphi 0, %s177
    %s197 = sphi 0, %s199
    %s200 = sphi 0, %s197
    %s201 = sphi 0, %s200
    %s217 = sphi 0, %s201
  $region4: #{vit_softmoe_forward.4} parent=0 // loop_header_branch
    %17 = sbr.rel (%p15) target = $region8
  $region5: #{vit_softmoe_forward.4} parent=0 // loop_body
    %s19 = ssub.s32 %s14, 1
    %s20 = ssub.s32 %s14, 2
    %s21 = sadd.s32 %s14, 1
    %s22 = ssub.s32 %s14, %s21
    %p23 = scmp.eq.s32.totalorder %s22, 0
    %s25 = sadd.s32 %s24, 1
    %s26 = scalar_select %p23, %s24, %s25
    %p29 = pneg %p23
    %p30 = scmp.eq.s32.totalorder %s14, 1
    %p31 = por %p29, %p30
    %p32 = scmp.ne.s32.totalorder %s24, %s27
    %p33 = scmp.eq.s32.totalorder %s14, 0
    %p34 = por %p32, %p33
    %p35 = scmp.ne.s32.totalorder %s24, %s27
    %p36 = scmp.eq.s32.totalorder %s19, 1
    %p37 = por %p35, %p36
    %p38 = scmp.ne.s32.totalorder %s27, %s28
    %p39 = scmp.eq.s32.totalorder %s19, 0
    %p40 = por %p38, %p39
    %p41 = scmp.ne.s32.totalorder %s27, %s28
    %p42 = scmp.eq.s32.totalorder %s20, 1
    %p43 = por %p41, %p42
    %p45 = scmp.ne.s32.totalorder %s28, %s44
    %p46 = scmp.eq.s32.totalorder %s20, 0
    %p47 = por %p45, %p46
    %s49 = sadd.s32 %s48, 1
    %p52 = scmp.eq.s32.totalorder %s14, 1
    %p53 = scmp.ne.s32.totalorder %s48, %s50
    %p54 = scmp.eq.s32.totalorder %s14, 0
    %p55 = por %p53, %p54
    %p56 = scmp.ne.s32.totalorder %s48, %s50
    %p57 = scmp.eq.s32.totalorder %s19, 1
    %p58 = por %p56, %p57
    %p59 = scmp.ne.s32.totalorder %s50, %s51
    %p60 = scmp.eq.s32.totalorder %s19, 0
    %p61 = por %p59, %p60
    %p62 = scmp.ne.s32.totalorder %s50, %s51
    %p63 = scmp.eq.s32.totalorder %s20, 1
    %p64 = por %p62, %p63
    %p66 = scmp.ne.s32.totalorder %s51, %s65
    %p67 = scmp.eq.s32.totalorder %s20, 0
    %p68 = por %p66, %p67
    %s70 = sadd.s32 %s69, 1
    %p73 = scmp.eq.s32.totalorder %s14, 1
    %p74 = scmp.ne.s32.totalorder %s69, %s71
    %p75 = scmp.eq.s32.totalorder %s14, 0
    %p76 = por %p74, %p75
    %p77 = scmp.ne.s32.totalorder %s69, %s71
    %p78 = scmp.eq.s32.totalorder %s19, 1
    %p79 = por %p77, %p78
    %p80 = scmp.ne.s32.totalorder %s71, %s72
    %p81 = scmp.eq.s32.totalorder %s19, 0
    %p82 = por %p80, %p81
    %p83 = scmp.ne.s32.totalorder %s71, %s72
    %p84 = scmp.eq.s32.totalorder %s20, 1
    %p85 = por %p83, %p84
    %p87 = scmp.ne.s32.totalorder %s72, %s86
    %p88 = scmp.eq.s32.totalorder %s20, 0
    %p89 = por %p87, %p88
    %s91 = sadd.s32 %s90, 1
    %p94 = scmp.eq.s32.totalorder %s14, 1
    %p95 = scmp.ne.s32.totalorder %s90, %s92
    %p96 = scmp.eq.s32.totalorder %s14, 0
    %p97 = por %p95, %p96
    %p98 = scmp.ne.s32.totalorder %s90, %s92
    %p99 = scmp.eq.s32.totalorder %s19, 1
    %p100 = por %p98, %p99
    %p101 = scmp.ne.s32.totalorder %s92, %s93
    %p102 = scmp.eq.s32.totalorder %s19, 0
    %p103 = por %p101, %p102
    %p104 = scmp.ne.s32.totalorder %s92, %s93
    %p105 = scmp.eq.s32.totalorder %s20, 1
    %p106 = por %p104, %p105
    %p108 = scmp.ne.s32.totalorder %s93, %s107
    %p109 = scmp.eq.s32.totalorder %s20, 0
    %p110 = por %p108, %p109
    %s112 = sadd.s32 %s111, 1
    %p115 = scmp.eq.s32.totalorder %s14, 1
    %p116 = scmp.ne.s32.totalorder %s111, %s113
    %p117 = scmp.eq.s32.totalorder %s14, 0
    %p118 = por %p116, %p117
    %p119 = scmp.ne.s32.totalorder %s111, %s113
    %p120 = scmp.eq.s32.totalorder %s19, 1
    %p121 = por %p119, %p120
    %p122 = scmp.ne.s32.totalorder %s113, %s114
    %p123 = scmp.eq.s32.totalorder %s19, 0
    %p124 = por %p122, %p123
    %p125 = scmp.ne.s32.totalorder %s113, %s114
    %p126 = scmp.eq.s32.totalorder %s20, 1
    %p127 = por %p125, %p126
    %p129 = scmp.ne.s32.totalorder %s114, %s128
    %p130 = scmp.eq.s32.totalorder %s20, 0
    %p131 = por %p129, %p130
    %s133 = sadd.s32 %s132, 1
    %p136 = scmp.eq.s32.totalorder %s14, 1
    %p137 = scmp.ne.s32.totalorder %s132, %s134
    %p138 = scmp.eq.s32.totalorder %s14, 0
    %p139 = por %p137, %p138
    %p140 = scmp.ne.s32.totalorder %s132, %s134
    %p141 = scmp.eq.s32.totalorder %s19, 1
    %p142 = por %p140, %p141
    %p143 = scmp.ne.s32.totalorder %s134, %s135
    %p144 = scmp.eq.s32.totalorder %s19, 0
    %p145 = por %p143, %p144
    %p146 = scmp.ne.s32.totalorder %s134, %s135
    %p147 = scmp.eq.s32.totalorder %s20, 1
    %p148 = por %p146, %p147
    %p150 = scmp.ne.s32.totalorder %s135, %s149
    %p151 = scmp.eq.s32.totalorder %s20, 0
    %p152 = por %p150, %p151
    %s154 = sadd.s32 %s153, 1
    %p157 = scmp.eq.s32.totalorder %s14, 1
    %p158 = scmp.ne.s32.totalorder %s153, %s155
    %p159 = scmp.eq.s32.totalorder %s14, 0
    %p160 = por %p158, %p159
    %p161 = scmp.ne.s32.totalorder %s153, %s155
    %p162 = scmp.eq.s32.totalorder %s19, 1
    %p163 = por %p161, %p162
    %p164 = scmp.ne.s32.totalorder %s155, %s156
    %p165 = scmp.eq.s32.totalorder %s19, 0
    %p166 = por %p164, %p165
    %p167 = scmp.ne.s32.totalorder %s155, %s156
    %p168 = scmp.eq.s32.totalorder %s20, 1
    %p169 = por %p167, %p168
    %p171 = scmp.ne.s32.totalorder %s156, %s170
    %p172 = scmp.eq.s32.totalorder %s20, 0
    %p173 = por %p171, %p172
    %s175 = sadd.s32 %s174, 1
    %p178 = scmp.eq.s32.totalorder %s14, 1
    %p179 = scmp.ne.s32.totalorder %s174, %s176
    %p180 = scmp.eq.s32.totalorder %s14, 0
    %p181 = por %p179, %p180
    %p182 = scmp.ne.s32.totalorder %s174, %s176
    %p183 = scmp.eq.s32.totalorder %s19, 1
    %p184 = por %p182, %p183
    %p185 = scmp.ne.s32.totalorder %s176, %s177
    %p186 = scmp.eq.s32.totalorder %s19, 0
    %p187 = por %p185, %p186
    %p188 = scmp.ne.s32.totalorder %s176, %s177
    %p189 = scmp.eq.s32.totalorder %s20, 1
    %p190 = por %p188, %p189
    %p192 = scmp.ne.s32.totalorder %s177, %s191
    %p193 = scmp.eq.s32.totalorder %s20, 0
    %p194 = por %p192, %p193
    %s195 = ssub.s32 %s14, %s21
    %p196 = scmp.eq.s32.totalorder %s195, 0
    %s198 = sadd.s32 %s197, 1
    %s199 = scalar_select %p196, %s197, %s198
    %p202 = pneg %p196
    %p203 = scmp.eq.s32.totalorder %s14, 1
    %p204 = por %p202, %p203
    %p205 = scmp.ne.s32.totalorder %s197, %s200
    %p206 = scmp.eq.s32.totalorder %s14, 0
    %p207 = por %p205, %p206
    %p208 = scmp.ne.s32.totalorder %s197, %s200
    %p209 = scmp.eq.s32.totalorder %s19, 1
    %p210 = por %p208, %p209
    %p211 = scmp.ne.s32.totalorder %s200, %s201
    %p212 = scmp.eq.s32.totalorder %s19, 0
    %p213 = por %p211, %p212
    %p214 = scmp.ne.s32.totalorder %s200, %s201
    %p215 = scmp.eq.s32.totalorder %s20, 1
    %p216 = por %p214, %p215
    %p218 = scmp.ne.s32.totalorder %s201, %s217
    %p219 = scmp.eq.s32.totalorder %s20, 0
    %p220 = por %p218, %p219
    %p221 = scmp.le.s32.totalorder 1, %s14
    %p222 = scmp.lt.s32.totalorder %s14, 3
    %p223 = pnand %p221, %p222
    %p224 = pneg %p223
    // Predicated region
    $region9: #{vit_softmoe_forward.4} parent=5 // pred_check
      _
    $region10: #{vit_softmoe_forward.4} parent=5 // pred_check_branch
      %226 = sbr.rel (%p223) target = $region12
    $region11: #{vit_softmoe_forward.4} parent=5 // pred_region
      %s227 = ssub.s32 %s14, 1
      // Predicated region
      $region13: #{vit_softmoe_forward.4} parent=11 // pred_check
        %p228 = pneg %p61
      $region14: #{vit_softmoe_forward.4} parent=11 // pred_check_branch
        %230 = sbr.rel (%p228) target = $region16
      $region15: #{vit_softmoe_forward.4} parent=11 // pred_region
        _
      $region16: #{vit_softmoe_forward.4} parent=11 // pred_fallthru
        _
      // Predicated region
      $region17: #{vit_softmoe_forward.4} parent=11 // pred_check
        %p231 = pneg %p82
      $region18: #{vit_softmoe_forward.4} parent=11 // pred_check_branch
        %233 = sbr.rel (%p231) target = $region20
      $region19: #{vit_softmoe_forward.4} parent=11 // pred_region
        _
      $region20: #{vit_softmoe_forward.4} parent=11 // pred_fallthru
        _
      // Predicated region
      $region21: #{vit_softmoe_forward.4} parent=11 // pred_check
        %p234 = pneg %p103
      $region22: #{vit_softmoe_forward.4} parent=11 // pred_check_branch
        %236 = sbr.rel (%p234) target = $region24
      $region23: #{vit_softmoe_forward.4} parent=11 // pred_region
        _
      $region24: #{vit_softmoe_forward.4} parent=11 // pred_fallthru
        _
      // Predicated region
      $region25: #{vit_softmoe_forward.4} parent=11 // pred_check
        %p237 = pneg %p124
      $region26: #{vit_softmoe_forward.4} parent=11 // pred_check_branch
        %239 = sbr.rel (%p237) target = $region28
      $region27: #{vit_softmoe_forward.4} parent=11 // pred_region
        _
      $region28: #{vit_softmoe_forward.4} parent=11 // pred_fallthru
        _
      // Predicated region
      $region29: #{vit_softmoe_forward.4} parent=11 // pred_check
        %p240 = pneg %p145
      $region30: #{vit_softmoe_forward.4} parent=11 // pred_check_branch
        %242 = sbr.rel (%p240) target = $region32
      $region31: #{vit_softmoe_forward.4} parent=11 // pred_region
        _
      $region32: #{vit_softmoe_forward.4} parent=11 // pred_fallthru
        _
      // Predicated region
      $region33: #{vit_softmoe_forward.4} parent=11 // pred_check
        %p243 = pneg %p166
      $region34: #{vit_softmoe_forward.4} parent=11 // pred_check_branch
        %245 = sbr.rel (%p243) target = $region36
      $region35: #{vit_softmoe_forward.4} parent=11 // pred_region
        _
      $region36: #{vit_softmoe_forward.4} parent=11 // pred_fallthru
        _
      // Predicated region
      $region37: #{vit_softmoe_forward.4} parent=11 // pred_check
        %p246 = pneg %p187
      $region38: #{vit_softmoe_forward.4} parent=11 // pred_check_branch
        %248 = sbr.rel (%p246) target = $region40
      $region39: #{vit_softmoe_forward.4} parent=11 // pred_region
        _
      $region40: #{vit_softmoe_forward.4} parent=11 // pred_fallthru
        _
    $region12: #{vit_softmoe_forward.4} parent=5 // pred_fallthru
      _
    %p249 = scmp.lt.s32.totalorder %s14, 2
    // Predicated region
    $region41: #{vit_softmoe_forward.4} parent=5 // pred_check
      %p250 = pneg %p249
    $region42: #{vit_softmoe_forward.4} parent=5 // pred_check_branch
      %252 = sbr.rel (%p250) target = $region44
    $region43: #{vit_softmoe_forward.4} parent=5 // pred_region
      // Predicated region
      $region45: #{vit_softmoe_forward.4} parent=43 // pred_check
        %p253 = pneg %p34
      $region46: #{vit_softmoe_forward.4} parent=43 // pred_check_branch
        %255 = sbr.rel (%p253) target = $region48
      $region47: #{vit_softmoe_forward.4} parent=43 // pred_region
        %p256 = scmp.lt.s32.totalorder %s14, 1
        %s257 = scalar_select %p256, %s14, 1
        %s258 = smul.addr %s257, 6
        %s259 = smul.addr %s258, 8
        %s260 = scalar_lea.vmem %s0, %s259
      $region48: #{vit_softmoe_forward.4} parent=43 // pred_fallthru
        _
    $region44: #{vit_softmoe_forward.4} parent=5 // pred_fallthru
      _
    %p261 = scmp.le.s32.totalorder 1, %s14
    %p262 = scmp.lt.s32.totalorder %s14, 3
    %p263 = pnand %p261, %p262
    %p264 = pneg %p263
    // Predicated region
    $region49: #{vit_softmoe_forward.4} parent=5 // pred_check
      _
    $region50: #{vit_softmoe_forward.4} parent=5 // pred_check_branch
      %266 = sbr.rel (%p263) target = $region52
    $region51: #{vit_softmoe_forward.4} parent=5 // pred_region
      %s267 = ssub.s32 %s14, 1
      %p268 = scmp.lt.s32.totalorder %s19, 1
      %s269 = scalar_select %p268, %s19, 1
      %s270 = smul.addr %s269, 6
      %s271 = smul.addr %s270, 8
      %s272 = scalar_lea.vmem %s0, %s271
      %p273 = pneg %p40
      %p274 = pneg %p37
      %p275 = pneg %p61
      %p276 = pneg %p58
      %p277 = pneg %p82
      %p278 = pneg %p79
      %p279 = pneg %p103
      %p280 = pneg %p100
      %p281 = pneg %p124
      %p282 = pneg %p121
      %p283 = pneg %p145
      %p284 = pneg %p142
      %p285 = pneg %p166
      %p286 = pneg %p163
      %p287 = pneg %p187
      %p288 = pneg %p184
      %p289 = pneg %p213
      %p290 = pneg %p210
      %p291 = scmp.lt.s32.totalorder %s19, 1
      %s292 = scalar_select %p291, %s19, 1
      %s293 = smul.addr %s292, 8
      %s294 = scalar_lea.vmem %s8, %s293
      %p295 = scmp.lt.s32.totalorder %s19, 1
      %s296 = scalar_select %p295, %s19, 1
      %s297 = smul.addr %s296, 6
      %s298 = smul.addr %s297, 8
      %s299 = scalar_lea.vmem %s0, %s298
      %p300 = scmp.lt.s32.totalorder %s19, 1
      %s301 = scalar_select %p300, %s19, 1
      %s302 = smul.addr %s301, 8
      %s303 = scalar_lea.vmem %s8, %s302
      %v304 = vld [vmem:[%s299] sm:$0x1f]
      %v305 = vld [vmem:[%s299 + $0x8] sm:$0x1f]
      %v306 = vld [vmem:[%s299 + $0x10] sm:$0x1f]
      %v307 = vld [vmem:[%s299 + $0x18] sm:$0x1f]
      %v308 = vld [vmem:[%s299 + $0x20] sm:$0x1f]
      %v309 = vld [vmem:[%s299 + $0x28] sm:$0x1f]
      %v310 = vld [vmem:[%s1] sm:$0xff]
      %v311 = vld [vmem:[%s1 + $0x8] sm:$0xff]
      %v312 = vld [vmem:[%s1 + $0x10] sm:$0xff]
      %v313 = vld [vmem:[%s1 + $0x18] sm:$0xff]
      %v314 = vld [vmem:[%s1 + $0x20] sm:$0xff]
      %v315 = vld [vmem:[%s1 + $0x28] sm:$0xff]
      %v316 = vld [vmem:[%s1 + $0x30] sm:$0xff]
      %v317 = vld [vmem:[%s1 + $0x38] sm:$0xff]
      %v318 = vld [vmem:[%s1 + $0x40] sm:$0xff]
      %v319 = vld [vmem:[%s1 + $0x48] sm:$0xff]
      %v320 = vld [vmem:[%s1 + $0x50] sm:$0xff]
      %v321 = vld [vmem:[%s1 + $0x58] sm:$0xff]
      %v322 = vld [vmem:[%s1 + $0x60] sm:$0xff]
      %v323 = vld [vmem:[%s1 + $0x68] sm:$0xff]
      %v324 = vld [vmem:[%s1 + $0x70] sm:$0xff]
      %v325 = vld [vmem:[%s1 + $0x78] sm:$0xff]
      %v326 = vld [vmem:[%s1 + $0x80] sm:$0xff]
      %v327 = vld [vmem:[%s1 + $0x88] sm:$0xff]
      %v328 = vld [vmem:[%s1 + $0x90] sm:$0xff]
      %v329 = vld [vmem:[%s1 + $0x98] sm:$0xff]
      %v330 = vld [vmem:[%s1 + $0xa0] sm:$0xff]
      %v331 = vld [vmem:[%s1 + $0xa8] sm:$0xff]
      %v332 = vld [vmem:[%s1 + $0xb0] sm:$0xff]
      %v333 = vld [vmem:[%s1 + $0xb8] sm:$0xff]
      %v334 = vld [vmem:[%s1 + $0xc0] sm:$0xff]
      %v335 = vld [vmem:[%s1 + $0xc8] sm:$0xff]
      %v336 = vld [vmem:[%s1 + $0xd0] sm:$0xff]
      %v337 = vld [vmem:[%s1 + $0xd8] sm:$0xff]
      %v338 = vld [vmem:[%s1 + $0xe0] sm:$0xff]
      %v339 = vld [vmem:[%s1 + $0xe8] sm:$0xff]
      %v340 = vld [vmem:[%s1 + $0xf0] sm:$0xff]
      %v341 = vld [vmem:[%s1 + $0xf8] sm:$0xff]
      %v342 = vld [vmem:[%s1 + $0x100] sm:$0xff]
      %v343 = vld [vmem:[%s1 + $0x108] sm:$0xff]
      %v344 = vld [vmem:[%s1 + $0x110] sm:$0xff]
      %v345 = vld [vmem:[%s1 + $0x118] sm:$0xff]
      %v346 = vld [vmem:[%s1 + $0x120] sm:$0xff]
      %v347 = vld [vmem:[%s1 + $0x128] sm:$0xff]
      %v348 = vld [vmem:[%s1 + $0x130] sm:$0xff]
      %v349 = vld [vmem:[%s1 + $0x138] sm:$0xff]
      %v350 = vld [vmem:[%s1 + $0x140] sm:$0xff]
      %v351 = vld [vmem:[%s1 + $0x148] sm:$0xff]
      %v352 = vld [vmem:[%s1 + $0x150] sm:$0xff]
      %v353 = vld [vmem:[%s1 + $0x158] sm:$0xff]
      %v354 = vld [vmem:[%s1 + $0x160] sm:$0xff]
      %v355 = vld [vmem:[%s1 + $0x168] sm:$0xff]
      %v356 = vld [vmem:[%s1 + $0x170] sm:$0xff]
      %v357 = vld [vmem:[%s1 + $0x178] sm:$0xff]
      %v358 = vld [vmem:[%s1 + $0x180] sm:$0xff]
      %v359 = vld [vmem:[%s1 + $0x188] sm:$0xff]
      %v360 = vld [vmem:[%s1 + $0x190] sm:$0xff]
      %v361 = vld [vmem:[%s1 + $0x198] sm:$0xff]
      %v362 = vld [vmem:[%s1 + $0x1a0] sm:$0xff]
      %v363 = vld [vmem:[%s1 + $0x1a8] sm:$0xff]
      %v364 = vld [vmem:[%s1 + $0x1b0] sm:$0xff]
      %v365 = vld [vmem:[%s1 + $0x1b8] sm:$0xff]
      %v366 = vld [vmem:[%s1 + $0x1c0] sm:$0xff]
      %v367 = vld [vmem:[%s1 + $0x1c8] sm:$0xff]
      %v368 = vld [vmem:[%s1 + $0x1d0] sm:$0xff]
      %v369 = vld [vmem:[%s1 + $0x1d8] sm:$0xff]
      %v370 = vld [vmem:[%s1 + $0x1e0] sm:$0xff]
      %v371 = vld [vmem:[%s1 + $0x1e8] sm:$0xff]
      %v372 = vld [vmem:[%s1 + $0x1f0] sm:$0xff]
      %v373 = vld [vmem:[%s1 + $0x1f8] sm:$0xff]
      %v374 = vld [vmem:[%s1 + $0x200] sm:$0xff]
      %v375 = vld [vmem:[%s1 + $0x208] sm:$0xff]
      %v376 = vld [vmem:[%s1 + $0x210] sm:$0xff]
      %v377 = vld [vmem:[%s1 + $0x218] sm:$0xff]
      %v378 = vld [vmem:[%s1 + $0x220] sm:$0xff]
      %v379 = vld [vmem:[%s1 + $0x228] sm:$0xff]
      %v380 = vld [vmem:[%s1 + $0x230] sm:$0xff]
      %v381 = vld [vmem:[%s1 + $0x238] sm:$0xff]
      %v382 = vld [vmem:[%s1 + $0x240] sm:$0xff]
      %v383 = vld [vmem:[%s1 + $0x248] sm:$0xff]
      %v384 = vld [vmem:[%s1 + $0x250] sm:$0xff]
      %v385 = vld [vmem:[%s1 + $0x258] sm:$0xff]
      %v386 = vld [vmem:[%s1 + $0x260] sm:$0xff]
      %v387 = vld [vmem:[%s1 + $0x268] sm:$0xff]
      %v388 = vld [vmem:[%s1 + $0x270] sm:$0xff]
      %v389 = vld [vmem:[%s1 + $0x278] sm:$0xff]
      %v390 = vld [vmem:[%s1 + $0x280] sm:$0xff]
      %v391 = vld [vmem:[%s1 + $0x288] sm:$0xff]
      %v392 = vld [vmem:[%s1 + $0x290] sm:$0xff]
      %v393 = vld [vmem:[%s1 + $0x298] sm:$0xff]
      %v394 = vld [vmem:[%s1 + $0x2a0] sm:$0xff]
      %v395 = vld [vmem:[%s1 + $0x2a8] sm:$0xff]
      %v396 = vld [vmem:[%s1 + $0x2b0] sm:$0xff]
      %v397 = vld [vmem:[%s1 + $0x2b8] sm:$0xff]
      %v398 = vld [vmem:[%s1 + $0x2c0] sm:$0xff]
      %v399 = vld [vmem:[%s1 + $0x2c8] sm:$0xff]
      %v400 = vld [vmem:[%s1 + $0x2d0] sm:$0xff]
      %v401 = vld [vmem:[%s1 + $0x2d8] sm:$0xff]
      %v402 = vld [vmem:[%s1 + $0x2e0] sm:$0xff]
      %v403 = vld [vmem:[%s1 + $0x2e8] sm:$0xff]
      %v404 = vld [vmem:[%s1 + $0x2f0] sm:$0xff]
      %v405 = vld [vmem:[%s1 + $0x2f8] sm:$0xff]
      %v406 = vld [vmem:[%s2] sm:$0x1]
      %v407 = vld [vmem:[%s3] sm:$0x1f]
      %v409 = vlaneseq
      %v410 = vshrl.u32 %v409, 7
      %v411 = vsub.s32 0, %v410
      %v412 = vrot.slane %v406, %v411
      %414 = vmatprep.subr.mxu0 0.0
      %415 = vmatpush1.msra.mxu0 %v325
      %416 = vmatprep.subr.mxu0 0.0
      %417 = vmatpush1.msra.mxu0 %v324
      %418 = vmatprep.subr.mxu0 0.0
      %419 = vmatpush1.msra.mxu0 %v323
      %420 = vmatprep.subr.mxu0 0.0
      %421 = vmatpush1.msra.mxu0 %v322
      %422 = vmatprep.subr.mxu0 0.0
      %423 = vmatpush1.msra.mxu0 %v321
      %424 = vmatprep.subr.mxu0 0.0
      %425 = vmatpush1.msra.mxu0 %v320
      %426 = vmatprep.subr.mxu0 0.0
      %427 = vmatpush1.msra.mxu0 %v319
      %428 = vmatprep.subr.mxu0 0.0
      %429 = vmatpush1.msra.mxu0 %v318
      %430 = vmatprep.subr.mxu0 0.0
      %431 = vmatpush1.msra.mxu0 %v317
      %432 = vmatprep.subr.mxu0 0.0
      %433 = vmatpush1.msra.mxu0 %v316
      %434 = vmatprep.subr.mxu0 0.0
      %435 = vmatpush1.msra.mxu0 %v315
      %436 = vmatprep.subr.mxu0 0.0
      %437 = vmatpush1.msra.mxu0 %v314
      %438 = vmatprep.subr.mxu0 0.0
      %439 = vmatpush1.msra.mxu0 %v313
      %440 = vmatprep.subr.mxu0 0.0
      %441 = vmatpush1.msra.mxu0 %v312
      %442 = vmatprep.subr.mxu0 0.0
      %443 = vmatpush1.msra.mxu0 %v311
      %444 = vmatprep.subr.mxu0 0.0
      %445 = vmatpush1.msra.mxu0 %v310
      %446 = vmatprep.subr.mxu0 0.0
      %447 = vmatpush2.msra.mxu0 %v341
      %448 = vmatprep.subr.mxu0 0.0
      %449 = vmatpush2.msra.mxu0 %v340
      %450 = vmatprep.subr.mxu0 0.0
      %451 = vmatpush2.msra.mxu0 %v339
      %452 = vmatprep.subr.mxu0 0.0
      %453 = vmatpush2.msra.mxu0 %v338
      %454 = vmatprep.subr.mxu0 0.0
      %455 = vmatpush2.msra.mxu0 %v337
      %456 = vmatprep.subr.mxu0 0.0
      %457 = vmatpush2.msra.mxu0 %v336
      %458 = vmatprep.subr.mxu0 0.0
      %459 = vmatpush2.msra.mxu0 %v335
      %460 = vmatprep.subr.mxu0 0.0
      %461 = vmatpush2.msra.mxu0 %v334
      %462 = vmatprep.subr.mxu0 0.0
      %463 = vmatpush2.msra.mxu0 %v333
      %464 = vmatprep.subr.mxu0 0.0
      %465 = vmatpush2.msra.mxu0 %v332
      %466 = vmatprep.subr.mxu0 0.0
      %467 = vmatpush2.msra.mxu0 %v331
      %468 = vmatprep.subr.mxu0 0.0
      %469 = vmatpush2.msra.mxu0 %v330
      %470 = vmatprep.subr.mxu0 0.0
      %471 = vmatpush2.msra.mxu0 %v329
      %472 = vmatprep.subr.mxu0 0.0
      %473 = vmatpush2.msra.mxu0 %v328
      %474 = vmatprep.subr.mxu0 0.0
      %475 = vmatpush2.msra.mxu0 %v327
      %476 = vmatprep.subr.mxu0 0.0
      %477 = vmatpush2.msra.mxu0 %v326
      %478 = vmatprep.mubr.f32.mxu0 %v305
      %479 = vmatmul.mubr.f32.gmra.mxu0 %v304
      %v480 = vpop.f32.mrf.mxu0
      %v481 = vadd.f32 %v412, %v480
      %v482 = vpop.f32.mrf.mxu0
      %483 = vdwg.mxu0
      %484 = vmatprep.subr.mxu0 0.0
      %485 = vmatpush1.msra.mxu0 %v357
      %486 = vmatprep.subr.mxu0 0.0
      %487 = vmatpush1.msra.mxu0 %v356
      %488 = vmatprep.subr.mxu0 0.0
      %489 = vmatpush1.msra.mxu0 %v355
      %490 = vmatprep.subr.mxu0 0.0
      %491 = vmatpush1.msra.mxu0 %v354
      %492 = vmatprep.subr.mxu0 0.0
      %493 = vmatpush1.msra.mxu0 %v353
      %494 = vmatprep.subr.mxu0 0.0
      %495 = vmatpush1.msra.mxu0 %v352
      %496 = vmatprep.subr.mxu0 0.0
      %497 = vmatpush1.msra.mxu0 %v351
      %498 = vmatprep.subr.mxu0 0.0
      %499 = vmatpush1.msra.mxu0 %v350
      %500 = vmatprep.subr.mxu0 0.0
      %501 = vmatpush1.msra.mxu0 %v349
      %502 = vmatprep.subr.mxu0 0.0
      %503 = vmatpush1.msra.mxu0 %v348
      %504 = vmatprep.subr.mxu0 0.0
      %505 = vmatpush1.msra.mxu0 %v347
      %506 = vmatprep.subr.mxu0 0.0
      %507 = vmatpush1.msra.mxu0 %v346
      %508 = vmatprep.subr.mxu0 0.0
      %509 = vmatpush1.msra.mxu0 %v345
      %510 = vmatprep.subr.mxu0 0.0
      %511 = vmatpush1.msra.mxu0 %v344
      %512 = vmatprep.subr.mxu0 0.0
      %513 = vmatpush1.msra.mxu0 %v343
      %514 = vmatprep.subr.mxu0 0.0
      %515 = vmatpush1.msra.mxu0 %v342
      %516 = vmatprep.subr.mxu0 0.0
      %517 = vmatpush2.msra.mxu0 %v373
      %518 = vmatprep.subr.mxu0 0.0
      %519 = vmatpush2.msra.mxu0 %v372
      %520 = vmatprep.subr.mxu0 0.0
      %521 = vmatpush2.msra.mxu0 %v371
      %522 = vmatprep.subr.mxu0 0.0
      %523 = vmatpush2.msra.mxu0 %v370
      %524 = vmatprep.subr.mxu0 0.0
      %525 = vmatpush2.msra.mxu0 %v369
      %526 = vmatprep.subr.mxu0 0.0
      %527 = vmatpush2.msra.mxu0 %v368
      %528 = vmatprep.subr.mxu0 0.0
      %529 = vmatpush2.msra.mxu0 %v367
      %530 = vmatprep.subr.mxu0 0.0
      %531 = vmatpush2.msra.mxu0 %v366
      %532 = vmatprep.subr.mxu0 0.0
      %533 = vmatpush2.msra.mxu0 %v365
      %534 = vmatprep.subr.mxu0 0.0
      %535 = vmatpush2.msra.mxu0 %v364
      %536 = vmatprep.subr.mxu0 0.0
      %537 = vmatpush2.msra.mxu0 %v363
      %538 = vmatprep.subr.mxu0 0.0
      %539 = vmatpush2.msra.mxu0 %v362
      %540 = vmatprep.subr.mxu0 0.0
      %541 = vmatpush2.msra.mxu0 %v361
      %542 = vmatprep.subr.mxu0 0.0
      %543 = vmatpush2.msra.mxu0 %v360
      %544 = vmatprep.subr.mxu0 0.0
      %545 = vmatpush2.msra.mxu0 %v359
      %546 = vmatprep.subr.mxu0 0.0
      %547 = vmatpush2.msra.mxu0 %v358
      %548 = vmatprep.mubr.f32.mxu0 %v307
      %549 = vmatmul.mubr.f32.gmra.mxu0 %v306
      %v550 = vpop.f32.mrf.mxu0
      %v551 = vadd.f32 %v481, %v550
      %v552 = vpop.f32.mrf.mxu0
      %553 = vdwg.mxu0
      %554 = vmatprep.subr.mxu0 0.0
      %555 = vmatpush1.msra.mxu0 %v389
      %556 = vmatprep.subr.mxu0 0.0
      %557 = vmatpush1.msra.mxu0 %v388
      %558 = vmatprep.subr.mxu0 0.0
      %559 = vmatpush1.msra.mxu0 %v387
      %560 = vmatprep.subr.mxu0 0.0
      %561 = vmatpush1.msra.mxu0 %v386
      %562 = vmatprep.subr.mxu0 0.0
      %563 = vmatpush1.msra.mxu0 %v385
      %564 = vmatprep.subr.mxu0 0.0
      %565 = vmatpush1.msra.mxu0 %v384
      %566 = vmatprep.subr.mxu0 0.0
      %567 = vmatpush1.msra.mxu0 %v383
      %568 = vmatprep.subr.mxu0 0.0
      %569 = vmatpush1.msra.mxu0 %v382
      %570 = vmatprep.subr.mxu0 0.0
      %571 = vmatpush1.msra.mxu0 %v381
      %572 = vmatprep.subr.mxu0 0.0
      %573 = vmatpush1.msra.mxu0 %v380
      %574 = vmatprep.subr.mxu0 0.0
      %575 = vmatpush1.msra.mxu0 %v379
      %576 = vmatprep.subr.mxu0 0.0
      %577 = vmatpush1.msra.mxu0 %v378
      %578 = vmatprep.subr.mxu0 0.0
      %579 = vmatpush1.msra.mxu0 %v377
      %580 = vmatprep.subr.mxu0 0.0
      %581 = vmatpush1.msra.mxu0 %v376
      %582 = vmatprep.subr.mxu0 0.0
      %583 = vmatpush1.msra.mxu0 %v375
      %584 = vmatprep.subr.mxu0 0.0
      %585 = vmatpush1.msra.mxu0 %v374
      %586 = vmatprep.subr.mxu0 0.0
      %587 = vmatpush2.msra.mxu0 %v405
      %588 = vmatprep.subr.mxu0 0.0
      %589 = vmatpush2.msra.mxu0 %v404
      %590 = vmatprep.subr.mxu0 0.0
      %591 = vmatpush2.msra.mxu0 %v403
      %592 = vmatprep.subr.mxu0 0.0
      %593 = vmatpush2.msra.mxu0 %v402
      %594 = vmatprep.subr.mxu0 0.0
      %595 = vmatpush2.msra.mxu0 %v401
      %596 = vmatprep.subr.mxu0 0.0
      %597 = vmatpush2.msra.mxu0 %v400
      %598 = vmatprep.subr.mxu0 0.0
      %599 = vmatpush2.msra.mxu0 %v399
      %600 = vmatprep.subr.mxu0 0.0
      %601 = vmatpush2.msra.mxu0 %v398
      %602 = vmatprep.subr.mxu0 0.0
      %603 = vmatpush2.msra.mxu0 %v397
      %604 = vmatprep.subr.mxu0 0.0
      %605 = vmatpush2.msra.mxu0 %v396
      %606 = vmatprep.subr.mxu0 0.0
      %607 = vmatpush2.msra.mxu0 %v395
      %608 = vmatprep.subr.mxu0 0.0
      %609 = vmatpush2.msra.mxu0 %v394
      %610 = vmatprep.subr.mxu0 0.0
      %611 = vmatpush2.msra.mxu0 %v393
      %612 = vmatprep.subr.mxu0 0.0
      %613 = vmatpush2.msra.mxu0 %v392
      %614 = vmatprep.subr.mxu0 0.0
      %615 = vmatpush2.msra.mxu0 %v391
      %616 = vmatprep.subr.mxu0 0.0
      %617 = vmatpush2.msra.mxu0 %v390
      %618 = vmatprep.mubr.f32.mxu0 %v309
      %619 = vmatmul.mubr.f32.gmra.mxu0 %v308
      %v620 = vpop.f32.mrf.mxu0
      %v621 = vadd.f32 %v551, %v620
      %v622 = vpop.f32.mrf.mxu0
      %623 = vdwg.mxu0
      %v624 = vlaneseq
      %v625 = vshrl.u32 %v624, 7
      %vm626 = vcmp.eq.s32.totalorder %v625, 0
      %v627 = vsel %vm626, 1, 0
      %vm628 = vcmp.eq.s32.totalorder %v627, 1
      %v629 = vsel %vm628, 0.0, %v621
      %v630 = vadd.f32 %v629, %v407
      %v631 = vld [vmem:[%s4] sm:$0xff]
      %v632 = vld [vmem:[%s4 + $0x8] sm:$0xff]
      %v633 = vld [vmem:[%s4 + $0x10] sm:$0xff]
      %v634 = vld [vmem:[%s4 + $0x18] sm:$0xff]
      %v635 = vld [vmem:[%s4 + $0x20] sm:$0xff]
      %v636 = vld [vmem:[%s4 + $0x28] sm:$0xff]
      %v637 = vld [vmem:[%s4 + $0x30] sm:$0xff]
      %v638 = vld [vmem:[%s4 + $0x38] sm:$0xff]
      %v639 = vld [vmem:[%s4 + $0x40] sm:$0xff]
      %v640 = vld [vmem:[%s4 + $0x48] sm:$0xff]
      %v641 = vld [vmem:[%s4 + $0x50] sm:$0xff]
      %v642 = vld [vmem:[%s4 + $0x58] sm:$0xff]
      %v643 = vld [vmem:[%s4 + $0x60] sm:$0xff]
      %v644 = vld [vmem:[%s4 + $0x68] sm:$0xff]
      %v645 = vld [vmem:[%s4 + $0x70] sm:$0xff]
      %v646 = vld [vmem:[%s4 + $0x78] sm:$0xff]
      %v647 = vld [vmem:[%s4 + $0x80] sm:$0xff]
      %v648 = vld [vmem:[%s4 + $0x88] sm:$0xff]
      %v649 = vld [vmem:[%s4 + $0x90] sm:$0xff]
      %v650 = vld [vmem:[%s4 + $0x98] sm:$0xff]
      %v651 = vld [vmem:[%s4 + $0xa0] sm:$0xff]
      %v652 = vld [vmem:[%s4 + $0xa8] sm:$0xff]
      %v653 = vld [vmem:[%s4 + $0xb0] sm:$0xff]
      %v654 = vld [vmem:[%s4 + $0xb8] sm:$0xff]
      %v655 = vld [vmem:[%s5] sm:$0x7]
      %v657 = vlaneseq
      %v658 = vshrl.u32 %v657, 7
      %v659 = vsub.s32 0, %v658
      %v660 = vrot.slane %v655, %v659
      %v661 = vlaneseq
      %v662 = vshrl.u32 %v661, 7
      %v663 = vsub.s32 1, %v662
      %v664 = vrot.slane %v655, %v663
      %v665 = vlaneseq
      %v666 = vshrl.u32 %v665, 7
      %v667 = vsub.s32 2, %v666
      %v668 = vrot.slane %v655, %v667
      %vm672 = vcmask 523264
      %v674 = vsel %vm672, %v630, 0
      %676 = vmatprep.subr.mxu0 0.0
      %677 = vmatpush1.msra.mxu0 0.0
      %678 = vmatprep.subr.mxu0 0.0
      %679 = vmatpush1.msra.mxu0 0.0
      %680 = vmatprep.subr.mxu0 0.0
      %681 = vmatpush1.msra.mxu0 0.0
      %682 = vmatprep.subr.mxu0 0.0
      %683 = vmatpush1.msra.mxu0 0.0
      %684 = vmatprep.subr.mxu0 0.0
      %685 = vmatpush1.msra.mxu0 0.0
      %686 = vmatprep.subr.mxu0 0.0
      %687 = vmatpush1.msra.mxu0 0.0
      %688 = vmatprep.subr.mxu0 0.0
      %689 = vmatpush1.msra.mxu0 0.0
      %690 = vmatprep.subr.mxu0 0.0
      %691 = vmatpush1.msra.mxu0 0.0
      %692 = vmatprep.subr.mxu0 %v653
      %693 = vmatpush1.msra.mxu0 %v652
      %694 = vmatprep.subr.mxu0 %v650
      %695 = vmatpush1.msra.mxu0 %v649
      %696 = vmatprep.subr.mxu0 %v647
      %697 = vmatpush1.msra.mxu0 %v646
      %698 = vmatprep.subr.mxu0 %v644
      %699 = vmatpush1.msra.mxu0 %v643
      %700 = vmatprep.subr.mxu0 %v641
      %701 = vmatpush1.msra.mxu0 %v640
      %702 = vmatprep.subr.mxu0 %v638
      %703 = vmatpush1.msra.mxu0 %v637
      %704 = vmatprep.subr.mxu0 %v635
      %705 = vmatpush1.msra.mxu0 %v634
      %706 = vmatprep.subr.mxu0 %v632
      %707 = vmatpush1.msra.mxu0 %v631
      %708 = vmatprep.subr.mxu0 0.0
      %709 = vmatpush2.msra.mxu0 0.0
      %710 = vmatprep.subr.mxu0 0.0
      %711 = vmatpush2.msra.mxu0 0.0
      %712 = vmatprep.subr.mxu0 0.0
      %713 = vmatpush2.msra.mxu0 0.0
      %714 = vmatprep.subr.mxu0 0.0
      %715 = vmatpush2.msra.mxu0 0.0
      %716 = vmatprep.subr.mxu0 0.0
      %717 = vmatpush2.msra.mxu0 0.0
      %718 = vmatprep.subr.mxu0 0.0
      %719 = vmatpush2.msra.mxu0 0.0
      %720 = vmatprep.subr.mxu0 0.0
      %721 = vmatpush2.msra.mxu0 0.0
      %722 = vmatprep.subr.mxu0 0.0
      %723 = vmatpush2.msra.mxu0 0.0
      %724 = vmatprep.subr.mxu0 0.0
      %725 = vmatpush2.msra.mxu0 0.0
      %726 = vmatprep.subr.mxu0 0.0
      %727 = vmatpush2.msra.mxu0 0.0
      %728 = vmatprep.subr.mxu0 0.0
      %729 = vmatpush2.msra.mxu0 0.0
      %730 = vmatprep.subr.mxu0 0.0
      %731 = vmatpush2.msra.mxu0 0.0
      %732 = vmatprep.subr.mxu0 0.0
      %733 = vmatpush2.msra.mxu0 0.0
      %734 = vmatprep.subr.mxu0 0.0
      %735 = vmatpush2.msra.mxu0 0.0
      %736 = vmatprep.subr.mxu0 0.0
      %737 = vmatpush2.msra.mxu0 0.0
      %738 = vmatprep.subr.mxu0 0.0
      %739 = vmatpush2.msra.mxu0 0.0
      %740 = vmatprep.mubr.f32.mxu0 0.0
      %741 = vmatmul.mubr.f32.gmra.mxu0 %v674
      %v742 = vpop.f32.mrf.mxu0
      %v743 = vadd.f32 %v660, %v742
      %v744 = vpop.f32.mrf.mxu0
      %v745 = vadd.f32 %v664, %v744
      %746 = vdwg.mxu0
      %747 = vmatprep.subr.mxu0 0.0
      %748 = vmatpush1.msra.mxu0 0.0
      %749 = vmatprep.subr.mxu0 0.0
      %750 = vmatpush1.msra.mxu0 0.0
      %751 = vmatprep.subr.mxu0 0.0
      %752 = vmatpush1.msra.mxu0 0.0
      %753 = vmatprep.subr.mxu0 0.0
      %754 = vmatpush1.msra.mxu0 0.0
      %755 = vmatprep.subr.mxu0 0.0
      %756 = vmatpush1.msra.mxu0 0.0
      %757 = vmatprep.subr.mxu0 0.0
      %758 = vmatpush1.msra.mxu0 0.0
      %759 = vmatprep.subr.mxu0 0.0
      %760 = vmatpush1.msra.mxu0 0.0
      %761 = vmatprep.subr.mxu0 0.0
      %762 = vmatpush1.msra.mxu0 0.0
      %763 = vmatprep.subr.mxu0 0.0
      %764 = vmatpush1.msra.mxu0 %v654
      %765 = vmatprep.subr.mxu0 0.0
      %766 = vmatpush1.msra.mxu0 %v651
      %767 = vmatprep.subr.mxu0 0.0
      %768 = vmatpush1.msra.mxu0 %v648
      %769 = vmatprep.subr.mxu0 0.0
      %770 = vmatpush1.msra.mxu0 %v645
      %771 = vmatprep.subr.mxu0 0.0
      %772 = vmatpush1.msra.mxu0 %v642
      %773 = vmatprep.subr.mxu0 0.0
      %774 = vmatpush1.msra.mxu0 %v639
      %775 = vmatprep.subr.mxu0 0.0
      %776 = vmatpush1.msra.mxu0 %v636
      %777 = vmatprep.subr.mxu0 0.0
      %778 = vmatpush1.msra.mxu0 %v633
      %779 = vmatprep.subr.mxu0 0.0
      %780 = vmatpush2.msra.mxu0 0.0
      %781 = vmatprep.subr.mxu0 0.0
      %782 = vmatpush2.msra.mxu0 0.0
      %783 = vmatprep.subr.mxu0 0.0
      %784 = vmatpush2.msra.mxu0 0.0
      %785 = vmatprep.subr.mxu0 0.0
      %786 = vmatpush2.msra.mxu0 0.0
      %787 = vmatprep.subr.mxu0 0.0
      %788 = vmatpush2.msra.mxu0 0.0
      %789 = vmatprep.subr.mxu0 0.0
      %790 = vmatpush2.msra.mxu0 0.0
      %791 = vmatprep.subr.mxu0 0.0
      %792 = vmatpush2.msra.mxu0 0.0
      %793 = vmatprep.subr.mxu0 0.0
      %794 = vmatpush2.msra.mxu0 0.0
      %795 = vmatprep.subr.mxu0 0.0
      %796 = vmatpush2.msra.mxu0 0.0
      %797 = vmatprep.subr.mxu0 0.0
      %798 = vmatpush2.msra.mxu0 0.0
      %799 = vmatprep.subr.mxu0 0.0
      %800 = vmatpush2.msra.mxu0 0.0
      %801 = vmatprep.subr.mxu0 0.0
      %802 = vmatpush2.msra.mxu0 0.0
      %803 = vmatprep.subr.mxu0 0.0
      %804 = vmatpush2.msra.mxu0 0.0
      %805 = vmatprep.subr.mxu0 0.0
      %806 = vmatpush2.msra.mxu0 0.0
      %807 = vmatprep.subr.mxu0 0.0
      %808 = vmatpush2.msra.mxu0 0.0
      %809 = vmatprep.subr.mxu0 0.0
      %810 = vmatpush2.msra.mxu0 0.0
      %811 = vmatprep.mubr.f32.mxu0 0.0
      %812 = vmatmul.mubr.f32.gmra.mxu0 %v674
      %v813 = vpop.f32.mrf.mxu0
      %v814 = vadd.f32 %v668, %v813
      %v815 = vpop.f32.mrf.mxu0
      %816 = vdwg.mxu0
      %vm817 = vcmask 28672
      %v818 = vsel %vm817, %v814, -inf
      %819 = vmax.xlane.f32.xlu0 %v818
      %v820 = vpop.xlane.xlu0 %819
      %v821 = vsub.f32 %v814, %v820
      %v822 = vmul.f32 %v821, 1.442695
      %v823 = vpow.pop %v822
      %v824 = vsel %vm817, %v823, 0.0
      %825 = vadd.xlane.f32.xlu0 %v824
      %v826 = vpop.xlane.xlu0 %825
      %v827 = vrcp.pop %v826
      %v828 = vmul.f32 %v823, %v827
      %830 = vset.pattern.permute.xlu0 0
      %831 = vperm.xlu0 %830, %v828
      %v832 = vpop.permute.xlu0 %831
      %v834 = vmul.f32 %v832, %v743
      %835 = vset.pattern.permute.xlu0 1
      %836 = vperm.xlu0 %835, %v828
      %v837 = vpop.permute.xlu0 %836
      %v839 = vmul.f32 %v837, %v743
      %841 = vrot.lane.b32.xlu0 %v839, 64
      %v842 = vpop.permute.xlu0 %841
      %v844 = vadd.f32 %v834, %v842
      %845 = vset.pattern.permute.xlu0 2
      %846 = vperm.xlu0 %845, %v828
      %v847 = vpop.permute.xlu0 %846
      %v849 = vmul.f32 %v847, %v745
      %v850 = vadd.f32 %v844, %v849
      %851 = vset.pattern.permute.xlu0 3
      %852 = vperm.xlu0 %851, %v828
      %v853 = vpop.permute.xlu0 %852
      %v855 = vmul.f32 %v853, %v745
      %857 = vrot.lane.b32.xlu0 %v855, 64
      %v858 = vpop.permute.xlu0 %857
      %v860 = vadd.f32 %v850, %v858
      %v861 = vadd.f32 %v630, %v860
      %v862 = vld [vmem:[%s6] sm:$0x1]
      %v863 = vld [vmem:[%s7] sm:$0x1]
      %vm864 = vcmask 520192
      %v865 = vsel %vm864, %v861, 0.0
      %866 = vadd.xlane.f32.xlu0 %v865
      %v867 = vpop.xlane.xlu0 %866
      %v868 = vrcp.pop 64.0
      %v869 = vmul.f32 %v867, %v868
      %v870 = vsub.f32 %v861, %v869
      %v871 = vmul.f32 %v870, %v870
      %v872 = vsel %vm864, %v871, 0.0
      %873 = vadd.xlane.f32.xlu0 %v872
      %v874 = vpop.xlane.xlu0 %873
      %v875 = vmul.f32 %v874, %v868
      %v876 = vadd.f32 %v875, 1e-05
      %v877 = vrsqrt.pop %v876
      %v878 = vmul.f32 %v870, %v877
      %v880 = vlaneseq
      %v881 = vshrl.u32 %v880, 7
      %v882 = vsub.s32 0, %v881
      %v883 = vrot.slane %v862, %v882
      %v885 = vmul.f32 %v878, %v883
      %v887 = vlaneseq
      %v888 = vshrl.u32 %v887, 7
      %v889 = vsub.s32 0, %v888
      %v890 = vrot.slane %v863, %v889
      %v892 = vadd.f32 %v885, %v890
      %v893 = vadd.f32 %v892, %v407
      %894 = vst.msk [vmem:[%s303] sm:$0x1f] %vm864, %v893
      %p895 = scmp.lt.s32.totalorder %s19, 1
      %s896 = scalar_select %p895, %s19, 1
      %s897 = smul.addr %s896, 8
      %s898 = scalar_lea.vmem %s8, %s897
      // Predicated region
      $region53: #{vit_softmoe_forward.4} parent=51 // pred_check
        %p899 = pneg %p210
      $region54: #{vit_softmoe_forward.4} parent=51 // pred_check_branch
        %901 = sbr.rel (%p899) target = $region56
      $region55: #{vit_softmoe_forward.4} parent=51 // pred_region
        _
      $region56: #{vit_softmoe_forward.4} parent=51 // pred_fallthru
        _
    $region52: #{vit_softmoe_forward.4} parent=5 // pred_fallthru
      _
    %p902 = scmp.le.s32.totalorder 2, %s14
    // Predicated region
    $region57: #{vit_softmoe_forward.4} parent=5 // pred_check
      %p903 = pneg %p902
    $region58: #{vit_softmoe_forward.4} parent=5 // pred_check_branch
      %905 = sbr.rel (%p903) target = $region60
    $region59: #{vit_softmoe_forward.4} parent=5 // pred_region
      %s906 = ssub.s32 %s14, 2
      // Predicated region
      $region61: #{vit_softmoe_forward.4} parent=59 // pred_check
        %p907 = pneg %p216
      $region62: #{vit_softmoe_forward.4} parent=59 // pred_check_branch
        %909 = sbr.rel (%p907) target = $region64
      $region63: #{vit_softmoe_forward.4} parent=59 // pred_region
        %p910 = scmp.lt.s32.totalorder %s20, 1
        %s911 = scalar_select %p910, %s20, 1
        %s912 = smul.addr %s911, 8
        %s913 = scalar_lea.vmem %s8, %s912
      $region64: #{vit_softmoe_forward.4} parent=59 // pred_fallthru
        _
    $region60: #{vit_softmoe_forward.4} parent=5 // pred_fallthru
      _
  $region6: #{vit_softmoe_forward.4} parent=0 // loop_footer
    %s18 = sadd.s32 1, %s14
  $region7: #{vit_softmoe_forward.4} parent=0 // loop_footer_branch
    %13 = sbr.rel target = $region3
  $region8: #{vit_softmoe_forward.4} parent=0 // loop_exit
    _

// kernel: vit_softmoe_forward.5
$region0: #{vit_softmoe_forward.5}
  #allocation0 [shape = 'u32[]', space=smem, size = 0x4, offset = 0x4, fixed_abs, tag = 'smem constant byte address 0x4 - core index']
  #allocation1 [shape = 'u32[144,128]{1,0:T(1,128)}', space=vmem, size = 0x12000, scoped, tag = 'internal scratch']
  %s0 = inlined_call_operand.vmem [shape: f32[2,5,64], index: 0, kind: input, shape index: {}]
  %s1 = inlined_call_operand.vmem [shape: f32[1,64], index: 1, kind: input, shape index: {}]
  %s2 = inlined_call_operand.vmem [shape: f32[1,64], index: 2, kind: input, shape index: {}]
  %s3 = inlined_call_operand.vmem [shape: f32[64,192], index: 3, kind: input, shape index: {}]
  %s4 = inlined_call_operand.vmem [shape: f32[1,192], index: 4, kind: input, shape index: {}]
  %s5 = inlined_call_operand.vmem [shape: f32[64,64], index: 5, kind: input, shape index: {}]
  %s6 = inlined_call_operand.vmem [shape: f32[1,64], index: 6, kind: input, shape index: {}]
  %s7 = inlined_call_operand.vmem [shape: f32[1,64], index: 7, kind: input, shape index: {}]
  %s8 = inlined_call_operand.vmem [shape: f32[1,64], index: 8, kind: input, shape index: {}]
  %s9 = inlined_call_operand.vmem [shape: f32[64,128], index: 9, kind: input, shape index: {}]
  %s10 = inlined_call_operand.vmem [shape: f32[1,128], index: 10, kind: input, shape index: {}]
  %s11 = inlined_call_operand.vmem [shape: f32[128,64], index: 11, kind: input, shape index: {}]
  %s12 = inlined_call_operand.vmem [shape: f32[1,64], index: 12, kind: input, shape index: {}]
  %s13 = inlined_call_operand.vmem [shape: f32[2,5,64], index: 13, kind: output, shape index: {}]
  %s14 = sld [smem:[#allocation0]]
  $region85: #{vit_softmoe_forward.5} parent=0
    _
  %s16 = ssub.s32 1, %s14
  %s17 = scalar_select 0, %s16, %s14
  loop: start=0, step=1, limit=4
  $region2: #{vit_softmoe_forward.5} parent=0 // loop_pre_header
    _
  $region3: #{vit_softmoe_forward.5} parent=0 // loop_header
    %s19 = sphi 0, %s23
    %p20 = scmp.ge.s32.totalorder %s19, 4
    %s29 = sphi 0, %s31
    %s32 = sphi 0, %s29
    %s33 = sphi 0, %s32
    %s49 = sphi 0, %s33
    %s53 = sphi 0, %s53
    %s55 = sphi 0, %s53
    %s56 = sphi 0, %s55
    %s70 = sphi 0, %s56
    %s74 = sphi 0, %s74
    %s76 = sphi 0, %s74
    %s77 = sphi 0, %s76
    %s91 = sphi 0, %s77
    %s95 = sphi 0, %s95
    %s97 = sphi 0, %s95
    %s98 = sphi 0, %s97
    %s112 = sphi 0, %s98
    %s116 = sphi 0, %s116
    %s118 = sphi 0, %s116
    %s119 = sphi 0, %s118
    %s133 = sphi 0, %s119
    %s137 = sphi 0, %s137
    %s139 = sphi 0, %s137
    %s140 = sphi 0, %s139
    %s154 = sphi 0, %s140
    %s158 = sphi 0, %s158
    %s160 = sphi 0, %s158
    %s161 = sphi 0, %s160
    %s175 = sphi 0, %s161
    %s179 = sphi 0, %s179
    %s181 = sphi 0, %s179
    %s182 = sphi 0, %s181
    %s196 = sphi 0, %s182
    %s200 = sphi 0, %s200
    %s202 = sphi 0, %s200
    %s203 = sphi 0, %s202
    %s217 = sphi 0, %s203
    %s221 = sphi 0, %s221
    %s223 = sphi 0, %s221
    %s224 = sphi 0, %s223
    %s238 = sphi 0, %s224
    %s242 = sphi 0, %s242
    %s244 = sphi 0, %s242
    %s245 = sphi 0, %s244
    %s259 = sphi 0, %s245
    %s263 = sphi 0, %s263
    %s265 = sphi 0, %s263
    %s266 = sphi 0, %s265
    %s280 = sphi 0, %s266
    %s284 = sphi 0, %s284
    %s286 = sphi 0, %s284
    %s287 = sphi 0, %s286
    %s301 = sphi 0, %s287
    %s307 = sphi 0, %s309
    %s310 = sphi 0, %s307
    %s311 = sphi 0, %s310
    %s327 = sphi 0, %s311
  $region4: #{vit_softmoe_forward.5} parent=0 // loop_header_branch
    %22 = sbr.rel (%p20) target = $region8
  $region5: #{vit_softmoe_forward.5} parent=0 // loop_body
    %s24 = ssub.s32 %s19, 1
    %s25 = ssub.s32 %s19, 2
    %s26 = sadd.s32 %s19, 1
    %s27 = ssub.s32 %s19, %s26
    %p28 = scmp.eq.s32.totalorder %s27, 0
    %s30 = sadd.s32 %s29, 1
    %s31 = scalar_select %p28, %s29, %s30
    %p34 = pneg %p28
    %p35 = scmp.eq.s32.totalorder %s19, 1
    %p36 = por %p34, %p35
    %p37 = scmp.ne.s32.totalorder %s29, %s32
    %p38 = scmp.eq.s32.totalorder %s19, 0
    %p39 = por %p37, %p38
    %p40 = scmp.ne.s32.totalorder %s29, %s32
    %p41 = scmp.eq.s32.totalorder %s24, 1
    %p42 = por %p40, %p41
    %p43 = scmp.ne.s32.totalorder %s32, %s33
    %p44 = scmp.eq.s32.totalorder %s24, 0
    %p45 = por %p43, %p44
    %p46 = scmp.ne.s32.totalorder %s32, %s33
    %p47 = scmp.eq.s32.totalorder %s25, 1
    %p48 = por %p46, %p47
    %p50 = scmp.ne.s32.totalorder %s33, %s49
    %p51 = scmp.eq.s32.totalorder %s25, 0
    %p52 = por %p50, %p51
    %s54 = sadd.s32 %s53, 1
    %p57 = scmp.eq.s32.totalorder %s19, 1
    %p58 = scmp.ne.s32.totalorder %s53, %s55
    %p59 = scmp.eq.s32.totalorder %s19, 0
    %p60 = por %p58, %p59
    %p61 = scmp.ne.s32.totalorder %s53, %s55
    %p62 = scmp.eq.s32.totalorder %s24, 1
    %p63 = por %p61, %p62
    %p64 = scmp.ne.s32.totalorder %s55, %s56
    %p65 = scmp.eq.s32.totalorder %s24, 0
    %p66 = por %p64, %p65
    %p67 = scmp.ne.s32.totalorder %s55, %s56
    %p68 = scmp.eq.s32.totalorder %s25, 1
    %p69 = por %p67, %p68
    %p71 = scmp.ne.s32.totalorder %s56, %s70
    %p72 = scmp.eq.s32.totalorder %s25, 0
    %p73 = por %p71, %p72
    %s75 = sadd.s32 %s74, 1
    %p78 = scmp.eq.s32.totalorder %s19, 1
    %p79 = scmp.ne.s32.totalorder %s74, %s76
    %p80 = scmp.eq.s32.totalorder %s19, 0
    %p81 = por %p79, %p80
    %p82 = scmp.ne.s32.totalorder %s74, %s76
    %p83 = scmp.eq.s32.totalorder %s24, 1
    %p84 = por %p82, %p83
    %p85 = scmp.ne.s32.totalorder %s76, %s77
    %p86 = scmp.eq.s32.totalorder %s24, 0
    %p87 = por %p85, %p86
    %p88 = scmp.ne.s32.totalorder %s76, %s77
    %p89 = scmp.eq.s32.totalorder %s25, 1
    %p90 = por %p88, %p89
    %p92 = scmp.ne.s32.totalorder %s77, %s91
    %p93 = scmp.eq.s32.totalorder %s25, 0
    %p94 = por %p92, %p93
    %s96 = sadd.s32 %s95, 1
    %p99 = scmp.eq.s32.totalorder %s19, 1
    %p100 = scmp.ne.s32.totalorder %s95, %s97
    %p101 = scmp.eq.s32.totalorder %s19, 0
    %p102 = por %p100, %p101
    %p103 = scmp.ne.s32.totalorder %s95, %s97
    %p104 = scmp.eq.s32.totalorder %s24, 1
    %p105 = por %p103, %p104
    %p106 = scmp.ne.s32.totalorder %s97, %s98
    %p107 = scmp.eq.s32.totalorder %s24, 0
    %p108 = por %p106, %p107
    %p109 = scmp.ne.s32.totalorder %s97, %s98
    %p110 = scmp.eq.s32.totalorder %s25, 1
    %p111 = por %p109, %p110
    %p113 = scmp.ne.s32.totalorder %s98, %s112
    %p114 = scmp.eq.s32.totalorder %s25, 0
    %p115 = por %p113, %p114
    %s117 = sadd.s32 %s116, 1
    %p120 = scmp.eq.s32.totalorder %s19, 1
    %p121 = scmp.ne.s32.totalorder %s116, %s118
    %p122 = scmp.eq.s32.totalorder %s19, 0
    %p123 = por %p121, %p122
    %p124 = scmp.ne.s32.totalorder %s116, %s118
    %p125 = scmp.eq.s32.totalorder %s24, 1
    %p126 = por %p124, %p125
    %p127 = scmp.ne.s32.totalorder %s118, %s119
    %p128 = scmp.eq.s32.totalorder %s24, 0
    %p129 = por %p127, %p128
    %p130 = scmp.ne.s32.totalorder %s118, %s119
    %p131 = scmp.eq.s32.totalorder %s25, 1
    %p132 = por %p130, %p131
    %p134 = scmp.ne.s32.totalorder %s119, %s133
    %p135 = scmp.eq.s32.totalorder %s25, 0
    %p136 = por %p134, %p135
    %s138 = sadd.s32 %s137, 1
    %p141 = scmp.eq.s32.totalorder %s19, 1
    %p142 = scmp.ne.s32.totalorder %s137, %s139
    %p143 = scmp.eq.s32.totalorder %s19, 0
    %p144 = por %p142, %p143
    %p145 = scmp.ne.s32.totalorder %s137, %s139
    %p146 = scmp.eq.s32.totalorder %s24, 1
    %p147 = por %p145, %p146
    %p148 = scmp.ne.s32.totalorder %s139, %s140
    %p149 = scmp.eq.s32.totalorder %s24, 0
    %p150 = por %p148, %p149
    %p151 = scmp.ne.s32.totalorder %s139, %s140
    %p152 = scmp.eq.s32.totalorder %s25, 1
    %p153 = por %p151, %p152
    %p155 = scmp.ne.s32.totalorder %s140, %s154
    %p156 = scmp.eq.s32.totalorder %s25, 0
    %p157 = por %p155, %p156
    %s159 = sadd.s32 %s158, 1
    %p162 = scmp.eq.s32.totalorder %s19, 1
    %p163 = scmp.ne.s32.totalorder %s158, %s160
    %p164 = scmp.eq.s32.totalorder %s19, 0
    %p165 = por %p163, %p164
    %p166 = scmp.ne.s32.totalorder %s158, %s160
    %p167 = scmp.eq.s32.totalorder %s24, 1
    %p168 = por %p166, %p167
    %p169 = scmp.ne.s32.totalorder %s160, %s161
    %p170 = scmp.eq.s32.totalorder %s24, 0
    %p171 = por %p169, %p170
    %p172 = scmp.ne.s32.totalorder %s160, %s161
    %p173 = scmp.eq.s32.totalorder %s25, 1
    %p174 = por %p172, %p173
    %p176 = scmp.ne.s32.totalorder %s161, %s175
    %p177 = scmp.eq.s32.totalorder %s25, 0
    %p178 = por %p176, %p177
    %s180 = sadd.s32 %s179, 1
    %p183 = scmp.eq.s32.totalorder %s19, 1
    %p184 = scmp.ne.s32.totalorder %s179, %s181
    %p185 = scmp.eq.s32.totalorder %s19, 0
    %p186 = por %p184, %p185
    %p187 = scmp.ne.s32.totalorder %s179, %s181
    %p188 = scmp.eq.s32.totalorder %s24, 1
    %p189 = por %p187, %p188
    %p190 = scmp.ne.s32.totalorder %s181, %s182
    %p191 = scmp.eq.s32.totalorder %s24, 0
    %p192 = por %p190, %p191
    %p193 = scmp.ne.s32.totalorder %s181, %s182
    %p194 = scmp.eq.s32.totalorder %s25, 1
    %p195 = por %p193, %p194
    %p197 = scmp.ne.s32.totalorder %s182, %s196
    %p198 = scmp.eq.s32.totalorder %s25, 0
    %p199 = por %p197, %p198
    %s201 = sadd.s32 %s200, 1
    %p204 = scmp.eq.s32.totalorder %s19, 1
    %p205 = scmp.ne.s32.totalorder %s200, %s202
    %p206 = scmp.eq.s32.totalorder %s19, 0
    %p207 = por %p205, %p206
    %p208 = scmp.ne.s32.totalorder %s200, %s202
    %p209 = scmp.eq.s32.totalorder %s24, 1
    %p210 = por %p208, %p209
    %p211 = scmp.ne.s32.totalorder %s202, %s203
    %p212 = scmp.eq.s32.totalorder %s24, 0
    %p213 = por %p211, %p212
    %p214 = scmp.ne.s32.totalorder %s202, %s203
    %p215 = scmp.eq.s32.totalorder %s25, 1
    %p216 = por %p214, %p215
    %p218 = scmp.ne.s32.totalorder %s203, %s217
    %p219 = scmp.eq.s32.totalorder %s25, 0
    %p220 = por %p218, %p219
    %s222 = sadd.s32 %s221, 1
    %p225 = scmp.eq.s32.totalorder %s19, 1
    %p226 = scmp.ne.s32.totalorder %s221, %s223
    %p227 = scmp.eq.s32.totalorder %s19, 0
    %p228 = por %p226, %p227
    %p229 = scmp.ne.s32.totalorder %s221, %s223
    %p230 = scmp.eq.s32.totalorder %s24, 1
    %p231 = por %p229, %p230
    %p232 = scmp.ne.s32.totalorder %s223, %s224
    %p233 = scmp.eq.s32.totalorder %s24, 0
    %p234 = por %p232, %p233
    %p235 = scmp.ne.s32.totalorder %s223, %s224
    %p236 = scmp.eq.s32.totalorder %s25, 1
    %p237 = por %p235, %p236
    %p239 = scmp.ne.s32.totalorder %s224, %s238
    %p240 = scmp.eq.s32.totalorder %s25, 0
    %p241 = por %p239, %p240
    %s243 = sadd.s32 %s242, 1
    %p246 = scmp.eq.s32.totalorder %s19, 1
    %p247 = scmp.ne.s32.totalorder %s242, %s244
    %p248 = scmp.eq.s32.totalorder %s19, 0
    %p249 = por %p247, %p248
    %p250 = scmp.ne.s32.totalorder %s242, %s244
    %p251 = scmp.eq.s32.totalorder %s24, 1
    %p252 = por %p250, %p251
    %p253 = scmp.ne.s32.totalorder %s244, %s245
    %p254 = scmp.eq.s32.totalorder %s24, 0
    %p255 = por %p253, %p254
    %p256 = scmp.ne.s32.totalorder %s244, %s245
    %p257 = scmp.eq.s32.totalorder %s25, 1
    %p258 = por %p256, %p257
    %p260 = scmp.ne.s32.totalorder %s245, %s259
    %p261 = scmp.eq.s32.totalorder %s25, 0
    %p262 = por %p260, %p261
    %s264 = sadd.s32 %s263, 1
    %p267 = scmp.eq.s32.totalorder %s19, 1
    %p268 = scmp.ne.s32.totalorder %s263, %s265
    %p269 = scmp.eq.s32.totalorder %s19, 0
    %p270 = por %p268, %p269
    %p271 = scmp.ne.s32.totalorder %s263, %s265
    %p272 = scmp.eq.s32.totalorder %s24, 1
    %p273 = por %p271, %p272
    %p274 = scmp.ne.s32.totalorder %s265, %s266
    %p275 = scmp.eq.s32.totalorder %s24, 0
    %p276 = por %p274, %p275
    %p277 = scmp.ne.s32.totalorder %s265, %s266
    %p278 = scmp.eq.s32.totalorder %s25, 1
    %p279 = por %p277, %p278
    %p281 = scmp.ne.s32.totalorder %s266, %s280
    %p282 = scmp.eq.s32.totalorder %s25, 0
    %p283 = por %p281, %p282
    %s285 = sadd.s32 %s284, 1
    %p288 = scmp.eq.s32.totalorder %s19, 1
    %p289 = scmp.ne.s32.totalorder %s284, %s286
    %p290 = scmp.eq.s32.totalorder %s19, 0
    %p291 = por %p289, %p290
    %p292 = scmp.ne.s32.totalorder %s284, %s286
    %p293 = scmp.eq.s32.totalorder %s24, 1
    %p294 = por %p292, %p293
    %p295 = scmp.ne.s32.totalorder %s286, %s287
    %p296 = scmp.eq.s32.totalorder %s24, 0
    %p297 = por %p295, %p296
    %p298 = scmp.ne.s32.totalorder %s286, %s287
    %p299 = scmp.eq.s32.totalorder %s25, 1
    %p300 = por %p298, %p299
    %p302 = scmp.ne.s32.totalorder %s287, %s301
    %p303 = scmp.eq.s32.totalorder %s25, 0
    %p304 = por %p302, %p303
    %s305 = ssub.s32 %s19, %s26
    %p306 = scmp.eq.s32.totalorder %s305, 0
    %s308 = sadd.s32 %s307, 1
    %s309 = scalar_select %p306, %s307, %s308
    %p312 = pneg %p306
    %p313 = scmp.eq.s32.totalorder %s19, 1
    %p314 = por %p312, %p313
    %p315 = scmp.ne.s32.totalorder %s307, %s310
    %p316 = scmp.eq.s32.totalorder %s19, 0
    %p317 = por %p315, %p316
    %p318 = scmp.ne.s32.totalorder %s307, %s310
    %p319 = scmp.eq.s32.totalorder %s24, 1
    %p320 = por %p318, %p319
    %p321 = scmp.ne.s32.totalorder %s310, %s311
    %p322 = scmp.eq.s32.totalorder %s24, 0
    %p323 = por %p321, %p322
    %p324 = scmp.ne.s32.totalorder %s310, %s311
    %p325 = scmp.eq.s32.totalorder %s25, 1
    %p326 = por %p324, %p325
    %p328 = scmp.ne.s32.totalorder %s311, %s327
    %p329 = scmp.eq.s32.totalorder %s25, 0
    %p330 = por %p328, %p329
    %p331 = scmp.le.s32.totalorder 1, %s19
    %p332 = scmp.lt.s32.totalorder %s19, 3
    %p333 = pnand %p331, %p332
    %p334 = pneg %p333
    // Predicated region
    $region9: #{vit_softmoe_forward.5} parent=5 // pred_check
      _
    $region10: #{vit_softmoe_forward.5} parent=5 // pred_check_branch
      %336 = sbr.rel (%p333) target = $region12
    $region11: #{vit_softmoe_forward.5} parent=5 // pred_region
      %s337 = ssub.s32 %s19, 1
      // Predicated region
      $region13: #{vit_softmoe_forward.5} parent=11 // pred_check
        %p338 = pneg %p66
      $region14: #{vit_softmoe_forward.5} parent=11 // pred_check_branch
        %340 = sbr.rel (%p338) target = $region16
      $region15: #{vit_softmoe_forward.5} parent=11 // pred_region
        _
      $region16: #{vit_softmoe_forward.5} parent=11 // pred_fallthru
        _
      // Predicated region
      $region17: #{vit_softmoe_forward.5} parent=11 // pred_check
        %p341 = pneg %p87
      $region18: #{vit_softmoe_forward.5} parent=11 // pred_check_branch
        %343 = sbr.rel (%p341) target = $region20
      $region19: #{vit_softmoe_forward.5} parent=11 // pred_region
        _
      $region20: #{vit_softmoe_forward.5} parent=11 // pred_fallthru
        _
      // Predicated region
      $region21: #{vit_softmoe_forward.5} parent=11 // pred_check
        %p344 = pneg %p108
      $region22: #{vit_softmoe_forward.5} parent=11 // pred_check_branch
        %346 = sbr.rel (%p344) target = $region24
      $region23: #{vit_softmoe_forward.5} parent=11 // pred_region
        _
      $region24: #{vit_softmoe_forward.5} parent=11 // pred_fallthru
        _
      // Predicated region
      $region25: #{vit_softmoe_forward.5} parent=11 // pred_check
        %p347 = pneg %p129
      $region26: #{vit_softmoe_forward.5} parent=11 // pred_check_branch
        %349 = sbr.rel (%p347) target = $region28
      $region27: #{vit_softmoe_forward.5} parent=11 // pred_region
        _
      $region28: #{vit_softmoe_forward.5} parent=11 // pred_fallthru
        _
      // Predicated region
      $region29: #{vit_softmoe_forward.5} parent=11 // pred_check
        %p350 = pneg %p150
      $region30: #{vit_softmoe_forward.5} parent=11 // pred_check_branch
        %352 = sbr.rel (%p350) target = $region32
      $region31: #{vit_softmoe_forward.5} parent=11 // pred_region
        _
      $region32: #{vit_softmoe_forward.5} parent=11 // pred_fallthru
        _
      // Predicated region
      $region33: #{vit_softmoe_forward.5} parent=11 // pred_check
        %p353 = pneg %p171
      $region34: #{vit_softmoe_forward.5} parent=11 // pred_check_branch
        %355 = sbr.rel (%p353) target = $region36
      $region35: #{vit_softmoe_forward.5} parent=11 // pred_region
        _
      $region36: #{vit_softmoe_forward.5} parent=11 // pred_fallthru
        _
      // Predicated region
      $region37: #{vit_softmoe_forward.5} parent=11 // pred_check
        %p356 = pneg %p192
      $region38: #{vit_softmoe_forward.5} parent=11 // pred_check_branch
        %358 = sbr.rel (%p356) target = $region40
      $region39: #{vit_softmoe_forward.5} parent=11 // pred_region
        _
      $region40: #{vit_softmoe_forward.5} parent=11 // pred_fallthru
        _
      // Predicated region
      $region41: #{vit_softmoe_forward.5} parent=11 // pred_check
        %p359 = pneg %p213
      $region42: #{vit_softmoe_forward.5} parent=11 // pred_check_branch
        %361 = sbr.rel (%p359) target = $region44
      $region43: #{vit_softmoe_forward.5} parent=11 // pred_region
        _
      $region44: #{vit_softmoe_forward.5} parent=11 // pred_fallthru
        _
      // Predicated region
      $region45: #{vit_softmoe_forward.5} parent=11 // pred_check
        %p362 = pneg %p234
      $region46: #{vit_softmoe_forward.5} parent=11 // pred_check_branch
        %364 = sbr.rel (%p362) target = $region48
      $region47: #{vit_softmoe_forward.5} parent=11 // pred_region
        _
      $region48: #{vit_softmoe_forward.5} parent=11 // pred_fallthru
        _
      // Predicated region
      $region49: #{vit_softmoe_forward.5} parent=11 // pred_check
        %p365 = pneg %p255
      $region50: #{vit_softmoe_forward.5} parent=11 // pred_check_branch
        %367 = sbr.rel (%p365) target = $region52
      $region51: #{vit_softmoe_forward.5} parent=11 // pred_region
        _
      $region52: #{vit_softmoe_forward.5} parent=11 // pred_fallthru
        _
      // Predicated region
      $region53: #{vit_softmoe_forward.5} parent=11 // pred_check
        %p368 = pneg %p276
      $region54: #{vit_softmoe_forward.5} parent=11 // pred_check_branch
        %370 = sbr.rel (%p368) target = $region56
      $region55: #{vit_softmoe_forward.5} parent=11 // pred_region
        _
      $region56: #{vit_softmoe_forward.5} parent=11 // pred_fallthru
        _
      // Predicated region
      $region57: #{vit_softmoe_forward.5} parent=11 // pred_check
        %p371 = pneg %p297
      $region58: #{vit_softmoe_forward.5} parent=11 // pred_check_branch
        %373 = sbr.rel (%p371) target = $region60
      $region59: #{vit_softmoe_forward.5} parent=11 // pred_region
        _
      $region60: #{vit_softmoe_forward.5} parent=11 // pred_fallthru
        _
    $region12: #{vit_softmoe_forward.5} parent=5 // pred_fallthru
      _
    %p374 = scmp.lt.s32.totalorder %s19, 2
    // Predicated region
    $region61: #{vit_softmoe_forward.5} parent=5 // pred_check
      %p375 = pneg %p374
    $region62: #{vit_softmoe_forward.5} parent=5 // pred_check_branch
      %377 = sbr.rel (%p375) target = $region64
    $region63: #{vit_softmoe_forward.5} parent=5 // pred_region
      // Predicated region
      $region65: #{vit_softmoe_forward.5} parent=63 // pred_check
        %p378 = pneg %p39
      $region66: #{vit_softmoe_forward.5} parent=63 // pred_check_branch
        %380 = sbr.rel (%p378) target = $region68
      $region67: #{vit_softmoe_forward.5} parent=63 // pred_region
        %p381 = scmp.lt.s32.totalorder %s19, 1
        %s382 = scalar_select %p381, %s19, 1
        %s383 = smul.addr %s382, 8
        %s384 = scalar_lea.vmem %s0, %s383
      $region68: #{vit_softmoe_forward.5} parent=63 // pred_fallthru
        _
    $region64: #{vit_softmoe_forward.5} parent=5 // pred_fallthru
      _
    %p385 = scmp.le.s32.totalorder 1, %s19
    %p386 = scmp.lt.s32.totalorder %s19, 3
    %p387 = pnand %p385, %p386
    %p388 = pneg %p387
    // Predicated region
    $region69: #{vit_softmoe_forward.5} parent=5 // pred_check
      _
    $region70: #{vit_softmoe_forward.5} parent=5 // pred_check_branch
      %390 = sbr.rel (%p387) target = $region72
    $region71: #{vit_softmoe_forward.5} parent=5 // pred_region
      %s391 = ssub.s32 %s19, 1
      %p392 = scmp.lt.s32.totalorder %s24, 1
      %s393 = scalar_select %p392, %s24, 1
      %s394 = smul.addr %s393, 8
      %s395 = scalar_lea.vmem %s0, %s394
      %p396 = pneg %p45
      %p397 = pneg %p42
      %p398 = pneg %p66
      %p399 = pneg %p63
      %p400 = pneg %p87
      %p401 = pneg %p84
      %p402 = pneg %p108
      %p403 = pneg %p105
      %p404 = pneg %p129
      %p405 = pneg %p126
      %p406 = pneg %p150
      %p407 = pneg %p147
      %p408 = pneg %p171
      %p409 = pneg %p168
      %p410 = pneg %p192
      %p411 = pneg %p189
      %p412 = pneg %p213
      %p413 = pneg %p210
      %p414 = pneg %p234
      %p415 = pneg %p231
      %p416 = pneg %p255
      %p417 = pneg %p252
      %p418 = pneg %p276
      %p419 = pneg %p273
      %p420 = pneg %p297
      %p421 = pneg %p294
      %p422 = pneg %p323
      %p423 = pneg %p320
      %p424 = scmp.lt.s32.totalorder %s24, 1
      %s425 = scalar_select %p424, %s24, 1
      %s426 = smul.addr %s425, 8
      %s427 = scalar_lea.vmem %s13, %s426
      %p428 = scmp.lt.s32.totalorder %s24, 1
      %s429 = scalar_select %p428, %s24, 1
      %s430 = smul.addr %s429, 8
      %s431 = scalar_lea.vmem %s0, %s430
      %p432 = scmp.lt.s32.totalorder %s24, 1
      %s433 = scalar_select %p432, %s24, 1
      %s434 = smul.addr %s433, 8
      %s435 = scalar_lea.vmem %s13, %s434
      %v436 = vld [vmem:[%s431] sm:$0x1f]
      %v437 = vld [vmem:[%s1] sm:$0x1]
      %v438 = vld [vmem:[%s2] sm:$0x1]
      %vm439 = vcmask 520192
      %v440 = vsel %vm439, %v436, 0.0
      %441 = vadd.xlane.f32.xlu0 %v440
      %v442 = vpop.xlane.xlu0 %441
      %v443 = vrcp.pop 64.0
      %v444 = vmul.f32 %v442, %v443
      %v445 = vsub.f32 %v436, %v444
      %v446 = vmul.f32 %v445, %v445
      %v447 = vsel %vm439, %v446, 0.0
      %448 = vadd.xlane.f32.xlu0 %v447
      %v449 = vpop.xlane.xlu0 %448
      %v450 = vmul.f32 %v449, %v443
      %v451 = vadd.f32 %v450, 1e-06
      %v452 = vrsqrt.pop %v451
      %v453 = vmul.f32 %v445, %v452
      %v455 = vlaneseq
      %v456 = vshrl.u32 %v455, 7
      %v457 = vsub.s32 0, %v456
      %v458 = vrot.slane %v437, %v457
      %v460 = vmul.f32 %v453, %v458
      %v462 = vlaneseq
      %v463 = vshrl.u32 %v462, 7
      %v464 = vsub.s32 0, %v463
      %v465 = vrot.slane %v438, %v464
      %v467 = vadd.f32 %v460, %v465
      %v468 = vld [vmem:[%s3] sm:$0xff]
      %v469 = vld [vmem:[%s3 + $0x8] sm:$0xff]
      %v470 = vld [vmem:[%s3 + $0x10] sm:$0xff]
      %v471 = vld [vmem:[%s3 + $0x18] sm:$0xff]
      %v472 = vld [vmem:[%s3 + $0x20] sm:$0xff]
      %v473 = vld [vmem:[%s3 + $0x28] sm:$0xff]
      %v474 = vld [vmem:[%s3 + $0x30] sm:$0xff]
      %v475 = vld [vmem:[%s3 + $0x38] sm:$0xff]
      %v476 = vld [vmem:[%s3 + $0x40] sm:$0xff]
      %v477 = vld [vmem:[%s3 + $0x48] sm:$0xff]
      %v478 = vld [vmem:[%s3 + $0x50] sm:$0xff]
      %v479 = vld [vmem:[%s3 + $0x58] sm:$0xff]
      %v480 = vld [vmem:[%s3 + $0x60] sm:$0xff]
      %v481 = vld [vmem:[%s3 + $0x68] sm:$0xff]
      %v482 = vld [vmem:[%s3 + $0x70] sm:$0xff]
      %v483 = vld [vmem:[%s3 + $0x78] sm:$0xff]
      %v484 = vld [vmem:[%s4] sm:$0x3]
      %v486 = vlaneseq
      %v487 = vshrl.u32 %v486, 7
      %v488 = vsub.s32 0, %v487
      %v489 = vrot.slane %v484, %v488
      %v490 = vlaneseq
      %v491 = vshrl.u32 %v490, 7
      %v492 = vsub.s32 1, %v491
      %v493 = vrot.slane %v484, %v492
      %vm496 = vcmask 523264
      %v498 = vsel %vm496, %v467, 0
      %500 = vmatprep.subr.mxu0 0.0
      %501 = vmatpush1.msra.mxu0 0.0
      %502 = vmatprep.subr.mxu0 0.0
      %503 = vmatpush1.msra.mxu0 0.0
      %504 = vmatprep.subr.mxu0 0.0
      %505 = vmatpush1.msra.mxu0 0.0
      %506 = vmatprep.subr.mxu0 0.0
      %507 = vmatpush1.msra.mxu0 0.0
      %508 = vmatprep.subr.mxu0 0.0
      %509 = vmatpush1.msra.mxu0 0.0
      %510 = vmatprep.subr.mxu0 0.0
      %511 = vmatpush1.msra.mxu0 0.0
      %512 = vmatprep.subr.mxu0 0.0
      %513 = vmatpush1.msra.mxu0 0.0
      %514 = vmatprep.subr.mxu0 0.0
      %515 = vmatpush1.msra.mxu0 0.0
      %516 = vmatprep.subr.mxu0 %v483
      %517 = vmatpush1.msra.mxu0 %v482
      %518 = vmatprep.subr.mxu0 %v481
      %519 = vmatpush1.msra.mxu0 %v480
      %520 = vmatprep.subr.mxu0 %v479
      %521 = vmatpush1.msra.mxu0 %v478
      %522 = vmatprep.subr.mxu0 %v477
      %523 = vmatpush1.msra.mxu0 %v476
      %524 = vmatprep.subr.mxu0 %v475
      %525 = vmatpush1.msra.mxu0 %v474
      %526 = vmatprep.subr.mxu0 %v473
      %527 = vmatpush1.msra.mxu0 %v472
      %528 = vmatprep.subr.mxu0 %v471
      %529 = vmatpush1.msra.mxu0 %v470
      %530 = vmatprep.subr.mxu0 %v469
      %531 = vmatpush1.msra.mxu0 %v468
      %532 = vmatprep.subr.mxu0 0.0
      %533 = vmatpush2.msra.mxu0 0.0
      %534 = vmatprep.subr.mxu0 0.0
      %535 = vmatpush2.msra.mxu0 0.0
      %536 = vmatprep.subr.mxu0 0.0
      %537 = vmatpush2.msra.mxu0 0.0
      %538 = vmatprep.subr.mxu0 0.0
      %539 = vmatpush2.msra.mxu0 0.0
      %540 = vmatprep.subr.mxu0 0.0
      %541 = vmatpush2.msra.mxu0 0.0
      %542 = vmatprep.subr.mxu0 0.0
      %543 = vmatpush2.msra.mxu0 0.0
      %544 = vmatprep.subr.mxu0 0.0
      %545 = vmatpush2.msra.mxu0 0.0
      %546 = vmatprep.subr.mxu0 0.0
      %547 = vmatpush2.msra.mxu0 0.0
      %548 = vmatprep.subr.mxu0 0.0
      %549 = vmatpush2.msra.mxu0 0.0
      %550 = vmatprep.subr.mxu0 0.0
      %551 = vmatpush2.msra.mxu0 0.0
      %552 = vmatprep.subr.mxu0 0.0
      %553 = vmatpush2.msra.mxu0 0.0
      %554 = vmatprep.subr.mxu0 0.0
      %555 = vmatpush2.msra.mxu0 0.0
      %556 = vmatprep.subr.mxu0 0.0
      %557 = vmatpush2.msra.mxu0 0.0
      %558 = vmatprep.subr.mxu0 0.0
      %559 = vmatpush2.msra.mxu0 0.0
      %560 = vmatprep.subr.mxu0 0.0
      %561 = vmatpush2.msra.mxu0 0.0
      %562 = vmatprep.subr.mxu0 0.0
      %563 = vmatpush2.msra.mxu0 0.0
      %564 = vmatprep.mubr.f32.mxu0 0.0
      %565 = vmatmul.mubr.f32.gmra.mxu0 %v498
      %v566 = vpop.f32.mrf.mxu0
      %v567 = vadd.f32 %v489, %v566
      %v568 = vpop.f32.mrf.mxu0
      %v569 = vadd.f32 %v493, %v568
      %570 = vdwg.mxu0
      %v571 = vld [vmem:[%s5] sm:$0xff]
      %v572 = vld [vmem:[%s5 + $0x8] sm:$0xff]
      %v573 = vld [vmem:[%s5 + $0x10] sm:$0xff]
      %v574 = vld [vmem:[%s5 + $0x18] sm:$0xff]
      %v575 = vld [vmem:[%s5 + $0x20] sm:$0xff]
      %v576 = vld [vmem:[%s5 + $0x28] sm:$0xff]
      %v577 = vld [vmem:[%s5 + $0x30] sm:$0xff]
      %v578 = vld [vmem:[%s5 + $0x38] sm:$0xff]
      %v579 = vld [vmem:[%s6] sm:$0x1]
      %581 = vrot.lane.b32.xlu0 %v567, 64
      %v582 = vpop.permute.xlu0 %581
      %vm583 = vcmask 130048
      %v584 = vsel %vm583, %v567, 0
      %v586 = vsel %vm583, %v582, 0
      %588 = vmatprep.subr.mxu0 0.0
      %589 = vmatpush1.xpose.msra.mxu0 0.0
      %590 = vmatprep.subr.mxu0 0.0
      %591 = vmatpush1.xpose.msra.mxu0 0.0
      %592 = vmatprep.subr.mxu0 0.0
      %593 = vmatpush1.xpose.msra.mxu0 0.0
      %594 = vmatprep.subr.mxu0 0.0
      %595 = vmatpush1.xpose.msra.mxu0 0.0
      %596 = vmatprep.subr.mxu0 0.0
      %597 = vmatpush1.xpose.msra.mxu0 0.0
      %598 = vmatprep.subr.mxu0 0.0
      %599 = vmatpush1.xpose.msra.mxu0 0.0
      %600 = vmatprep.subr.mxu0 0.0
      %601 = vmatpush1.xpose.msra.mxu0 0.0
      %602 = vmatprep.subr.mxu0 0.0
      %603 = vmatpush1.xpose.msra.mxu0 0.0
      %604 = vmatprep.subr.mxu0 0.0
      %605 = vmatpush1.xpose.msra.mxu0 0.0
      %606 = vmatprep.subr.mxu0 0.0
      %607 = vmatpush1.xpose.msra.mxu0 0.0
      %608 = vmatprep.subr.mxu0 0.0
      %609 = vmatpush1.xpose.msra.mxu0 0.0
      %610 = vmatprep.subr.mxu0 0.0
      %611 = vmatpush1.xpose.msra.mxu0 0.0
      %612 = vmatprep.subr.mxu0 0.0
      %613 = vmatpush1.xpose.msra.mxu0 0.0
      %614 = vmatprep.subr.mxu0 0.0
      %615 = vmatpush1.xpose.msra.mxu0 0.0
      %616 = vmatprep.subr.mxu0 0.0
      %617 = vmatpush1.xpose.msra.mxu0 0.0
      %618 = vmatprep.subr.mxu0 0.0
      %619 = vmatpush1.xpose.msra.mxu0 %v586
      %620 = vmatprep.subr.mxu0 0.0
      %621 = vmatpush2.xpose.msra.mxu0 0.0
      %622 = vmatprep.subr.mxu0 0.0
      %623 = vmatpush2.xpose.msra.mxu0 0.0
      %624 = vmatprep.subr.mxu0 0.0
      %625 = vmatpush2.xpose.msra.mxu0 0.0
      %626 = vmatprep.subr.mxu0 0.0
      %627 = vmatpush2.xpose.msra.mxu0 0.0
      %628 = vmatprep.subr.mxu0 0.0
      %629 = vmatpush2.xpose.msra.mxu0 0.0
      %630 = vmatprep.subr.mxu0 0.0
      %631 = vmatpush2.xpose.msra.mxu0 0.0
      %632 = vmatprep.subr.mxu0 0.0
      %633 = vmatpush2.xpose.msra.mxu0 0.0
      %634 = vmatprep.subr.mxu0 0.0
      %635 = vmatpush2.xpose.msra.mxu0 0.0
      %636 = vmatprep.subr.mxu0 0.0
      %637 = vmatpush2.xpose.msra.mxu0 0.0
      %638 = vmatprep.subr.mxu0 0.0
      %639 = vmatpush2.xpose.msra.mxu0 0.0
      %640 = vmatprep.subr.mxu0 0.0
      %641 = vmatpush2.xpose.msra.mxu0 0.0
      %642 = vmatprep.subr.mxu0 0.0
      %643 = vmatpush2.xpose.msra.mxu0 0.0
      %644 = vmatprep.subr.mxu0 0.0
      %645 = vmatpush2.xpose.msra.mxu0 0.0
      %646 = vmatprep.subr.mxu0 0.0
      %647 = vmatpush2.xpose.msra.mxu0 0.0
      %648 = vmatprep.subr.mxu0 0.0
      %649 = vmatpush2.xpose.msra.mxu0 0.0
      %650 = vmatprep.subr.mxu0 0.0
      %651 = vmatpush2.xpose.msra.mxu0 0.0
      %652 = vmatprep.mubr.f32.mxu0 0.0
      %653 = vmatmul.mubr.f32.gmra.mxu0 %v584
      %v654 = vpop.f32.mrf.mxu0
      %v655 = vadd.f32 0.0, %v654
      %v656 = vpop.f32.mrf.mxu0
      %657 = vdwg.mxu0
      %v658 = vmul.f32 %v655, 0.25
      %vm659 = vcmask 36864
      %v660 = vsel %vm659, %v658, -inf
      %661 = vmax.xlane.f32.xlu0 %v660
      %v662 = vpop.xlane.xlu0 %661
      %v663 = vsub.f32 %v658, %v662
      %v664 = vmul.f32 %v663, 1.442695
      %v665 = vpow.pop %v664
      %v666 = vsel %vm659, %v665, 0.0
      %667 = vadd.xlane.f32.xlu0 %v666
      %v668 = vpop.xlane.xlu0 %667
      %v669 = vrcp.pop %v668
      %v670 = vmul.f32 %v665, %v669
      %vm671 = vcmask 39936
      %v673 = vsel %vm671, %v670, 0
      %vm675 = vcmask 1044480
      %v677 = vsel %vm675, %v569, 0
      %679 = vmatprep.subr.mxu0 0.0
      %680 = vmatpush1.msra.mxu0 0.0
      %681 = vmatprep.subr.mxu0 0.0
      %682 = vmatpush1.msra.mxu0 0.0
      %683 = vmatprep.subr.mxu0 0.0
      %684 = vmatpush1.msra.mxu0 0.0
      %685 = vmatprep.subr.mxu0 0.0
      %686 = vmatpush1.msra.mxu0 0.0
      %687 = vmatprep.subr.mxu0 0.0
      %688 = vmatpush1.msra.mxu0 0.0
      %689 = vmatprep.subr.mxu0 0.0
      %690 = vmatpush1.msra.mxu0 0.0
      %691 = vmatprep.subr.mxu0 0.0
      %692 = vmatpush1.msra.mxu0 0.0
      %693 = vmatprep.subr.mxu0 0.0
      %694 = vmatpush1.msra.mxu0 0.0
      %695 = vmatprep.subr.mxu0 0.0
      %696 = vmatpush1.msra.mxu0 0.0
      %697 = vmatprep.subr.mxu0 0.0
      %698 = vmatpush1.msra.mxu0 0.0
      %699 = vmatprep.subr.mxu0 0.0
      %700 = vmatpush1.msra.mxu0 0.0
      %701 = vmatprep.subr.mxu0 0.0
      %702 = vmatpush1.msra.mxu0 0.0
      %703 = vmatprep.subr.mxu0 0.0
      %704 = vmatpush1.msra.mxu0 0.0
      %705 = vmatprep.subr.mxu0 0.0
      %706 = vmatpush1.msra.mxu0 0.0
      %707 = vmatprep.subr.mxu0 0.0
      %708 = vmatpush1.msra.mxu0 0.0
      %709 = vmatprep.subr.mxu0 0.0
      %710 = vmatpush1.msra.mxu0 %v677
      %711 = vmatprep.subr.mxu0 0.0
      %712 = vmatpush2.msra.mxu0 0.0
      %713 = vmatprep.subr.mxu0 0.0
      %714 = vmatpush2.msra.mxu0 0.0
      %715 = vmatprep.subr.mxu0 0.0
      %716 = vmatpush2.msra.mxu0 0.0
      %717 = vmatprep.subr.mxu0 0.0
      %718 = vmatpush2.msra.mxu0 0.0
      %719 = vmatprep.subr.mxu0 0.0
      %720 = vmatpush2.msra.mxu0 0.0
      %721 = vmatprep.subr.mxu0 0.0
      %722 = vmatpush2.msra.mxu0 0.0
      %723 = vmatprep.subr.mxu0 0.0
      %724 = vmatpush2.msra.mxu0 0.0
      %725 = vmatprep.subr.mxu0 0.0
      %726 = vmatpush2.msra.mxu0 0.0
      %727 = vmatprep.subr.mxu0 0.0
      %728 = vmatpush2.msra.mxu0 0.0
      %729 = vmatprep.subr.mxu0 0.0
      %730 = vmatpush2.msra.mxu0 0.0
      %731 = vmatprep.subr.mxu0 0.0
      %732 = vmatpush2.msra.mxu0 0.0
      %733 = vmatprep.subr.mxu0 0.0
      %734 = vmatpush2.msra.mxu0 0.0
      %735 = vmatprep.subr.mxu0 0.0
      %736 = vmatpush2.msra.mxu0 0.0
      %737 = vmatprep.subr.mxu0 0.0
      %738 = vmatpush2.msra.mxu0 0.0
      %739 = vmatprep.subr.mxu0 0.0
      %740 = vmatpush2.msra.mxu0 0.0
      %741 = vmatprep.subr.mxu0 0.0
      %742 = vmatpush2.msra.mxu0 0.0
      %743 = vmatprep.mubr.f32.mxu0 0.0
      %744 = vmatmul.mubr.f32.gmra.mxu0 %v673
      %v745 = vpop.f32.mrf.mxu0
      %v746 = vadd.f32 0.0, %v745
      %v747 = vpop.f32.mrf.mxu0
      %748 = vdwg.mxu0
      %v750 = vsel %vm583, %v746, 0
      %752 = vmatprep.subr.mxu0 0.0
      %753 = vmatpush1.msra.mxu0 0.0
      %754 = vmatprep.subr.mxu0 0.0
      %755 = vmatpush1.msra.mxu0 0.0
      %756 = vmatprep.subr.mxu0 0.0
      %757 = vmatpush1.msra.mxu0 0.0
      %758 = vmatprep.subr.mxu0 0.0
      %759 = vmatpush1.msra.mxu0 0.0
      %760 = vmatprep.subr.mxu0 0.0
      %761 = vmatpush1.msra.mxu0 0.0
      %762 = vmatprep.subr.mxu0 0.0
      %763 = vmatpush1.msra.mxu0 0.0
      %764 = vmatprep.subr.mxu0 0.0
      %765 = vmatpush1.msra.mxu0 0.0
      %766 = vmatprep.subr.mxu0 0.0
      %767 = vmatpush1.msra.mxu0 0.0
      %768 = vmatprep.subr.mxu0 0.0
      %769 = vmatpush1.msra.mxu0 0.0
      %770 = vmatprep.subr.mxu0 0.0
      %771 = vmatpush1.msra.mxu0 0.0
      %772 = vmatprep.subr.mxu0 0.0
      %773 = vmatpush1.msra.mxu0 0.0
      %774 = vmatprep.subr.mxu0 0.0
      %775 = vmatpush1.msra.mxu0 0.0
      %776 = vmatprep.subr.mxu0 0.0
      %777 = vmatpush1.msra.mxu0 0.0
      %778 = vmatprep.subr.mxu0 0.0
      %779 = vmatpush1.msra.mxu0 0.0
      %780 = vmatprep.subr.mxu0 0.0
      %781 = vmatpush1.msra.mxu0 %v572
      %782 = vmatprep.subr.mxu0 0.0
      %783 = vmatpush1.msra.mxu0 %v571
      %784 = vmatprep.subr.mxu0 0.0
      %785 = vmatpush2.msra.mxu0 0.0
      %786 = vmatprep.subr.mxu0 0.0
      %787 = vmatpush2.msra.mxu0 0.0
      %788 = vmatprep.subr.mxu0 0.0
      %789 = vmatpush2.msra.mxu0 0.0
      %790 = vmatprep.subr.mxu0 0.0
      %791 = vmatpush2.msra.mxu0 0.0
      %792 = vmatprep.subr.mxu0 0.0
      %793 = vmatpush2.msra.mxu0 0.0
      %794 = vmatprep.subr.mxu0 0.0
      %795 = vmatpush2.msra.mxu0 0.0
      %796 = vmatprep.subr.mxu0 0.0
      %797 = vmatpush2.msra.mxu0 0.0
      %798 = vmatprep.subr.mxu0 0.0
      %799 = vmatpush2.msra.mxu0 0.0
      %800 = vmatprep.subr.mxu0 0.0
      %801 = vmatpush2.msra.mxu0 0.0
      %802 = vmatprep.subr.mxu0 0.0
      %803 = vmatpush2.msra.mxu0 0.0
      %804 = vmatprep.subr.mxu0 0.0
      %805 = vmatpush2.msra.mxu0 0.0
      %806 = vmatprep.subr.mxu0 0.0
      %807 = vmatpush2.msra.mxu0 0.0
      %808 = vmatprep.subr.mxu0 0.0
      %809 = vmatpush2.msra.mxu0 0.0
      %810 = vmatprep.subr.mxu0 0.0
      %811 = vmatpush2.msra.mxu0 0.0
      %812 = vmatprep.subr.mxu0 0.0
      %813 = vmatpush2.msra.mxu0 0.0
      %814 = vmatprep.subr.mxu0 0.0
      %815 = vmatpush2.msra.mxu0 0.0
      %816 = vmatprep.mubr.f32.mxu0 0.0
      %817 = vmatmul.mubr.f32.gmra.mxu0 %v750
      %v818 = vpop.f32.mrf.mxu0
      %v819 = vadd.f32 0.0, %v818
      %v820 = vpop.f32.mrf.mxu0
      %821 = vdwg.mxu0
      %v823 = vlaneseq
      %v824 = vshrl.u32 %v823, 7
      %v825 = vsub.s32 0, %v824
      %v826 = vrot.slane %v579, %v825
      %v828 = vadd.f32 %v826, %v819
      %829 = vrot.lane.b32.xlu0 %v567, 112
      %v830 = vpop.permute.xlu0 %829
      %831 = vrot.lane.b32.xlu0 %v567, 48
      %v832 = vpop.permute.xlu0 %831
      %v833 = vsel %vm583, %v830, 0
      %v835 = vsel %vm583, %v832, 0
      %837 = vmatprep.subr.mxu0 0.0
      %838 = vmatpush1.xpose.msra.mxu0 0.0
      %839 = vmatprep.subr.mxu0 0.0
      %840 = vmatpush1.xpose.msra.mxu0 0.0
      %841 = vmatprep.subr.mxu0 0.0
      %842 = vmatpush1.xpose.msra.mxu0 0.0
      %843 = vmatprep.subr.mxu0 0.0
      %844 = vmatpush1.xpose.msra.mxu0 0.0
      %845 = vmatprep.subr.mxu0 0.0
      %846 = vmatpush1.xpose.msra.mxu0 0.0
      %847 = vmatprep.subr.mxu0 0.0
      %848 = vmatpush1.xpose.msra.mxu0 0.0
      %849 = vmatprep.subr.mxu0 0.0
      %850 = vmatpush1.xpose.msra.mxu0 0.0
      %851 = vmatprep.subr.mxu0 0.0
      %852 = vmatpush1.xpose.msra.mxu0 0.0
      %853 = vmatprep.subr.mxu0 0.0
      %854 = vmatpush1.xpose.msra.mxu0 0.0
      %855 = vmatprep.subr.mxu0 0.0
      %856 = vmatpush1.xpose.msra.mxu0 0.0
      %857 = vmatprep.subr.mxu0 0.0
      %858 = vmatpush1.xpose.msra.mxu0 0.0
      %859 = vmatprep.subr.mxu0 0.0
      %860 = vmatpush1.xpose.msra.mxu0 0.0
      %861 = vmatprep.subr.mxu0 0.0
      %862 = vmatpush1.xpose.msra.mxu0 0.0
      %863 = vmatprep.subr.mxu0 0.0
      %864 = vmatpush1.xpose.msra.mxu0 0.0
      %865 = vmatprep.subr.mxu0 0.0
      %866 = vmatpush1.xpose.msra.mxu0 0.0
      %867 = vmatprep.subr.mxu0 0.0
      %868 = vmatpush1.xpose.msra.mxu0 %v835
      %869 = vmatprep.subr.mxu0 0.0
      %870 = vmatpush2.xpose.msra.mxu0 0.0
      %871 = vmatprep.subr.mxu0 0.0
      %872 = vmatpush2.xpose.msra.mxu0 0.0
      %873 = vmatprep.subr.mxu0 0.0
      %874 = vmatpush2.xpose.msra.mxu0 0.0
      %875 = vmatprep.subr.mxu0 0.0
      %876 = vmatpush2.xpose.msra.mxu0 0.0
      %877 = vmatprep.subr.mxu0 0.0
      %878 = vmatpush2.xpose.msra.mxu0 0.0
      %879 = vmatprep.subr.mxu0 0.0
      %880 = vmatpush2.xpose.msra.mxu0 0.0
      %881 = vmatprep.subr.mxu0 0.0
      %882 = vmatpush2.xpose.msra.mxu0 0.0
      %883 = vmatprep.subr.mxu0 0.0
      %884 = vmatpush2.xpose.msra.mxu0 0.0
      %885 = vmatprep.subr.mxu0 0.0
      %886 = vmatpush2.xpose.msra.mxu0 0.0
      %887 = vmatprep.subr.mxu0 0.0
      %888 = vmatpush2.xpose.msra.mxu0 0.0
      %889 = vmatprep.subr.mxu0 0.0
      %890 = vmatpush2.xpose.msra.mxu0 0.0
      %891 = vmatprep.subr.mxu0 0.0
      %892 = vmatpush2.xpose.msra.mxu0 0.0
      %893 = vmatprep.subr.mxu0 0.0
      %894 = vmatpush2.xpose.msra.mxu0 0.0
      %895 = vmatprep.subr.mxu0 0.0
      %896 = vmatpush2.xpose.msra.mxu0 0.0
      %897 = vmatprep.subr.mxu0 0.0
      %898 = vmatpush2.xpose.msra.mxu0 0.0
      %899 = vmatprep.subr.mxu0 0.0
      %900 = vmatpush2.xpose.msra.mxu0 0.0
      %901 = vmatprep.mubr.f32.mxu0 0.0
      %902 = vmatmul.mubr.f32.gmra.mxu0 %v833
      %v903 = vpop.f32.mrf.mxu0
      %v904 = vadd.f32 0.0, %v903
      %v905 = vpop.f32.mrf.mxu0
      %906 = vdwg.mxu0
      %v907 = vmul.f32 %v904, 0.25
      %v908 = vsel %vm659, %v907, -inf
      %909 = vmax.xlane.f32.xlu0 %v908
      %v910 = vpop.xlane.xlu0 %909
      %v911 = vsub.f32 %v907, %v910
      %v912 = vmul.f32 %v911, 1.442695
      %v913 = vpow.pop %v912
      %v914 = vsel %vm659, %v913, 0.0
      %915 = vadd.xlane.f32.xlu0 %v914
      %v916 = vpop.xlane.xlu0 %915
      %v917 = vrcp.pop %v916
      %v918 = vmul.f32 %v913, %v917
      %919 = vrot.lane.b32.xlu0 %v569, 112
      %v920 = vpop.permute.xlu0 %919
      %v922 = vsel %vm671, %v918, 0
      %v924 = vsel %vm675, %v920, 0
      %926 = vmatprep.subr.mxu0 0.0
      %927 = vmatpush1.msra.mxu0 0.0
      %928 = vmatprep.subr.mxu0 0.0
      %929 = vmatpush1.msra.mxu0 0.0
      %930 = vmatprep.subr.mxu0 0.0
      %931 = vmatpush1.msra.mxu0 0.0
      %932 = vmatprep.subr.mxu0 0.0
      %933 = vmatpush1.msra.mxu0 0.0
      %934 = vmatprep.subr.mxu0 0.0
      %935 = vmatpush1.msra.mxu0 0.0
      %936 = vmatprep.subr.mxu0 0.0
      %937 = vmatpush1.msra.mxu0 0.0
      %938 = vmatprep.subr.mxu0 0.0
      %939 = vmatpush1.msra.mxu0 0.0
      %940 = vmatprep.subr.mxu0 0.0
      %941 = vmatpush1.msra.mxu0 0.0
      %942 = vmatprep.subr.mxu0 0.0
      %943 = vmatpush1.msra.mxu0 0.0
      %944 = vmatprep.subr.mxu0 0.0
      %945 = vmatpush1.msra.mxu0 0.0
      %946 = vmatprep.subr.mxu0 0.0
      %947 = vmatpush1.msra.mxu0 0.0
      %948 = vmatprep.subr.mxu0 0.0
      %949 = vmatpush1.msra.mxu0 0.0
      %950 = vmatprep.subr.mxu0 0.0
      %951 = vmatpush1.msra.mxu0 0.0
      %952 = vmatprep.subr.mxu0 0.0
      %953 = vmatpush1.msra.mxu0 0.0
      %954 = vmatprep.subr.mxu0 0.0
      %955 = vmatpush1.msra.mxu0 0.0
      %956 = vmatprep.subr.mxu0 0.0
      %957 = vmatpush1.msra.mxu0 %v924
      %958 = vmatprep.subr.mxu0 0.0
      %959 = vmatpush2.msra.mxu0 0.0
      %960 = vmatprep.subr.mxu0 0.0
      %961 = vmatpush2.msra.mxu0 0.0
      %962 = vmatprep.subr.mxu0 0.0
      %963 = vmatpush2.msra.mxu0 0.0
      %964 = vmatprep.subr.mxu0 0.0
      %965 = vmatpush2.msra.mxu0 0.0
      %966 = vmatprep.subr.mxu0 0.0
      %967 = vmatpush2.msra.mxu0 0.0
      %968 = vmatprep.subr.mxu0 0.0
      %969 = vmatpush2.msra.mxu0 0.0
      %970 = vmatprep.subr.mxu0 0.0
      %971 = vmatpush2.msra.mxu0 0.0
      %972 = vmatprep.subr.mxu0 0.0
      %973 = vmatpush2.msra.mxu0 0.0
      %974 = vmatprep.subr.mxu0 0.0
      %975 = vmatpush2.msra.mxu0 0.0
      %976 = vmatprep.subr.mxu0 0.0
      %977 = vmatpush2.msra.mxu0 0.0
      %978 = vmatprep.subr.mxu0 0.0
      %979 = vmatpush2.msra.mxu0 0.0
      %980 = vmatprep.subr.mxu0 0.0
      %981 = vmatpush2.msra.mxu0 0.0
      %982 = vmatprep.subr.mxu0 0.0
      %983 = vmatpush2.msra.mxu0 0.0
      %984 = vmatprep.subr.mxu0 0.0
      %985 = vmatpush2.msra.mxu0 0.0
      %986 = vmatprep.subr.mxu0 0.0
      %987 = vmatpush2.msra.mxu0 0.0
      %988 = vmatprep.subr.mxu0 0.0
      %989 = vmatpush2.msra.mxu0 0.0
      %990 = vmatprep.mubr.f32.mxu0 0.0
      %991 = vmatmul.mubr.f32.gmra.mxu0 %v922
      %v992 = vpop.f32.mrf.mxu0
      %v993 = vadd.f32 0.0, %v992
      %v994 = vpop.f32.mrf.mxu0
      %995 = vdwg.mxu0
      %v997 = vsel %vm583, %v993, 0
      %999 = vmatprep.subr.mxu0 0.0
      %1000 = vmatpush1.msra.mxu0 0.0
      %1001 = vmatprep.subr.mxu0 0.0
      %1002 = vmatpush1.msra.mxu0 0.0
      %1003 = vmatprep.subr.mxu0 0.0
      %1004 = vmatpush1.msra.mxu0 0.0
      %1005 = vmatprep.subr.mxu0 0.0
      %1006 = vmatpush1.msra.mxu0 0.0
      %1007 = vmatprep.subr.mxu0 0.0
      %1008 = vmatpush1.msra.mxu0 0.0
      %1009 = vmatprep.subr.mxu0 0.0
      %1010 = vmatpush1.msra.mxu0 0.0
      %1011 = vmatprep.subr.mxu0 0.0
      %1012 = vmatpush1.msra.mxu0 0.0
      %1013 = vmatprep.subr.mxu0 0.0
      %1014 = vmatpush1.msra.mxu0 0.0
      %1015 = vmatprep.subr.mxu0 0.0
      %1016 = vmatpush1.msra.mxu0 0.0
      %1017 = vmatprep.subr.mxu0 0.0
      %1018 = vmatpush1.msra.mxu0 0.0
      %1019 = vmatprep.subr.mxu0 0.0
      %1020 = vmatpush1.msra.mxu0 0.0
      %1021 = vmatprep.subr.mxu0 0.0
      %1022 = vmatpush1.msra.mxu0 0.0
      %1023 = vmatprep.subr.mxu0 0.0
      %1024 = vmatpush1.msra.mxu0 0.0
      %1025 = vmatprep.subr.mxu0 0.0
      %1026 = vmatpush1.msra.mxu0 0.0
      %1027 = vmatprep.subr.mxu0 0.0
      %1028 = vmatpush1.msra.mxu0 %v574
      %1029 = vmatprep.subr.mxu0 0.0
      %1030 = vmatpush1.msra.mxu0 %v573
      %1031 = vmatprep.subr.mxu0 0.0
      %1032 = vmatpush2.msra.mxu0 0.0
      %1033 = vmatprep.subr.mxu0 0.0
      %1034 = vmatpush2.msra.mxu0 0.0
      %1035 = vmatprep.subr.mxu0 0.0
      %1036 = vmatpush2.msra.mxu0 0.0
      %1037 = vmatprep.subr.mxu0 0.0
      %1038 = vmatpush2.msra.mxu0 0.0
      %1039 = vmatprep.subr.mxu0 0.0
      %1040 = vmatpush2.msra.mxu0 0.0
      %1041 = vmatprep.subr.mxu0 0.0
      %1042 = vmatpush2.msra.mxu0 0.0
      %1043 = vmatprep.subr.mxu0 0.0
      %1044 = vmatpush2.msra.mxu0 0.0
      %1045 = vmatprep.subr.mxu0 0.0
      %1046 = vmatpush2.msra.mxu0 0.0
      %1047 = vmatprep.subr.mxu0 0.0
      %1048 = vmatpush2.msra.mxu0 0.0
      %1049 = vmatprep.subr.mxu0 0.0
      %1050 = vmatpush2.msra.mxu0 0.0
      %1051 = vmatprep.subr.mxu0 0.0
      %1052 = vmatpush2.msra.mxu0 0.0
      %1053 = vmatprep.subr.mxu0 0.0
      %1054 = vmatpush2.msra.mxu0 0.0
      %1055 = vmatprep.subr.mxu0 0.0
      %1056 = vmatpush2.msra.mxu0 0.0
      %1057 = vmatprep.subr.mxu0 0.0
      %1058 = vmatpush2.msra.mxu0 0.0
      %1059 = vmatprep.subr.mxu0 0.0
      %1060 = vmatpush2.msra.mxu0 0.0
      %1061 = vmatprep.subr.mxu0 0.0
      %1062 = vmatpush2.msra.mxu0 0.0
      %1063 = vmatprep.mubr.f32.mxu0 0.0
      %1064 = vmatmul.mubr.f32.gmra.mxu0 %v997
      %v1065 = vpop.f32.mrf.mxu0
      %v1066 = vadd.f32 0.0, %v1065
      %v1067 = vpop.f32.mrf.mxu0
      %1068 = vdwg.mxu0
      %v1069 = vadd.f32 %v828, %v1066
      %1070 = vrot.lane.b32.xlu0 %v567, 96
      %v1071 = vpop.permute.xlu0 %1070
      %1072 = vrot.lane.b32.xlu0 %v567, 32
      %v1073 = vpop.permute.xlu0 %1072
      %v1074 = vsel %vm583, %v1071, 0
      %v1076 = vsel %vm583, %v1073, 0
      %1078 = vmatprep.subr.mxu0 0.0
      %1079 = vmatpush1.xpose.msra.mxu0 0.0
      %1080 = vmatprep.subr.mxu0 0.0
      %1081 = vmatpush1.xpose.msra.mxu0 0.0
      %1082 = vmatprep.subr.mxu0 0.0
      %1083 = vmatpush1.xpose.msra.mxu0 0.0
      %1084 = vmatprep.subr.mxu0 0.0
      %1085 = vmatpush1.xpose.msra.mxu0 0.0
      %1086 = vmatprep.subr.mxu0 0.0
      %1087 = vmatpush1.xpose.msra.mxu0 0.0
      %1088 = vmatprep.subr.mxu0 0.0
      %1089 = vmatpush1.xpose.msra.mxu0 0.0
      %1090 = vmatprep.subr.mxu0 0.0
      %1091 = vmatpush1.xpose.msra.mxu0 0.0
      %1092 = vmatprep.subr.mxu0 0.0
      %1093 = vmatpush1.xpose.msra.mxu0 0.0
      %1094 = vmatprep.subr.mxu0 0.0
      %1095 = vmatpush1.xpose.msra.mxu0 0.0
      %1096 = vmatprep.subr.mxu0 0.0
      %1097 = vmatpush1.xpose.msra.mxu0 0.0
      %1098 = vmatprep.subr.mxu0 0.0
      %1099 = vmatpush1.xpose.msra.mxu0 0.0
      %1100 = vmatprep.subr.mxu0 0.0
      %1101 = vmatpush1.xpose.msra.mxu0 0.0
      %1102 = vmatprep.subr.mxu0 0.0
      %1103 = vmatpush1.xpose.msra.mxu0 0.0
      %1104 = vmatprep.subr.mxu0 0.0
      %1105 = vmatpush1.xpose.msra.mxu0 0.0
      %1106 = vmatprep.subr.mxu0 0.0
      %1107 = vmatpush1.xpose.msra.mxu0 0.0
      %1108 = vmatprep.subr.mxu0 0.0
      %1109 = vmatpush1.xpose.msra.mxu0 %v1076
      %1110 = vmatprep.subr.mxu0 0.0
      %1111 = vmatpush2.xpose.msra.mxu0 0.0
      %1112 = vmatprep.subr.mxu0 0.0
      %1113 = vmatpush2.xpose.msra.mxu0 0.0
      %1114 = vmatprep.subr.mxu0 0.0
      %1115 = vmatpush2.xpose.msra.mxu0 0.0
      %1116 = vmatprep.subr.mxu0 0.0
      %1117 = vmatpush2.xpose.msra.mxu0 0.0
      %1118 = vmatprep.subr.mxu0 0.0
      %1119 = vmatpush2.xpose.msra.mxu0 0.0
      %1120 = vmatprep.subr.mxu0 0.0
      %1121 = vmatpush2.xpose.msra.mxu0 0.0
      %1122 = vmatprep.subr.mxu0 0.0
      %1123 = vmatpush2.xpose.msra.mxu0 0.0
      %1124 = vmatprep.subr.mxu0 0.0
      %1125 = vmatpush2.xpose.msra.mxu0 0.0
      %1126 = vmatprep.subr.mxu0 0.0
      %1127 = vmatpush2.xpose.msra.mxu0 0.0
      %1128 = vmatprep.subr.mxu0 0.0
      %1129 = vmatpush2.xpose.msra.mxu0 0.0
      %1130 = vmatprep.subr.mxu0 0.0
      %1131 = vmatpush2.xpose.msra.mxu0 0.0
      %1132 = vmatprep.subr.mxu0 0.0
      %1133 = vmatpush2.xpose.msra.mxu0 0.0
      %1134 = vmatprep.subr.mxu0 0.0
      %1135 = vmatpush2.xpose.msra.mxu0 0.0
      %1136 = vmatprep.subr.mxu0 0.0
      %1137 = vmatpush2.xpose.msra.mxu0 0.0
      %1138 = vmatprep.subr.mxu0 0.0
      %1139 = vmatpush2.xpose.msra.mxu0 0.0
      %1140 = vmatprep.subr.mxu0 0.0
      %1141 = vmatpush2.xpose.msra.mxu0 0.0
      %1142 = vmatprep.mubr.f32.mxu0 0.0
      %1143 = vmatmul.mubr.f32.gmra.mxu0 %v1074
      %v1144 = vpop.f32.mrf.mxu0
      %v1145 = vadd.f32 0.0, %v1144
      %v1146 = vpop.f32.mrf.mxu0
      %1147 = vdwg.mxu0
      %v1148 = vmul.f32 %v1145, 0.25
      %v1149 = vsel %vm659, %v1148, -inf
      %1150 = vmax.xlane.f32.xlu0 %v1149
      %v1151 = vpop.xlane.xlu0 %1150
      %v1152 = vsub.f32 %v1148, %v1151
      %v1153 = vmul.f32 %v1152, 1.442695
      %v1154 = vpow.pop %v1153
      %v1155 = vsel %vm659, %v1154, 0.0
      %1156 = vadd.xlane.f32.xlu0 %v1155
      %v1157 = vpop.xlane.xlu0 %1156
      %v1158 = vrcp.pop %v1157
      %v1159 = vmul.f32 %v1154, %v1158
      %1160 = vrot.lane.b32.xlu0 %v569, 96
      %v1161 = vpop.permute.xlu0 %1160
      %v1163 = vsel %vm671, %v1159, 0
      %v1165 = vsel %vm675, %v1161, 0
      %1167 = vmatprep.subr.mxu0 0.0
      %1168 = vmatpush1.msra.mxu0 0.0
      %1169 = vmatprep.subr.mxu0 0.0
      %1170 = vmatpush1.msra.mxu0 0.0
      %1171 = vmatprep.subr.mxu0 0.0
      %1172 = vmatpush1.msra.mxu0 0.0
      %1173 = vmatprep.subr.mxu0 0.0
      %1174 = vmatpush1.msra.mxu0 0.0
      %1175 = vmatprep.subr.mxu0 0.0
      %1176 = vmatpush1.msra.mxu0 0.0
      %1177 = vmatprep.subr.mxu0 0.0
      %1178 = vmatpush1.msra.mxu0 0.0
      %1179 = vmatprep.subr.mxu0 0.0
      %1180 = vmatpush1.msra.mxu0 0.0
      %1181 = vmatprep.subr.mxu0 0.0
      %1182 = vmatpush1.msra.mxu0 0.0
      %1183 = vmatprep.subr.mxu0 0.0
      %1184 = vmatpush1.msra.mxu0 0.0
      %1185 = vmatprep.subr.mxu0 0.0
      %1186 = vmatpush1.msra.mxu0 0.0
      %1187 = vmatprep.subr.mxu0 0.0
      %1188 = vmatpush1.msra.mxu0 0.0
      %1189 = vmatprep.subr.mxu0 0.0
      %1190 = vmatpush1.msra.mxu0 0.0
      %1191 = vmatprep.subr.mxu0 0.0
      %1192 = vmatpush1.msra.mxu0 0.0
      %1193 = vmatprep.subr.mxu0 0.0
      %1194 = vmatpush1.msra.mxu0 0.0
      %1195 = vmatprep.subr.mxu0 0.0
      %1196 = vmatpush1.msra.mxu0 0.0
      %1197 = vmatprep.subr.mxu0 0.0
      %1198 = vmatpush1.msra.mxu0 %v1165
      %1199 = vmatprep.subr.mxu0 0.0
      %1200 = vmatpush2.msra.mxu0 0.0
      %1201 = vmatprep.subr.mxu0 0.0
      %1202 = vmatpush2.msra.mxu0 0.0
      %1203 = vmatprep.subr.mxu0 0.0
      %1204 = vmatpush2.msra.mxu0 0.0
      %1205 = vmatprep.subr.mxu0 0.0
      %1206 = vmatpush2.msra.mxu0 0.0
      %1207 = vmatprep.subr.mxu0 0.0
      %1208 = vmatpush2.msra.mxu0 0.0
      %1209 = vmatprep.subr.mxu0 0.0
      %1210 = vmatpush2.msra.mxu0 0.0
      %1211 = vmatprep.subr.mxu0 0.0
      %1212 = vmatpush2.msra.mxu0 0.0
      %1213 = vmatprep.subr.mxu0 0.0
      %1214 = vmatpush2.msra.mxu0 0.0
      %1215 = vmatprep.subr.mxu0 0.0
      %1216 = vmatpush2.msra.mxu0 0.0
      %1217 = vmatprep.subr.mxu0 0.0
      %1218 = vmatpush2.msra.mxu0 0.0
      %1219 = vmatprep.subr.mxu0 0.0
      %1220 = vmatpush2.msra.mxu0 0.0
      %1221 = vmatprep.subr.mxu0 0.0
      %1222 = vmatpush2.msra.mxu0 0.0
      %1223 = vmatprep.subr.mxu0 0.0
      %1224 = vmatpush2.msra.mxu0 0.0
      %1225 = vmatprep.subr.mxu0 0.0
      %1226 = vmatpush2.msra.mxu0 0.0
      %1227 = vmatprep.subr.mxu0 0.0
      %1228 = vmatpush2.msra.mxu0 0.0
      %1229 = vmatprep.subr.mxu0 0.0
      %1230 = vmatpush2.msra.mxu0 0.0
      %1231 = vmatprep.mubr.f32.mxu0 0.0
      %1232 = vmatmul.mubr.f32.gmra.mxu0 %v1163
      %v1233 = vpop.f32.mrf.mxu0
      %v1234 = vadd.f32 0.0, %v1233
      %v1235 = vpop.f32.mrf.mxu0
      %1236 = vdwg.mxu0
      %v1238 = vsel %vm583, %v1234, 0
      %1240 = vmatprep.subr.mxu0 0.0
      %1241 = vmatpush1.msra.mxu0 0.0
      %1242 = vmatprep.subr.mxu0 0.0
      %1243 = vmatpush1.msra.mxu0 0.0
      %1244 = vmatprep.subr.mxu0 0.0
      %1245 = vmatpush1.msra.mxu0 0.0
      %1246 = vmatprep.subr.mxu0 0.0
      %1247 = vmatpush1.msra.mxu0 0.0
      %1248 = vmatprep.subr.mxu0 0.0
      %1249 = vmatpush1.msra.mxu0 0.0
      %1250 = vmatprep.subr.mxu0 0.0
      %1251 = vmatpush1.msra.mxu0 0.0
      %1252 = vmatprep.subr.mxu0 0.0
      %1253 = vmatpush1.msra.mxu0 0.0
      %1254 = vmatprep.subr.mxu0 0.0
      %1255 = vmatpush1.msra.mxu0 0.0
      %1256 = vmatprep.subr.mxu0 0.0
      %1257 = vmatpush1.msra.mxu0 0.0
      %1258 = vmatprep.subr.mxu0 0.0
      %1259 = vmatpush1.msra.mxu0 0.0
      %1260 = vmatprep.subr.mxu0 0.0
      %1261 = vmatpush1.msra.mxu0 0.0
      %1262 = vmatprep.subr.mxu0 0.0
      %1263 = vmatpush1.msra.mxu0 0.0
      %1264 = vmatprep.subr.mxu0 0.0
      %1265 = vmatpush1.msra.mxu0 0.0
      %1266 = vmatprep.subr.mxu0 0.0
      %1267 = vmatpush1.msra.mxu0 0.0
      %1268 = vmatprep.subr.mxu0 0.0
      %1269 = vmatpush1.msra.mxu0 %v576
      %1270 = vmatprep.subr.mxu0 0.0
      %1271 = vmatpush1.msra.mxu0 %v575
      %1272 = vmatprep.subr.mxu0 0.0
      %1273 = vmatpush2.msra.mxu0 0.0
      %1274 = vmatprep.subr.mxu0 0.0
      %1275 = vmatpush2.msra.mxu0 0.0
      %1276 = vmatprep.subr.mxu0 0.0
      %1277 = vmatpush2.msra.mxu0 0.0
      %1278 = vmatprep.subr.mxu0 0.0
      %1279 = vmatpush2.msra.mxu0 0.0
      %1280 = vmatprep.subr.mxu0 0.0
      %1281 = vmatpush2.msra.mxu0 0.0
      %1282 = vmatprep.subr.mxu0 0.0
      %1283 = vmatpush2.msra.mxu0 0.0
      %1284 = vmatprep.subr.mxu0 0.0
      %1285 = vmatpush2.msra.mxu0 0.0
      %1286 = vmatprep.subr.mxu0 0.0
      %1287 = vmatpush2.msra.mxu0 0.0
      %1288 = vmatprep.subr.mxu0 0.0
      %1289 = vmatpush2.msra.mxu0 0.0
      %1290 = vmatprep.subr.mxu0 0.0
      %1291 = vmatpush2.msra.mxu0 0.0
      %1292 = vmatprep.subr.mxu0 0.0
      %1293 = vmatpush2.msra.mxu0 0.0
      %1294 = vmatprep.subr.mxu0 0.0
      %1295 = vmatpush2.msra.mxu0 0.0
      %1296 = vmatprep.subr.mxu0 0.0
      %1297 = vmatpush2.msra.mxu0 0.0
      %1298 = vmatprep.subr.mxu0 0.0
      %1299 = vmatpush2.msra.mxu0 0.0
      %1300 = vmatprep.subr.mxu0 0.0
      %1301 = vmatpush2.msra.mxu0 0.0
      %1302 = vmatprep.subr.mxu0 0.0
      %1303 = vmatpush2.msra.mxu0 0.0
      %1304 = vmatprep.mubr.f32.mxu0 0.0
      %1305 = vmatmul.mubr.f32.gmra.mxu0 %v1238
      %v1306 = vpop.f32.mrf.mxu0
      %v1307 = vadd.f32 0.0, %v1306
      %v1308 = vpop.f32.mrf.mxu0
      %1309 = vdwg.mxu0
      %v1310 = vadd.f32 %v1069, %v1307
      %1311 = vrot.lane.b32.xlu0 %v567, 80
      %v1312 = vpop.permute.xlu0 %1311
      %1313 = vrot.lane.b32.xlu0 %v567, 16
      %v1314 = vpop.permute.xlu0 %1313
      %v1315 = vsel %vm583, %v1312, 0
      %v1317 = vsel %vm583, %v1314, 0
      %1319 = vmatprep.subr.mxu0 0.0
      %1320 = vmatpush1.xpose.msra.mxu0 0.0
      %1321 = vmatprep.subr.mxu0 0.0
      %1322 = vmatpush1.xpose.msra.mxu0 0.0
      %1323 = vmatprep.subr.mxu0 0.0
      %1324 = vmatpush1.xpose.msra.mxu0 0.0
      %1325 = vmatprep.subr.mxu0 0.0
      %1326 = vmatpush1.xpose.msra.mxu0 0.0
      %1327 = vmatprep.subr.mxu0 0.0
      %1328 = vmatpush1.xpose.msra.mxu0 0.0
      %1329 = vmatprep.subr.mxu0 0.0
      %1330 = vmatpush1.xpose.msra.mxu0 0.0
      %1331 = vmatprep.subr.mxu0 0.0
      %1332 = vmatpush1.xpose.msra.mxu0 0.0
      %1333 = vmatprep.subr.mxu0 0.0
      %1334 = vmatpush1.xpose.msra.mxu0 0.0
      %1335 = vmatprep.subr.mxu0 0.0
      %1336 = vmatpush1.xpose.msra.mxu0 0.0
      %1337 = vmatprep.subr.mxu0 0.0
      %1338 = vmatpush1.xpose.msra.mxu0 0.0
      %1339 = vmatprep.subr.mxu0 0.0
      %1340 = vmatpush1.xpose.msra.mxu0 0.0
      %1341 = vmatprep.subr.mxu0 0.0
      %1342 = vmatpush1.xpose.msra.mxu0 0.0
      %1343 = vmatprep.subr.mxu0 0.0
      %1344 = vmatpush1.xpose.msra.mxu0 0.0
      %1345 = vmatprep.subr.mxu0 0.0
      %1346 = vmatpush1.xpose.msra.mxu0 0.0
      %1347 = vmatprep.subr.mxu0 0.0
      %1348 = vmatpush1.xpose.msra.mxu0 0.0
      %1349 = vmatprep.subr.mxu0 0.0
      %1350 = vmatpush1.xpose.msra.mxu0 %v1317
      %1351 = vmatprep.subr.mxu0 0.0
      %1352 = vmatpush2.xpose.msra.mxu0 0.0
      %1353 = vmatprep.subr.mxu0 0.0
      %1354 = vmatpush2.xpose.msra.mxu0 0.0
      %1355 = vmatprep.subr.mxu0 0.0
      %1356 = vmatpush2.xpose.msra.mxu0 0.0
      %1357 = vmatprep.subr.mxu0 0.0
      %1358 = vmatpush2.xpose.msra.mxu0 0.0
      %1359 = vmatprep.subr.mxu0 0.0
      %1360 = vmatpush2.xpose.msra.mxu0 0.0
      %1361 = vmatprep.subr.mxu0 0.0
      %1362 = vmatpush2.xpose.msra.mxu0 0.0
      %1363 = vmatprep.subr.mxu0 0.0
      %1364 = vmatpush2.xpose.msra.mxu0 0.0
      %1365 = vmatprep.subr.mxu0 0.0
      %1366 = vmatpush2.xpose.msra.mxu0 0.0
      %1367 = vmatprep.subr.mxu0 0.0
      %1368 = vmatpush2.xpose.msra.mxu0 0.0
      %1369 = vmatprep.subr.mxu0 0.0
      %1370 = vmatpush2.xpose.msra.mxu0 0.0
      %1371 = vmatprep.subr.mxu0 0.0
      %1372 = vmatpush2.xpose.msra.mxu0 0.0
      %1373 = vmatprep.subr.mxu0 0.0
      %1374 = vmatpush2.xpose.msra.mxu0 0.0
      %1375 = vmatprep.subr.mxu0 0.0
      %1376 = vmatpush2.xpose.msra.mxu0 0.0
      %1377 = vmatprep.subr.mxu0 0.0
      %1378 = vmatpush2.xpose.msra.mxu0 0.0
      %1379 = vmatprep.subr.mxu0 0.0
      %1380 = vmatpush2.xpose.msra.mxu0 0.0
      %1381 = vmatprep.subr.mxu0 0.0
      %1382 = vmatpush2.xpose.msra.mxu0 0.0
      %1383 = vmatprep.mubr.f32.mxu0 0.0
      %1384 = vmatmul.mubr.f32.gmra.mxu0 %v1315
      %v1385 = vpop.f32.mrf.mxu0
      %v1386 = vadd.f32 0.0, %v1385
      %v1387 = vpop.f32.mrf.mxu0
      %1388 = vdwg.mxu0
      %v1389 = vmul.f32 %v1386, 0.25
      %v1390 = vsel %vm659, %v1389, -inf
      %1391 = vmax.xlane.f32.xlu0 %v1390
      %v1392 = vpop.xlane.xlu0 %1391
      %v1393 = vsub.f32 %v1389, %v1392
      %v1394 = vmul.f32 %v1393, 1.442695
      %v1395 = vpow.pop %v1394
      %v1396 = vsel %vm659, %v1395, 0.0
      %1397 = vadd.xlane.f32.xlu0 %v1396
      %v1398 = vpop.xlane.xlu0 %1397
      %v1399 = vrcp.pop %v1398
      %v1400 = vmul.f32 %v1395, %v1399
      %1401 = vrot.lane.b32.xlu0 %v569, 80
      %v1402 = vpop.permute.xlu0 %1401
      %v1404 = vsel %vm671, %v1400, 0
      %v1406 = vsel %vm675, %v1402, 0
      %1408 = vmatprep.subr.mxu0 0.0
      %1409 = vmatpush1.msra.mxu0 0.0
      %1410 = vmatprep.subr.mxu0 0.0
      %1411 = vmatpush1.msra.mxu0 0.0
      %1412 = vmatprep.subr.mxu0 0.0
      %1413 = vmatpush1.msra.mxu0 0.0
      %1414 = vmatprep.subr.mxu0 0.0
      %1415 = vmatpush1.msra.mxu0 0.0
      %1416 = vmatprep.subr.mxu0 0.0
      %1417 = vmatpush1.msra.mxu0 0.0
      %1418 = vmatprep.subr.mxu0 0.0
      %1419 = vmatpush1.msra.mxu0 0.0
      %1420 = vmatprep.subr.mxu0 0.0
      %1421 = vmatpush1.msra.mxu0 0.0
      %1422 = vmatprep.subr.mxu0 0.0
      %1423 = vmatpush1.msra.mxu0 0.0
      %1424 = vmatprep.subr.mxu0 0.0
      %1425 = vmatpush1.msra.mxu0 0.0
      %1426 = vmatprep.subr.mxu0 0.0
      %1427 = vmatpush1.msra.mxu0 0.0
      %1428 = vmatprep.subr.mxu0 0.0
      %1429 = vmatpush1.msra.mxu0 0.0
      %1430 = vmatprep.subr.mxu0 0.0
      %1431 = vmatpush1.msra.mxu0 0.0
      %1432 = vmatprep.subr.mxu0 0.0
      %1433 = vmatpush1.msra.mxu0 0.0
      %1434 = vmatprep.subr.mxu0 0.0
      %1435 = vmatpush1.msra.mxu0 0.0
      %1436 = vmatprep.subr.mxu0 0.0
      %1437 = vmatpush1.msra.mxu0 0.0
      %1438 = vmatprep.subr.mxu0 0.0
      %1439 = vmatpush1.msra.mxu0 %v1406
      %1440 = vmatprep.subr.mxu0 0.0
      %1441 = vmatpush2.msra.mxu0 0.0
      %1442 = vmatprep.subr.mxu0 0.0
      %1443 = vmatpush2.msra.mxu0 0.0
      %1444 = vmatprep.subr.mxu0 0.0
      %1445 = vmatpush2.msra.mxu0 0.0
      %1446 = vmatprep.subr.mxu0 0.0
      %1447 = vmatpush2.msra.mxu0 0.0
      %1448 = vmatprep.subr.mxu0 0.0
      %1449 = vmatpush2.msra.mxu0 0.0
      %1450 = vmatprep.subr.mxu0 0.0
      %1451 = vmatpush2.msra.mxu0 0.0
      %1452 = vmatprep.subr.mxu0 0.0
      %1453 = vmatpush2.msra.mxu0 0.0
      %1454 = vmatprep.subr.mxu0 0.0
      %1455 = vmatpush2.msra.mxu0 0.0
      %1456 = vmatprep.subr.mxu0 0.0
      %1457 = vmatpush2.msra.mxu0 0.0
      %1458 = vmatprep.subr.mxu0 0.0
      %1459 = vmatpush2.msra.mxu0 0.0
      %1460 = vmatprep.subr.mxu0 0.0
      %1461 = vmatpush2.msra.mxu0 0.0
      %1462 = vmatprep.subr.mxu0 0.0
      %1463 = vmatpush2.msra.mxu0 0.0
      %1464 = vmatprep.subr.mxu0 0.0
      %1465 = vmatpush2.msra.mxu0 0.0
      %1466 = vmatprep.subr.mxu0 0.0
      %1467 = vmatpush2.msra.mxu0 0.0
      %1468 = vmatprep.subr.mxu0 0.0
      %1469 = vmatpush2.msra.mxu0 0.0
      %1470 = vmatprep.subr.mxu0 0.0
      %1471 = vmatpush2.msra.mxu0 0.0
      %1472 = vmatprep.mubr.f32.mxu0 0.0
      %1473 = vmatmul.mubr.f32.gmra.mxu0 %v1404
      %v1474 = vpop.f32.mrf.mxu0
      %v1475 = vadd.f32 0.0, %v1474
      %v1476 = vpop.f32.mrf.mxu0
      %1477 = vdwg.mxu0
      %v1479 = vsel %vm583, %v1475, 0
      %1481 = vmatprep.subr.mxu0 0.0
      %1482 = vmatpush1.msra.mxu0 0.0
      %1483 = vmatprep.subr.mxu0 0.0
      %1484 = vmatpush1.msra.mxu0 0.0
      %1485 = vmatprep.subr.mxu0 0.0
      %1486 = vmatpush1.msra.mxu0 0.0
      %1487 = vmatprep.subr.mxu0 0.0
      %1488 = vmatpush1.msra.mxu0 0.0
      %1489 = vmatprep.subr.mxu0 0.0
      %1490 = vmatpush1.msra.mxu0 0.0
      %1491 = vmatprep.subr.mxu0 0.0
      %1492 = vmatpush1.msra.mxu0 0.0
      %1493 = vmatprep.subr.mxu0 0.0
      %1494 = vmatpush1.msra.mxu0 0.0
      %1495 = vmatprep.subr.mxu0 0.0
      %1496 = vmatpush1.msra.mxu0 0.0
      %1497 = vmatprep.subr.mxu0 0.0
      %1498 = vmatpush1.msra.mxu0 0.0
      %1499 = vmatprep.subr.mxu0 0.0
      %1500 = vmatpush1.msra.mxu0 0.0
      %1501 = vmatprep.subr.mxu0 0.0
      %1502 = vmatpush1.msra.mxu0 0.0
      %1503 = vmatprep.subr.mxu0 0.0
      %1504 = vmatpush1.msra.mxu0 0.0
      %1505 = vmatprep.subr.mxu0 0.0
      %1506 = vmatpush1.msra.mxu0 0.0
      %1507 = vmatprep.subr.mxu0 0.0
      %1508 = vmatpush1.msra.mxu0 0.0
      %1509 = vmatprep.subr.mxu0 0.0
      %1510 = vmatpush1.msra.mxu0 %v578
      %1511 = vmatprep.subr.mxu0 0.0
      %1512 = vmatpush1.msra.mxu0 %v577
      %1513 = vmatprep.subr.mxu0 0.0
      %1514 = vmatpush2.msra.mxu0 0.0
      %1515 = vmatprep.subr.mxu0 0.0
      %1516 = vmatpush2.msra.mxu0 0.0
      %1517 = vmatprep.subr.mxu0 0.0
      %1518 = vmatpush2.msra.mxu0 0.0
      %1519 = vmatprep.subr.mxu0 0.0
      %1520 = vmatpush2.msra.mxu0 0.0
      %1521 = vmatprep.subr.mxu0 0.0
      %1522 = vmatpush2.msra.mxu0 0.0
      %1523 = vmatprep.subr.mxu0 0.0
      %1524 = vmatpush2.msra.mxu0 0.0
      %1525 = vmatprep.subr.mxu0 0.0
      %1526 = vmatpush2.msra.mxu0 0.0
      %1527 = vmatprep.subr.mxu0 0.0
      %1528 = vmatpush2.msra.mxu0 0.0
      %1529 = vmatprep.subr.mxu0 0.0
      %1530 = vmatpush2.msra.mxu0 0.0
      %1531 = vmatprep.subr.mxu0 0.0
      %1532 = vmatpush2.msra.mxu0 0.0
      %1533 = vmatprep.subr.mxu0 0.0
      %1534 = vmatpush2.msra.mxu0 0.0
      %1535 = vmatprep.subr.mxu0 0.0
      %1536 = vmatpush2.msra.mxu0 0.0
      %1537 = vmatprep.subr.mxu0 0.0
      %1538 = vmatpush2.msra.mxu0 0.0
      %1539 = vmatprep.subr.mxu0 0.0
      %1540 = vmatpush2.msra.mxu0 0.0
      %1541 = vmatprep.subr.mxu0 0.0
      %1542 = vmatpush2.msra.mxu0 0.0
      %1543 = vmatprep.subr.mxu0 0.0
      %1544 = vmatpush2.msra.mxu0 0.0
      %1545 = vmatprep.mubr.f32.mxu0 0.0
      %1546 = vmatmul.mubr.f32.gmra.mxu0 %v1479
      %v1547 = vpop.f32.mrf.mxu0
      %v1548 = vadd.f32 0.0, %v1547
      %v1549 = vpop.f32.mrf.mxu0
      %1550 = vdwg.mxu0
      %v1551 = vadd.f32 %v1310, %v1548
      %v1552 = vadd.f32 %v436, %v1551
      %v1553 = vld [vmem:[%s7] sm:$0x1]
      %v1554 = vld [vmem:[%s8] sm:$0x1]
      %v1555 = vsel %vm439, %v1552, 0.0
      %1556 = vadd.xlane.f32.xlu0 %v1555
      %v1557 = vpop.xlane.xlu0 %1556
      %v1558 = vmul.f32 %v1557, %v443
      %v1559 = vsub.f32 %v1552, %v1558
      %v1560 = vmul.f32 %v1559, %v1559
      %v1561 = vsel %vm439, %v1560, 0.0
      %1562 = vadd.xlane.f32.xlu0 %v1561
      %v1563 = vpop.xlane.xlu0 %1562
      %v1564 = vmul.f32 %v1563, %v443
      %v1565 = vadd.f32 %v1564, 1e-06
      %v1566 = vrsqrt.pop %v1565
      %v1567 = vmul.f32 %v1559, %v1566
      %v1569 = vlaneseq
      %v1570 = vshrl.u32 %v1569, 7
      %v1571 = vsub.s32 0, %v1570
      %v1572 = vrot.slane %v1553, %v1571
      %v1574 = vmul.f32 %v1567, %v1572
      %v1576 = vlaneseq
      %v1577 = vshrl.u32 %v1576, 7
      %v1578 = vsub.s32 0, %v1577
      %v1579 = vrot.slane %v1554, %v1578
      %v1581 = vadd.f32 %v1574, %v1579
      %v1582 = vld [vmem:[%s9] sm:$0xff]
      %v1583 = vld [vmem:[%s9 + $0x8] sm:$0xff]
      %v1584 = vld [vmem:[%s9 + $0x10] sm:$0xff]
      %v1585 = vld [vmem:[%s9 + $0x18] sm:$0xff]
      %v1586 = vld [vmem:[%s9 + $0x20] sm:$0xff]
      %v1587 = vld [vmem:[%s9 + $0x28] sm:$0xff]
      %v1588 = vld [vmem:[%s9 + $0x30] sm:$0xff]
      %v1589 = vld [vmem:[%s9 + $0x38] sm:$0xff]
      %v1590 = vld [vmem:[%s10] sm:$0x1]
      %v1592 = vlaneseq
      %v1593 = vshrl.u32 %v1592, 7
      %v1594 = vsub.s32 0, %v1593
      %v1595 = vrot.slane %v1590, %v1594
      %v1598 = vsel %vm496, %v1581, 0
      %1600 = vmatprep.subr.mxu0 0.0
      %1601 = vmatpush1.msra.mxu0 0.0
      %1602 = vmatprep.subr.mxu0 0.0
      %1603 = vmatpush1.msra.mxu0 0.0
      %1604 = vmatprep.subr.mxu0 0.0
      %1605 = vmatpush1.msra.mxu0 0.0
      %1606 = vmatprep.subr.mxu0 0.0
      %1607 = vmatpush1.msra.mxu0 0.0
      %1608 = vmatprep.subr.mxu0 0.0
      %1609 = vmatpush1.msra.mxu0 0.0
      %1610 = vmatprep.subr.mxu0 0.0
      %1611 = vmatpush1.msra.mxu0 0.0
      %1612 = vmatprep.subr.mxu0 0.0
      %1613 = vmatpush1.msra.mxu0 0.0
      %1614 = vmatprep.subr.mxu0 0.0
      %1615 = vmatpush1.msra.mxu0 0.0
      %1616 = vmatprep.subr.mxu0 0.0
      %1617 = vmatpush1.msra.mxu0 %v1589
      %1618 = vmatprep.subr.mxu0 0.0
      %1619 = vmatpush1.msra.mxu0 %v1588
      %1620 = vmatprep.subr.mxu0 0.0
      %1621 = vmatpush1.msra.mxu0 %v1587
      %1622 = vmatprep.subr.mxu0 0.0
      %1623 = vmatpush1.msra.mxu0 %v1586
      %1624 = vmatprep.subr.mxu0 0.0
      %1625 = vmatpush1.msra.mxu0 %v1585
      %1626 = vmatprep.subr.mxu0 0.0
      %1627 = vmatpush1.msra.mxu0 %v1584
      %1628 = vmatprep.subr.mxu0 0.0
      %1629 = vmatpush1.msra.mxu0 %v1583
      %1630 = vmatprep.subr.mxu0 0.0
      %1631 = vmatpush1.msra.mxu0 %v1582
      %1632 = vmatprep.subr.mxu0 0.0
      %1633 = vmatpush2.msra.mxu0 0.0
      %1634 = vmatprep.subr.mxu0 0.0
      %1635 = vmatpush2.msra.mxu0 0.0
      %1636 = vmatprep.subr.mxu0 0.0
      %1637 = vmatpush2.msra.mxu0 0.0
      %1638 = vmatprep.subr.mxu0 0.0
      %1639 = vmatpush2.msra.mxu0 0.0
      %1640 = vmatprep.subr.mxu0 0.0
      %1641 = vmatpush2.msra.mxu0 0.0
      %1642 = vmatprep.subr.mxu0 0.0
      %1643 = vmatpush2.msra.mxu0 0.0
      %1644 = vmatprep.subr.mxu0 0.0
      %1645 = vmatpush2.msra.mxu0 0.0
      %1646 = vmatprep.subr.mxu0 0.0
      %1647 = vmatpush2.msra.mxu0 0.0
      %1648 = vmatprep.subr.mxu0 0.0
      %1649 = vmatpush2.msra.mxu0 0.0
      %1650 = vmatprep.subr.mxu0 0.0
      %1651 = vmatpush2.msra.mxu0 0.0
      %1652 = vmatprep.subr.mxu0 0.0
      %1653 = vmatpush2.msra.mxu0 0.0
      %1654 = vmatprep.subr.mxu0 0.0
      %1655 = vmatpush2.msra.mxu0 0.0
      %1656 = vmatprep.subr.mxu0 0.0
      %1657 = vmatpush2.msra.mxu0 0.0
      %1658 = vmatprep.subr.mxu0 0.0
      %1659 = vmatpush2.msra.mxu0 0.0
      %1660 = vmatprep.subr.mxu0 0.0
      %1661 = vmatpush2.msra.mxu0 0.0
      %1662 = vmatprep.subr.mxu0 0.0
      %1663 = vmatpush2.msra.mxu0 0.0
      %1664 = vmatprep.mubr.f32.mxu0 0.0
      %1665 = vmatmul.mubr.f32.gmra.mxu0 %v1598
      %v1666 = vpop.f32.mrf.mxu0
      %v1667 = vadd.f32 %v1595, %v1666
      %v1668 = vpop.f32.mrf.mxu0
      %1669 = vdwg.mxu0
      %v1670 = vmul.f32 %v1667, 0.5
      %v1671 = vmul.f32 %v1667, 0.70710677
      %v1672 = verf.f32.pop %v1671
      %v1673 = vadd.f32 %v1672, 1.0
      %v1674 = vmul.f32 %v1670, %v1673
      %v1675 = vld [vmem:[%s11] sm:$0xff]
      %v1676 = vld [vmem:[%s11 + $0x8] sm:$0xff]
      %v1677 = vld [vmem:[%s11 + $0x10] sm:$0xff]
      %v1678 = vld [vmem:[%s11 + $0x18] sm:$0xff]
      %v1679 = vld [vmem:[%s11 + $0x20] sm:$0xff]
      %v1680 = vld [vmem:[%s11 + $0x28] sm:$0xff]
      %v1681 = vld [vmem:[%s11 + $0x30] sm:$0xff]
      %v1682 = vld [vmem:[%s11 + $0x38] sm:$0xff]
      %v1683 = vld [vmem:[%s11 + $0x40] sm:$0xff]
      %v1684 = vld [vmem:[%s11 + $0x48] sm:$0xff]
      %v1685 = vld [vmem:[%s11 + $0x50] sm:$0xff]
      %v1686 = vld [vmem:[%s11 + $0x58] sm:$0xff]
      %v1687 = vld [vmem:[%s11 + $0x60] sm:$0xff]
      %v1688 = vld [vmem:[%s11 + $0x68] sm:$0xff]
      %v1689 = vld [vmem:[%s11 + $0x70] sm:$0xff]
      %v1690 = vld [vmem:[%s11 + $0x78] sm:$0xff]
      %v1691 = vld [vmem:[%s12] sm:$0x1]
      %v1693 = vlaneseq
      %v1694 = vshrl.u32 %v1693, 7
      %v1695 = vsub.s32 0, %v1694
      %v1696 = vrot.slane %v1691, %v1695
      %1698 = vmatprep.subr.mxu0 0.0
      %1699 = vmatpush1.msra.mxu0 %v1690
      %1700 = vmatprep.subr.mxu0 0.0
      %1701 = vmatpush1.msra.mxu0 %v1689
      %1702 = vmatprep.subr.mxu0 0.0
      %1703 = vmatpush1.msra.mxu0 %v1688
      %1704 = vmatprep.subr.mxu0 0.0
      %1705 = vmatpush1.msra.mxu0 %v1687
      %1706 = vmatprep.subr.mxu0 0.0
      %1707 = vmatpush1.msra.mxu0 %v1686
      %1708 = vmatprep.subr.mxu0 0.0
      %1709 = vmatpush1.msra.mxu0 %v1685
      %1710 = vmatprep.subr.mxu0 0.0
      %1711 = vmatpush1.msra.mxu0 %v1684
      %1712 = vmatprep.subr.mxu0 0.0
      %1713 = vmatpush1.msra.mxu0 %v1683
      %1714 = vmatprep.subr.mxu0 0.0
      %1715 = vmatpush1.msra.mxu0 %v1682
      %1716 = vmatprep.subr.mxu0 0.0
      %1717 = vmatpush1.msra.mxu0 %v1681
      %1718 = vmatprep.subr.mxu0 0.0
      %1719 = vmatpush1.msra.mxu0 %v1680
      %1720 = vmatprep.subr.mxu0 0.0
      %1721 = vmatpush1.msra.mxu0 %v1679
      %1722 = vmatprep.subr.mxu0 0.0
      %1723 = vmatpush1.msra.mxu0 %v1678
      %1724 = vmatprep.subr.mxu0 0.0
      %1725 = vmatpush1.msra.mxu0 %v1677
      %1726 = vmatprep.subr.mxu0 0.0
      %1727 = vmatpush1.msra.mxu0 %v1676
      %1728 = vmatprep.subr.mxu0 0.0
      %1729 = vmatpush1.msra.mxu0 %v1675
      %1730 = vmatprep.subr.mxu0 0.0
      %1731 = vmatpush2.msra.mxu0 0.0
      %1732 = vmatprep.subr.mxu0 0.0
      %1733 = vmatpush2.msra.mxu0 0.0
      %1734 = vmatprep.subr.mxu0 0.0
      %1735 = vmatpush2.msra.mxu0 0.0
      %1736 = vmatprep.subr.mxu0 0.0
      %1737 = vmatpush2.msra.mxu0 0.0
      %1738 = vmatprep.subr.mxu0 0.0
      %1739 = vmatpush2.msra.mxu0 0.0
      %1740 = vmatprep.subr.mxu0 0.0
      %1741 = vmatpush2.msra.mxu0 0.0
      %1742 = vmatprep.subr.mxu0 0.0
      %1743 = vmatpush2.msra.mxu0 0.0
      %1744 = vmatprep.subr.mxu0 0.0
      %1745 = vmatpush2.msra.mxu0 0.0
      %1746 = vmatprep.subr.mxu0 0.0
      %1747 = vmatpush2.msra.mxu0 0.0
      %1748 = vmatprep.subr.mxu0 0.0
      %1749 = vmatpush2.msra.mxu0 0.0
      %1750 = vmatprep.subr.mxu0 0.0
      %1751 = vmatpush2.msra.mxu0 0.0
      %1752 = vmatprep.subr.mxu0 0.0
      %1753 = vmatpush2.msra.mxu0 0.0
      %1754 = vmatprep.subr.mxu0 0.0
      %1755 = vmatpush2.msra.mxu0 0.0
      %1756 = vmatprep.subr.mxu0 0.0
      %1757 = vmatpush2.msra.mxu0 0.0
      %1758 = vmatprep.subr.mxu0 0.0
      %1759 = vmatpush2.msra.mxu0 0.0
      %1760 = vmatprep.subr.mxu0 0.0
      %1761 = vmatpush2.msra.mxu0 0.0
      %1762 = vmatprep.mubr.f32.mxu0 0.0
      %1763 = vmatmul.mubr.f32.gmra.mxu0 %v1674
      %v1764 = vpop.f32.mrf.mxu0
      %v1765 = vadd.f32 %v1696, %v1764
      %v1766 = vpop.f32.mrf.mxu0
      %1767 = vdwg.mxu0
      %v1768 = vadd.f32 %v1552, %v1765
      %1769 = vst.msk [vmem:[%s435] sm:$0x1f] %vm439, %v1768
      %p1770 = scmp.lt.s32.totalorder %s24, 1
      %s1771 = scalar_select %p1770, %s24, 1
      %s1772 = smul.addr %s1771, 8
      %s1773 = scalar_lea.vmem %s13, %s1772
      // Predicated region
      $region73: #{vit_softmoe_forward.5} parent=71 // pred_check
        %p1774 = pneg %p320
      $region74: #{vit_softmoe_forward.5} parent=71 // pred_check_branch
        %1776 = sbr.rel (%p1774) target = $region76
      $region75: #{vit_softmoe_forward.5} parent=71 // pred_region
        _
      $region76: #{vit_softmoe_forward.5} parent=71 // pred_fallthru
        _
    $region72: #{vit_softmoe_forward.5} parent=5 // pred_fallthru
      _
    %p1777 = scmp.le.s32.totalorder 2, %s19
    // Predicated region
    $region77: #{vit_softmoe_forward.5} parent=5 // pred_check
      %p1778 = pneg %p1777
    $region78: #{vit_softmoe_forward.5} parent=5 // pred_check_branch
      %1780 = sbr.rel (%p1778) target = $region80
    $region79: #{vit_softmoe_forward.5} parent=5 // pred_region
      %s1781 = ssub.s32 %s19, 2
      // Predicated region
      $region81: #{vit_softmoe_forward.5} parent=79 // pred_check
        %p1782 = pneg %p326
      $region82: #{vit_softmoe_forward.5} parent=79 // pred_check_branch
        %1784 = sbr.rel (%p1782) target = $region84
      $region83: #{vit_softmoe_forward.5} parent=79 // pred_region
        %p1785 = scmp.lt.s32.totalorder %s25, 1
        %s1786 = scalar_select %p1785, %s25, 1
        %s1787 = smul.addr %s1786, 8
        %s1788 = scalar_lea.vmem %s13, %s1787
      $region84: #{vit_softmoe_forward.5} parent=79 // pred_fallthru
        _
    $region80: #{vit_softmoe_forward.5} parent=5 // pred_fallthru
      _
  $region6: #{vit_softmoe_forward.5} parent=0 // loop_footer
    %s23 = sadd.s32 1, %s19
  $region7: #{vit_softmoe_forward.5} parent=0 // loop_footer_branch
    %18 = sbr.rel target = $region3
  $region8: #{vit_softmoe_forward.5} parent=0 // loop_exit
    _

</llo_original>
